<compile_context>
chip_gen: v7x
topology: tpu7x:2x2x1
jax: 0.10.0
libtpu: 0.0.40
codegen_flags: <defaults>
</compile_context>

<pallas_src>
import functools

import jax
import jax.numpy as jnp
from jax.experimental import pallas as pl
from jax.experimental.pallas import tpu as pltpu


def _conv_cd_kernel(x_ref, w_ref, o_ref, *, KH, KW, TH, Wp, C_in, fuse_taps):
    # x_ref: (1, (TH+KH)*Wp, C_in)  one padded NHWC row tile (flattened rows, +1 guard row)
    # w_ref: (KH*KW*C_in, C_out)    theta-folded weights, taps along the contraction axis
    # o_ref: (1, TH*Wp, C_out)      "wide" output rows (columns >= W_out are discarded later)
    n_rows = TH * Wp
    g = x_ref[0]  # ((TH+KH)*Wp, C_in)

    taps = []
    for kh in range(KH):
        for kw in range(KW):
            start = kh * Wp + kw                      # static sublane offset
            taps.append(g[start:start + n_rows])      # (TH*Wp, C_in)

    if fuse_taps:
        # Single MXU matmul with contraction K = KH*KW*C_in.
        patches = jnp.concatenate(taps, axis=-1)      # (TH*Wp, KH*KW*C_in)
        acc = jnp.dot(patches, w_ref[...], preferred_element_type=jnp.float32)
    else:
        # Fallback: one thin matmul per tap (K = C_in), f32 accumulation.
        acc = jnp.zeros((n_rows, o_ref.shape[-1]), dtype=jnp.float32)
        for t, xs in enumerate(taps):
            acc = acc + jnp.dot(xs, w_ref[t * C_in:(t + 1) * C_in, :],
                                preferred_element_type=jnp.float32)

    o_ref[0] = acc.astype(o_ref.dtype)


def _pick_row_tile(H_out, Wp, C_in, C_out, KH, KW, itemsize,
                   vmem_budget_bytes=8 * 1024 * 1024):
    """Largest divisor of H_out whose per-step working set fits the VMEM budget."""
    best = 1
    for d in range(1, H_out + 1):
        if H_out % d:
            continue
        rows = d * Wp
        est = itemsize * (2 * (d + KH) * Wp * C_in      # double-buffered input tile
                          + 2 * rows * C_out            # double-buffered output tile
                          + rows * KH * KW * C_in       # fused-K patches
                          + KH * KW * C_in * C_out)     # resident weights
        est += 4 * rows * C_out                          # f32 accumulator
        if est <= vmem_budget_bytes:
            best = d
    return best


def conv2d_cd(x, weight, *, theta=0.7, padding=1, row_tile=None):
    """Central-difference conv.  x: (N, C_in, H, W) NCHW, weight: (C_out, C_in, KH, KW).

    Matches the PyTorch module defaults: stride=1, dilation=1, groups=1, bias=False.
    """
    # TODO(synk): stride/dilation/groups other than the module defaults (1/1/1) are
    # not implemented in the Pallas path.
    N, C_in, H, W = x.shape
    C_out, C_in_w, KH, KW = weight.shape
    assert C_in == C_in_w, "groups != 1 not supported"

    H_out = H + 2 * padding - KH + 1
    W_out = W + 2 * padding - KW + 1
    assert H_out > 0 and W_out > 0

    # ---- fold the central-difference term into the centre tap (done once in XLA) ----
    w = weight
    if abs(float(theta)) >= 1e-8:
        # out_diff is a pad=0 1x1 conv of the unpadded input; it coincides with the
        # centre tap of the padded window only for "same" padding.
        assert padding == KH // 2 == KW // 2, \
            "theta != 0 requires padding == kernel_size // 2"
        k_sum = jnp.sum(weight, axis=(2, 3))              # (C_out, C_in)
        w = w.at[:, :, KH // 2, KW // 2].add((-theta) * k_sum)

    # (C_out, C_in, KH, KW) -> (KH*KW*C_in, C_out); row order (kh, kw, c) matches the
    # kernel's tap-concatenation order.  Constant-index BlockSpec keeps it VMEM-resident.
    w_flat = jnp.transpose(w, (2, 3, 1, 0)).reshape(KH * KW * C_in, C_out)

    # ---- NHWC + spatial zero pad (+1 guard row so in-kernel tap slices never OOB) ----
    x_nhwc = jnp.transpose(x, (0, 2, 3, 1))
    xp = jnp.pad(x_nhwc, ((0, 0), (padding, padding + 1), (padding, padding), (0, 0)))
    Wp = W + 2 * padding

    # ---- row tiling; the KH-1 (+1 guard) halo rows are duplicated here in XLA so the
    #      Pallas blocks stay non-overlapping and per-step VMEM is bounded ----
    if row_tile is None:
        row_tile = _pick_row_tile(H_out, Wp, C_in, C_out, KH, KW, x.dtype.itemsize)
    TH = int(row_tile)
    assert H_out % TH == 0, "row_tile must divide the output height"
    n_tiles = H_out // TH

    tiles = jnp.stack([xp[:, t * TH:t * TH + TH + KH] for t in range(n_tiles)], axis=1)
    tiles = tiles.reshape(N * n_tiles, (TH + KH) * Wp, C_in)

    def run(fuse_taps):
        kernel = functools.partial(_conv_cd_kernel, KH=KH, KW=KW, TH=TH, Wp=Wp,
                                   C_in=C_in, fuse_taps=fuse_taps)
        return pl.pallas_call(
            kernel,
            out_shape=jax.ShapeDtypeStruct((N * n_tiles, TH * Wp, C_out), x.dtype),
            grid_spec=pltpu.PrefetchScalarGridSpec(
                num_scalar_prefetch=0,
                grid=(N * n_tiles,),
                in_specs=[
                    pl.BlockSpec((1, (TH + KH) * Wp, C_in), lambda i: (i, 0, 0)),
                    pl.BlockSpec((KH * KW * C_in, C_out), lambda i: (0, 0)),
                ],
                out_specs=pl.BlockSpec((1, TH * Wp, C_out), lambda i: (i, 0, 0)),
            ),
            compiler_params=pltpu.CompilerParams(
                dimension_semantics=("parallel",),
                vmem_limit_bytes=32 * 1024 * 1024),
        )(tiles, w_flat)

    try:
        out_wide = run(True)        # fused-K path: one matmul per row tile
    except Exception:               # pragma: no cover
        # Mosaic builds without unaligned lane concatenation: per-tap matmuls instead.
        out_wide = run(False)

    # Drop the Wp - W_out overhang columns and restore NCHW.  Pure layout plumbing in
    # XLA, kept out of the kernel so the kernel's stores stay lane/sublane dense.
    out = out_wide.reshape(N, n_tiles, TH, Wp, C_out)[:, :, :, :W_out, :]
    out = out.reshape(N, H_out, W_out, C_out)
    return jnp.transpose(out, (0, 3, 1, 2))


def _reference(x, weight, theta, padding=1):
    out_normal = jax.lax.conv_general_dilated(
        x, weight, window_strides=(1, 1), padding=((padding, padding),) * 2,
        dimension_numbers=("NCHW", "OIHW", "NCHW"))
    if abs(float(theta)) < 1e-8:
        return out_normal
    kernel_diff = weight.sum(axis=(2, 3))[:, :, None, None]
    out_diff = jax.lax.conv_general_dilated(
        x, kernel_diff, window_strides=(1, 1), padding=((0, 0), (0, 0)),
        dimension_numbers=("NCHW", "OIHW", "NCHW"))
    return out_normal - theta * out_diff


if __name__ == "__main__":
    key = jax.random.PRNGKey(0)
    kx, kw = jax.random.split(key)

    N, C_in, C_out, H, W = 2, 4, 8, 16, 16
    theta = 0.7

    x = jax.random.normal(kx, (N, C_in, H, W), dtype=jnp.float32)
    # Weight shape as produced by nn.Conv2d(in_channels, out_channels, 3): (C_out, C_in, 3, 3)
    weight = 0.1 * jax.random.normal(kw, (C_out, C_in, 3, 3), dtype=jnp.float32)

    out = jax.block_until_ready(conv2d_cd(x, weight, theta=theta))            # auto row tile
    out_tiled = jax.block_until_ready(conv2d_cd(x, weight, theta=theta, row_tile=8))
    out_plain = jax.block_until_ready(conv2d_cd(x, weight, theta=0.0))        # theta == 0 path

    ref = _reference(x, weight, theta)
    ref_plain = _reference(x, weight, 0.0)

    assert out.shape == (N, C_out, H, W)
    assert float(jnp.max(jnp.abs(out - ref))) < 5e-4, "mismatch vs reference (auto tile)"
    assert float(jnp.max(jnp.abs(out_tiled - ref))) < 5e-4, "mismatch vs reference (row_tile=8)"
    assert float(jnp.max(jnp.abs(out_plain - ref_plain))) < 5e-4, "mismatch vs reference (theta=0)"

    print("KERNEL_OK")
</pallas_src>

<mosaic_0001>
module attributes {stable_mosaic.version = 11 : i64} {
  func.func @_conv_cd_kernel(%arg0: i32, %arg1: memref<1x342x4xf32, #tpu.memory_space<vmem>>, %arg2: memref<36x8xf32, #tpu.memory_space<vmem>>, %arg3: memref<1x288x8xf32, #tpu.memory_space<vmem>>) attributes {dimension_semantics = [#tpu.dimension_semantics<parallel>], iteration_bounds = array<i64: 2>, scalar_prefetch = 0 : i64, scratch_operands = 0 : i64, tpu.core_type = #tpu.core_type<tc>, window_params = [{transform_indices = @transform_0, window_bounds = array<i64: 1, 342, 4>}, {pipeline_mode = #tpu.pipeline_mode<synchronous>, transform_indices = @transform_1, window_bounds = array<i64: 36, 8>}, {transform_indices = @transform_2, window_bounds = array<i64: 1, 288, 8>}]} {
    %c0 = arith.constant 0 : index
    %c0_0 = arith.constant 0 : index
    %c0_1 = arith.constant 0 : index
    %0 = vector.load %arg1[%c0, %c0_0, %c0_1] : memref<1x342x4xf32, #tpu.memory_space<vmem>>, vector<1x342x4xf32>
    %1 = vector.shape_cast %0 : vector<1x342x4xf32> to vector<342x4xf32>
    %2 = vector.extract_strided_slice %1 {offsets = [0, 0], sizes = [288, 4], strides = [1, 1]} : vector<342x4xf32> to vector<288x4xf32>
    %3 = vector.extract_strided_slice %1 {offsets = [1, 0], sizes = [288, 4], strides = [1, 1]} : vector<342x4xf32> to vector<288x4xf32>
    %4 = vector.extract_strided_slice %1 {offsets = [2, 0], sizes = [288, 4], strides = [1, 1]} : vector<342x4xf32> to vector<288x4xf32>
    %5 = vector.extract_strided_slice %1 {offsets = [18, 0], sizes = [288, 4], strides = [1, 1]} : vector<342x4xf32> to vector<288x4xf32>
    %6 = vector.extract_strided_slice %1 {offsets = [19, 0], sizes = [288, 4], strides = [1, 1]} : vector<342x4xf32> to vector<288x4xf32>
    %7 = vector.extract_strided_slice %1 {offsets = [20, 0], sizes = [288, 4], strides = [1, 1]} : vector<342x4xf32> to vector<288x4xf32>
    %8 = vector.extract_strided_slice %1 {offsets = [36, 0], sizes = [288, 4], strides = [1, 1]} : vector<342x4xf32> to vector<288x4xf32>
    %9 = vector.extract_strided_slice %1 {offsets = [37, 0], sizes = [288, 4], strides = [1, 1]} : vector<342x4xf32> to vector<288x4xf32>
    %10 = vector.extract_strided_slice %1 {offsets = [38, 0], sizes = [288, 4], strides = [1, 1]} : vector<342x4xf32> to vector<288x4xf32>
    %11 = tpu.concatenate %2, %3, %4, %5, %6, %7, %8, %9, %10 in 1 : vector<288x4xf32>, vector<288x4xf32>, vector<288x4xf32>, vector<288x4xf32>, vector<288x4xf32>, vector<288x4xf32>, vector<288x4xf32>, vector<288x4xf32>, vector<288x4xf32> -> vector<288x36xf32>
    %c0_2 = arith.constant 0 : index
    %c0_3 = arith.constant 0 : index
    %12 = vector.load %arg2[%c0_2, %c0_3] : memref<36x8xf32, #tpu.memory_space<vmem>>, vector<36x8xf32>
    %cst = arith.constant dense<0.000000e+00> : vector<288x8xf32>
    %13 = tpu.matmul %11, %12, %cst {dimension_numbers = #tpu.dot_dimension_numbers<[1], [0], [0], [1], [0, 0, 1, 1], [], []>} : vector<288x36xf32>, vector<36x8xf32>, vector<288x8xf32> -> vector<288x8xf32>
    %c0_4 = arith.constant 0 : index
    %c0_5 = arith.constant 0 : index
    %c0_6 = arith.constant 0 : index
    %14 = vector.load %arg3[%c0_4, %c0_5, %c0_6] : memref<1x288x8xf32, #tpu.memory_space<vmem>>, vector<1x288x8xf32>
    %15 = vector.shape_cast %14 : vector<1x288x8xf32> to vector<288x8xf32>
    %16 = vector.shape_cast %13 : vector<288x8xf32> to vector<1x288x8xf32>
    tpu.vector_store %arg3[%c0_4, %c0_5, %c0_6], %16 {strides = array<i32>} : memref<1x288x8xf32, #tpu.memory_space<vmem>>, vector<1x288x8xf32>,
    return
  }
  func.func @transform_0(%arg0: i32) -> (i32, i32, i32) {
    %c0_i32 = arith.constant 0 : i32
    %c0_i32_0 = arith.constant 0 : i32
    %c0_i32_1 = arith.constant 0 : i32
    return %arg0, %c0_i32, %c0_i32_0 : i32, i32, i32
  }
  func.func @transform_1(%arg0: i32) -> (i32, i32) {
    %c0_i32 = arith.constant 0 : i32
    %c0_i32_0 = arith.constant 0 : i32
    %c0_i32_1 = arith.constant 0 : i32
    return %c0_i32, %c0_i32_0 : i32, i32
  }
  func.func @transform_2(%arg0: i32) -> (i32, i32, i32) {
    %c0_i32 = arith.constant 0 : i32
    %c0_i32_0 = arith.constant 0 : i32
    %c0_i32_1 = arith.constant 0 : i32
    return %arg0, %c0_i32, %c0_i32_0 : i32, i32, i32
  }
}

module attributes {stable_mosaic.version = 11 : i64} {
  func.func @_conv_cd_kernel(%arg0: i32, %arg1: memref<1x342x4xf32, #tpu.memory_space<vmem>>, %arg2: memref<36x8xf32, #tpu.memory_space<vmem>>, %arg3: memref<1x288x8xf32, #tpu.memory_space<vmem>>) attributes {dimension_semantics = [#tpu.dimension_semantics<parallel>], iteration_bounds = array<i64: 2>, scalar_prefetch = 0 : i64, scratch_operands = 0 : i64, tpu.core_type = #tpu.core_type<tc>, window_params = [{transform_indices = @transform_0, window_bounds = array<i64: 1, 342, 4>}, {pipeline_mode = #tpu.pipeline_mode<synchronous>, transform_indices = @transform_1, window_bounds = array<i64: 36, 8>}, {transform_indices = @transform_2, window_bounds = array<i64: 1, 288, 8>}]} {
    %c0 = arith.constant 0 : index
    %c0_0 = arith.constant 0 : index
    %c0_1 = arith.constant 0 : index
    %0 = vector.load %arg1[%c0, %c0_0, %c0_1] : memref<1x342x4xf32, #tpu.memory_space<vmem>>, vector<1x342x4xf32>
    %1 = vector.shape_cast %0 : vector<1x342x4xf32> to vector<342x4xf32>
    %2 = vector.extract_strided_slice %1 {offsets = [0, 0], sizes = [288, 4], strides = [1, 1]} : vector<342x4xf32> to vector<288x4xf32>
    %3 = vector.extract_strided_slice %1 {offsets = [1, 0], sizes = [288, 4], strides = [1, 1]} : vector<342x4xf32> to vector<288x4xf32>
    %4 = vector.extract_strided_slice %1 {offsets = [2, 0], sizes = [288, 4], strides = [1, 1]} : vector<342x4xf32> to vector<288x4xf32>
    %5 = vector.extract_strided_slice %1 {offsets = [18, 0], sizes = [288, 4], strides = [1, 1]} : vector<342x4xf32> to vector<288x4xf32>
    %6 = vector.extract_strided_slice %1 {offsets = [19, 0], sizes = [288, 4], strides = [1, 1]} : vector<342x4xf32> to vector<288x4xf32>
    %7 = vector.extract_strided_slice %1 {offsets = [20, 0], sizes = [288, 4], strides = [1, 1]} : vector<342x4xf32> to vector<288x4xf32>
    %8 = vector.extract_strided_slice %1 {offsets = [36, 0], sizes = [288, 4], strides = [1, 1]} : vector<342x4xf32> to vector<288x4xf32>
    %9 = vector.extract_strided_slice %1 {offsets = [37, 0], sizes = [288, 4], strides = [1, 1]} : vector<342x4xf32> to vector<288x4xf32>
    %10 = vector.extract_strided_slice %1 {offsets = [38, 0], sizes = [288, 4], strides = [1, 1]} : vector<342x4xf32> to vector<288x4xf32>
    %cst = arith.constant 0.000000e+00 : f32
    %11 = vector.broadcast %cst : f32 to vector<288x8xf32>
    %c0_2 = arith.constant 0 : index
    %c0_3 = arith.constant 0 : index
    %12 = vector.load %arg2[%c0_2, %c0_3] : memref<36x8xf32, #tpu.memory_space<vmem>>, vector<4x8xf32>
    %cst_4 = arith.constant dense<0.000000e+00> : vector<288x8xf32>
    %13 = tpu.matmul %2, %12, %cst_4 {dimension_numbers = #tpu.dot_dimension_numbers<[1], [0], [0], [1], [0, 0, 1, 1], [], []>} : vector<288x4xf32>, vector<4x8xf32>, vector<288x8xf32> -> vector<288x8xf32>
    %14 = arith.addf %11, %13 : vector<288x8xf32>
    %c4 = arith.constant 4 : index
    %c0_5 = arith.constant 0 : index
    %15 = vector.load %arg2[%c4, %c0_5] : memref<36x8xf32, #tpu.memory_space<vmem>>, vector<4x8xf32>
    %cst_6 = arith.constant dense<0.000000e+00> : vector<288x8xf32>
    %16 = tpu.matmul %3, %15, %cst_6 {dimension_numbers = #tpu.dot_dimension_numbers<[1], [0], [0], [1], [0, 0, 1, 1], [], []>} : vector<288x4xf32>, vector<4x8xf32>, vector<288x8xf32> -> vector<288x8xf32>
    %17 = arith.addf %14, %16 : vector<288x8xf32>
    %c8 = arith.constant 8 : index
    %c0_7 = arith.constant 0 : index
    %18 = vector.load %arg2[%c8, %c0_7] : memref<36x8xf32, #tpu.memory_space<vmem>>, vector<4x8xf32>
    %cst_8 = arith.constant dense<0.000000e+00> : vector<288x8xf32>
    %19 = tpu.matmul %4, %18, %cst_8 {dimension_numbers = #tpu.dot_dimension_numbers<[1], [0], [0], [1], [0, 0, 1, 1], [], []>} : vector<288x4xf32>, vector<4x8xf32>, vector<288x8xf32> -> vector<288x8xf32>
    %20 = arith.addf %17, %19 : vector<288x8xf32>
    %c12 = arith.constant 12 : index
    %c0_9 = arith.constant 0 : index
    %21 = vector.load %arg2[%c12, %c0_9] : memref<36x8xf32, #tpu.memory_space<vmem>>, vector<4x8xf32>
    %cst_10 = arith.constant dense<0.000000e+00> : vector<288x8xf32>
    %22 = tpu.matmul %5, %21, %cst_10 {dimension_numbers = #tpu.dot_dimension_numbers<[1], [0], [0], [1], [0, 0, 1, 1], [], []>} : vector<288x4xf32>, vector<4x8xf32>, vector<288x8xf32> -> vector<288x8xf32>
    %23 = arith.addf %20, %22 : vector<288x8xf32>
    %c16 = arith.constant 16 : index
    %c0_11 = arith.constant 0 : index
    %24 = vector.load %arg2[%c16, %c0_11] : memref<36x8xf32, #tpu.memory_space<vmem>>, vector<4x8xf32>
    %cst_12 = arith.constant dense<0.000000e+00> : vector<288x8xf32>
    %25 = tpu.matmul %6, %24, %cst_12 {dimension_numbers = #tpu.dot_dimension_numbers<[1], [0], [0], [1], [0, 0, 1, 1], [], []>} : vector<288x4xf32>, vector<4x8xf32>, vector<288x8xf32> -> vector<288x8xf32>
    %26 = arith.addf %23, %25 : vector<288x8xf32>
    %c20 = arith.constant 20 : index
    %c0_13 = arith.constant 0 : index
    %27 = vector.load %arg2[%c20, %c0_13] : memref<36x8xf32, #tpu.memory_space<vmem>>, vector<4x8xf32>
    %cst_14 = arith.constant dense<0.000000e+00> : vector<288x8xf32>
    %28 = tpu.matmul %7, %27, %cst_14 {dimension_numbers = #tpu.dot_dimension_numbers<[1], [0], [0], [1], [0, 0, 1, 1], [], []>} : vector<288x4xf32>, vector<4x8xf32>, vector<288x8xf32> -> vector<288x8xf32>
    %29 = arith.addf %26, %28 : vector<288x8xf32>
    %c24 = arith.constant 24 : index
    %c0_15 = arith.constant 0 : index
    %30 = vector.load %arg2[%c24, %c0_15] : memref<36x8xf32, #tpu.memory_space<vmem>>, vector<4x8xf32>
    %cst_16 = arith.constant dense<0.000000e+00> : vector<288x8xf32>
    %31 = tpu.matmul %8, %30, %cst_16 {dimension_numbers = #tpu.dot_dimension_numbers<[1], [0], [0], [1], [0, 0, 1, 1], [], []>} : vector<288x4xf32>, vector<4x8xf32>, vector<288x8xf32> -> vector<288x8xf32>
    %32 = arith.addf %29, %31 : vector<288x8xf32>
    %c28 = arith.constant 28 : index
    %c0_17 = arith.constant 0 : index
    %33 = vector.load %arg2[%c28, %c0_17] : memref<36x8xf32, #tpu.memory_space<vmem>>, vector<4x8xf32>
    %cst_18 = arith.constant dense<0.000000e+00> : vector<288x8xf32>
    %34 = tpu.matmul %9, %33, %cst_18 {dimension_numbers = #tpu.dot_dimension_numbers<[1], [0], [0], [1], [0, 0, 1, 1], [], []>} : vector<288x4xf32>, vector<4x8xf32>, vector<288x8xf32> -> vector<288x8xf32>
    %35 = arith.addf %32, %34 : vector<288x8xf32>
    %c32 = arith.constant 32 : index
    %c0_19 = arith.constant 0 : index
    %36 = vector.load %arg2[%c32, %c0_19] : memref<36x8xf32, #tpu.memory_space<vmem>>, vector<4x8xf32>
    %cst_20 = arith.constant dense<0.000000e+00> : vector<288x8xf32>
    %37 = tpu.matmul %10, %36, %cst_20 {dimension_numbers = #tpu.dot_dimension_numbers<[1], [0], [0], [1], [0, 0, 1, 1], [], []>} : vector<288x4xf32>, vector<4x8xf32>, vector<288x8xf32> -> vector<288x8xf32>
    %38 = arith.addf %35, %37 : vector<288x8xf32>
    %c0_21 = arith.constant 0 : index
    %c0_22 = arith.constant 0 : index
    %c0_23 = arith.constant 0 : index
    %39 = vector.load %arg3[%c0_21, %c0_22, %c0_23] : memref<1x288x8xf32, #tpu.memory_space<vmem>>, vector<1x288x8xf32>
    %40 = vector.shape_cast %39 : vector<1x288x8xf32> to vector<288x8xf32>
    %41 = vector.shape_cast %38 : vector<288x8xf32> to vector<1x288x8xf32>
    tpu.vector_store %arg3[%c0_21, %c0_22, %c0_23], %41 {strides = array<i32>} : memref<1x288x8xf32, #tpu.memory_space<vmem>>, vector<1x288x8xf32>,
    return
  }
  func.func @transform_0(%arg0: i32) -> (i32, i32, i32) {
    %c0_i32 = arith.constant 0 : i32
    %c0_i32_0 = arith.constant 0 : i32
    %c0_i32_1 = arith.constant 0 : i32
    return %arg0, %c0_i32, %c0_i32_0 : i32, i32, i32
  }
  func.func @transform_1(%arg0: i32) -> (i32, i32) {
    %c0_i32 = arith.constant 0 : i32
    %c0_i32_0 = arith.constant 0 : i32
    %c0_i32_1 = arith.constant 0 : i32
    return %c0_i32, %c0_i32_0 : i32, i32
  }
  func.func @transform_2(%arg0: i32) -> (i32, i32, i32) {
    %c0_i32 = arith.constant 0 : i32
    %c0_i32_0 = arith.constant 0 : i32
    %c0_i32_1 = arith.constant 0 : i32
    return %arg0, %c0_i32, %c0_i32_0 : i32, i32, i32
  }
}

</mosaic_0001>

<llo_original>
// kernel: tpu_custom_call.1
$region0: #{tpu_custom_call.1}
  #allocation0 [shape = 'u32[]', space=smem, size = 0x4, offset = 0x4, fixed_abs, tag = 'smem constant byte address 0x4 - core index']
  #allocation1 [shape = 'u32[144,128]{1,0:T(1,128)}', space=vmem, size = 0x12000, scoped, tag = 'internal scratch']
  %s0 = inlined_call_operand.vmem [shape: f32[2,342,4], index: 0, kind: input, shape index: {}]
  %s1 = inlined_call_operand.vmem [shape: f32[36,8], index: 1, kind: input, shape index: {}]
  %s2 = inlined_call_operand.vmem [shape: f32[2,288,8], index: 2, kind: output, shape index: {}]
  %s3 = sld [smem:[#allocation0]]
  $region41: #{tpu_custom_call.1} parent=0
    _
  %s5 = ssub.s32 1, %s3
  %s6 = scalar_select 0, %s5, %s3
  loop: start=0, step=1, limit=4
  $region2: #{tpu_custom_call.1} parent=0 // loop_pre_header
    _
  $region3: #{tpu_custom_call.1} parent=0 // loop_header
    %s8 = sphi 0, %s12
    %p9 = scmp.ge.s32.totalorder %s8, 4
    %s18 = sphi 0, %s20
    %s21 = sphi 0, %s18
    %s22 = sphi 0, %s21
    %s38 = sphi 0, %s22
    %s42 = sphi 0, %s42
    %s44 = sphi 0, %s42
    %s45 = sphi 0, %s44
    %s59 = sphi 0, %s45
    %s65 = sphi 0, %s67
    %s68 = sphi 0, %s65
    %s69 = sphi 0, %s68
    %s85 = sphi 0, %s69
  $region4: #{tpu_custom_call.1} parent=0 // loop_header_branch
    %11 = sbr.rel (%p9) target = $region8
  $region5: #{tpu_custom_call.1} parent=0 // loop_body
    %s13 = ssub.s32 %s8, 1
    %s14 = ssub.s32 %s8, 2
    %s15 = sadd.s32 %s8, 1
    %s16 = ssub.s32 %s8, %s15
    %p17 = scmp.eq.s32.totalorder %s16, 0
    %s19 = sadd.s32 %s18, 1
    %s20 = scalar_select %p17, %s18, %s19
    %p23 = pneg %p17
    %p24 = scmp.eq.s32.totalorder %s8, 1
    %p25 = por %p23, %p24
    %p26 = scmp.ne.s32.totalorder %s18, %s21
    %p27 = scmp.eq.s32.totalorder %s8, 0
    %p28 = por %p26, %p27
    %p29 = scmp.ne.s32.totalorder %s18, %s21
    %p30 = scmp.eq.s32.totalorder %s13, 1
    %p31 = por %p29, %p30
    %p32 = scmp.ne.s32.totalorder %s21, %s22
    %p33 = scmp.eq.s32.totalorder %s13, 0
    %p34 = por %p32, %p33
    %p35 = scmp.ne.s32.totalorder %s21, %s22
    %p36 = scmp.eq.s32.totalorder %s14, 1
    %p37 = por %p35, %p36
    %p39 = scmp.ne.s32.totalorder %s22, %s38
    %p40 = scmp.eq.s32.totalorder %s14, 0
    %p41 = por %p39, %p40
    %s43 = sadd.s32 %s42, 1
    %p46 = scmp.eq.s32.totalorder %s8, 1
    %p47 = scmp.ne.s32.totalorder %s42, %s44
    %p48 = scmp.eq.s32.totalorder %s8, 0
    %p49 = por %p47, %p48
    %p50 = scmp.ne.s32.totalorder %s42, %s44
    %p51 = scmp.eq.s32.totalorder %s13, 1
    %p52 = por %p50, %p51
    %p53 = scmp.ne.s32.totalorder %s44, %s45
    %p54 = scmp.eq.s32.totalorder %s13, 0
    %p55 = por %p53, %p54
    %p56 = scmp.ne.s32.totalorder %s44, %s45
    %p57 = scmp.eq.s32.totalorder %s14, 1
    %p58 = por %p56, %p57
    %p60 = scmp.ne.s32.totalorder %s45, %s59
    %p61 = scmp.eq.s32.totalorder %s14, 0
    %p62 = por %p60, %p61
    %s63 = ssub.s32 %s8, %s15
    %p64 = scmp.eq.s32.totalorder %s63, 0
    %s66 = sadd.s32 %s65, 1
    %s67 = scalar_select %p64, %s65, %s66
    %p70 = pneg %p64
    %p71 = scmp.eq.s32.totalorder %s8, 1
    %p72 = por %p70, %p71
    %p73 = scmp.ne.s32.totalorder %s65, %s68
    %p74 = scmp.eq.s32.totalorder %s8, 0
    %p75 = por %p73, %p74
    %p76 = scmp.ne.s32.totalorder %s65, %s68
    %p77 = scmp.eq.s32.totalorder %s13, 1
    %p78 = por %p76, %p77
    %p79 = scmp.ne.s32.totalorder %s68, %s69
    %p80 = scmp.eq.s32.totalorder %s13, 0
    %p81 = por %p79, %p80
    %p82 = scmp.ne.s32.totalorder %s68, %s69
    %p83 = scmp.eq.s32.totalorder %s14, 1
    %p84 = por %p82, %p83
    %p86 = scmp.ne.s32.totalorder %s69, %s85
    %p87 = scmp.eq.s32.totalorder %s14, 0
    %p88 = por %p86, %p87
    %p89 = scmp.le.s32.totalorder 1, %s8
    %p90 = scmp.lt.s32.totalorder %s8, 3
    %p91 = pnand %p89, %p90
    %p92 = pneg %p91
    // Predicated region
    $region9: #{tpu_custom_call.1} parent=5 // pred_check
      _
    $region10: #{tpu_custom_call.1} parent=5 // pred_check_branch
      %94 = sbr.rel (%p91) target = $region12
    $region11: #{tpu_custom_call.1} parent=5 // pred_region
      %s95 = ssub.s32 %s8, 1
      // Predicated region
      $region13: #{tpu_custom_call.1} parent=11 // pred_check
        %p96 = pneg %p55
      $region14: #{tpu_custom_call.1} parent=11 // pred_check_branch
        %98 = sbr.rel (%p96) target = $region16
      $region15: #{tpu_custom_call.1} parent=11 // pred_region
        _
      $region16: #{tpu_custom_call.1} parent=11 // pred_fallthru
        _
    $region12: #{tpu_custom_call.1} parent=5 // pred_fallthru
      _
    %p99 = scmp.lt.s32.totalorder %s8, 2
    // Predicated region
    $region17: #{tpu_custom_call.1} parent=5 // pred_check
      %p100 = pneg %p99
    $region18: #{tpu_custom_call.1} parent=5 // pred_check_branch
      %102 = sbr.rel (%p100) target = $region20
    $region19: #{tpu_custom_call.1} parent=5 // pred_region
      // Predicated region
      $region21: #{tpu_custom_call.1} parent=19 // pred_check
        %p103 = pneg %p28
      $region22: #{tpu_custom_call.1} parent=19 // pred_check_branch
        %105 = sbr.rel (%p103) target = $region24
      $region23: #{tpu_custom_call.1} parent=19 // pred_region
        %p106 = scmp.lt.s32.totalorder %s8, 1
        %s107 = scalar_select %p106, %s8, 1
        %s108 = smul.addr %s107, 43
        %s109 = smul.addr %s108, 8
        %s110 = scalar_lea.vmem %s0, %s109
      $region24: #{tpu_custom_call.1} parent=19 // pred_fallthru
        _
    $region20: #{tpu_custom_call.1} parent=5 // pred_fallthru
      _
    %p111 = scmp.le.s32.totalorder 1, %s8
    %p112 = scmp.lt.s32.totalorder %s8, 3
    %p113 = pnand %p111, %p112
    %p114 = pneg %p113
    // Predicated region
    $region25: #{tpu_custom_call.1} parent=5 // pred_check
      _
    $region26: #{tpu_custom_call.1} parent=5 // pred_check_branch
      %116 = sbr.rel (%p113) target = $region28
    $region27: #{tpu_custom_call.1} parent=5 // pred_region
      %s117 = ssub.s32 %s8, 1
      %p118 = scmp.lt.s32.totalorder %s13, 1
      %s119 = scalar_select %p118, %s13, 1
      %s120 = smul.addr %s119, 43
      %s121 = smul.addr %s120, 8
      %s122 = scalar_lea.vmem %s0, %s121
      %p123 = pneg %p34
      %p124 = pneg %p31
      %p125 = pneg %p55
      %p126 = pneg %p52
      %p127 = pneg %p81
      %p128 = pneg %p78
      %p129 = scmp.lt.s32.totalorder %s13, 1
      %s130 = scalar_select %p129, %s13, 1
      %s131 = smul.addr %s130, 36
      %s132 = smul.addr %s131, 8
      %s133 = scalar_lea.vmem %s2, %s132
      %p134 = scmp.lt.s32.totalorder %s13, 1
      %s135 = scalar_select %p134, %s13, 1
      %s136 = smul.addr %s135, 43
      %s137 = smul.addr %s136, 8
      %s138 = scalar_lea.vmem %s0, %s137
      %p139 = scmp.lt.s32.totalorder %s13, 1
      %s140 = scalar_select %p139, %s13, 1
      %s141 = smul.addr %s140, 36
      %s142 = smul.addr %s141, 8
      %s143 = scalar_lea.vmem %s2, %s142
      %v144 = vld [vmem:[%s138] sm:$0xff]
      %v145 = vld [vmem:[%s138 + $0x8] sm:$0xff]
      %v146 = vld [vmem:[%s138 + $0x10] sm:$0xff]
      %v147 = vld [vmem:[%s138 + $0x18] sm:$0xff]
      %v148 = vld [vmem:[%s138 + $0x20] sm:$0xff]
      %v149 = vld [vmem:[%s138 + $0x28] sm:$0xff]
      %v150 = vld [vmem:[%s138 + $0x30] sm:$0xff]
      %v151 = vld [vmem:[%s138 + $0x38] sm:$0xff]
      %v152 = vld [vmem:[%s138 + $0x40] sm:$0xff]
      %v153 = vld [vmem:[%s138 + $0x48] sm:$0xff]
      %v154 = vld [vmem:[%s138 + $0x50] sm:$0xff]
      %v155 = vld [vmem:[%s138 + $0x58] sm:$0xff]
      %v156 = vld [vmem:[%s138 + $0x60] sm:$0xff]
      %v157 = vld [vmem:[%s138 + $0x68] sm:$0xff]
      %v158 = vld [vmem:[%s138 + $0x70] sm:$0xff]
      %v159 = vld [vmem:[%s138 + $0x78] sm:$0xff]
      %v160 = vld [vmem:[%s138 + $0x80] sm:$0xff]
      %v161 = vld [vmem:[%s138 + $0x88] sm:$0xff]
      %v162 = vld [vmem:[%s138 + $0x90] sm:$0xff]
      %v163 = vld [vmem:[%s138 + $0x98] sm:$0xff]
      %v164 = vld [vmem:[%s138 + $0xa0] sm:$0xff]
      %v165 = vld [vmem:[%s138 + $0xa8] sm:$0xff]
      %v166 = vld [vmem:[%s138 + $0xb0] sm:$0xff]
      %v167 = vld [vmem:[%s138 + $0xb8] sm:$0xff]
      %v168 = vld [vmem:[%s138 + $0xc0] sm:$0xff]
      %v169 = vld [vmem:[%s138 + $0xc8] sm:$0xff]
      %v170 = vld [vmem:[%s138 + $0xd0] sm:$0xff]
      %v171 = vld [vmem:[%s138 + $0xd8] sm:$0xff]
      %v172 = vld [vmem:[%s138 + $0xe0] sm:$0xff]
      %v173 = vld [vmem:[%s138 + $0xe8] sm:$0xff]
      %v174 = vld [vmem:[%s138 + $0xf0] sm:$0xff]
      %v175 = vld [vmem:[%s138 + $0xf8] sm:$0xff]
      %v176 = vld [vmem:[%s138 + $0x100] sm:$0xff]
      %v177 = vld [vmem:[%s138 + $0x108] sm:$0xff]
      %v178 = vld [vmem:[%s138 + $0x110] sm:$0xff]
      %v179 = vld [vmem:[%s138 + $0x118] sm:$0xff]
      %v180 = vld [vmem:[%s138 + $0x120] sm:$0xff]
      %v181 = vld [vmem:[%s138 + $0x128] sm:$0xff]
      %v182 = vld [vmem:[%s138 + $0x130] sm:$0xff]
      %v183 = vld [vmem:[%s138 + $0x138] sm:$0xff]
      %v184 = vld [vmem:[%s138 + $0x140] sm:$0xff]
      %vm222 = vcmask 1046528
      %v223 = vrot.slane %v144, 1
      %v224 = vrot.slane %v145, 1
      %v225 = vsel %vm222, %v223, %v224
      %v226 = vrot.slane %v146, 1
      %v227 = vsel %vm222, %v224, %v226
      %v228 = vrot.slane %v147, 1
      %v229 = vsel %vm222, %v226, %v228
      %v230 = vrot.slane %v148, 1
      %v231 = vsel %vm222, %v228, %v230
      %v232 = vrot.slane %v149, 1
      %v233 = vsel %vm222, %v230, %v232
      %v234 = vrot.slane %v150, 1
      %v235 = vsel %vm222, %v232, %v234
      %v236 = vrot.slane %v151, 1
      %v237 = vsel %vm222, %v234, %v236
      %v238 = vrot.slane %v152, 1
      %v239 = vsel %vm222, %v236, %v238
      %v240 = vrot.slane %v153, 1
      %v241 = vsel %vm222, %v238, %v240
      %v242 = vrot.slane %v154, 1
      %v243 = vsel %vm222, %v240, %v242
      %v244 = vrot.slane %v155, 1
      %v245 = vsel %vm222, %v242, %v244
      %v246 = vrot.slane %v156, 1
      %v247 = vsel %vm222, %v244, %v246
      %v248 = vrot.slane %v157, 1
      %v249 = vsel %vm222, %v246, %v248
      %v250 = vrot.slane %v158, 1
      %v251 = vsel %vm222, %v248, %v250
      %v252 = vrot.slane %v159, 1
      %v253 = vsel %vm222, %v250, %v252
      %v254 = vrot.slane %v160, 1
      %v255 = vsel %vm222, %v252, %v254
      %v256 = vrot.slane %v161, 1
      %v257 = vsel %vm222, %v254, %v256
      %v258 = vrot.slane %v162, 1
      %v259 = vsel %vm222, %v256, %v258
      %v260 = vrot.slane %v163, 1
      %v261 = vsel %vm222, %v258, %v260
      %v262 = vrot.slane %v164, 1
      %v263 = vsel %vm222, %v260, %v262
      %v264 = vrot.slane %v165, 1
      %v265 = vsel %vm222, %v262, %v264
      %v266 = vrot.slane %v166, 1
      %v267 = vsel %vm222, %v264, %v266
      %v268 = vrot.slane %v167, 1
      %v269 = vsel %vm222, %v266, %v268
      %v270 = vrot.slane %v168, 1
      %v271 = vsel %vm222, %v268, %v270
      %v272 = vrot.slane %v169, 1
      %v273 = vsel %vm222, %v270, %v272
      %v274 = vrot.slane %v170, 1
      %v275 = vsel %vm222, %v272, %v274
      %v276 = vrot.slane %v171, 1
      %v277 = vsel %vm222, %v274, %v276
      %v278 = vrot.slane %v172, 1
      %v279 = vsel %vm222, %v276, %v278
      %v280 = vrot.slane %v173, 1
      %v281 = vsel %vm222, %v278, %v280
      %v282 = vrot.slane %v174, 1
      %v283 = vsel %vm222, %v280, %v282
      %v284 = vrot.slane %v175, 1
      %v285 = vsel %vm222, %v282, %v284
      %v286 = vrot.slane %v176, 1
      %v287 = vsel %vm222, %v284, %v286
      %v288 = vrot.slane %v177, 1
      %v289 = vsel %vm222, %v286, %v288
      %v290 = vrot.slane %v178, 1
      %v291 = vsel %vm222, %v288, %v290
      %v292 = vrot.slane %v179, 1
      %v293 = vsel %vm222, %v290, %v292
      %v294 = vrot.slane %v180, 1
      %v295 = vsel %vm222, %v292, %v294
      %296 = vrot.lane.b32.xlu0 %v225, 4
      %v297 = vpop.permute.xlu0 %296
      %298 = vrot.lane.b32.xlu0 %v227, 4
      %v299 = vpop.permute.xlu0 %298
      %300 = vrot.lane.b32.xlu0 %v229, 4
      %v301 = vpop.permute.xlu0 %300
      %302 = vrot.lane.b32.xlu0 %v231, 4
      %v303 = vpop.permute.xlu0 %302
      %304 = vrot.lane.b32.xlu0 %v233, 4
      %v305 = vpop.permute.xlu0 %304
      %306 = vrot.lane.b32.xlu0 %v235, 4
      %v307 = vpop.permute.xlu0 %306
      %308 = vrot.lane.b32.xlu0 %v237, 4
      %v309 = vpop.permute.xlu0 %308
      %310 = vrot.lane.b32.xlu0 %v239, 4
      %v311 = vpop.permute.xlu0 %310
      %312 = vrot.lane.b32.xlu0 %v241, 4
      %v313 = vpop.permute.xlu0 %312
      %314 = vrot.lane.b32.xlu0 %v243, 4
      %v315 = vpop.permute.xlu0 %314
      %316 = vrot.lane.b32.xlu0 %v245, 4
      %v317 = vpop.permute.xlu0 %316
      %318 = vrot.lane.b32.xlu0 %v247, 4
      %v319 = vpop.permute.xlu0 %318
      %320 = vrot.lane.b32.xlu0 %v249, 4
      %v321 = vpop.permute.xlu0 %320
      %322 = vrot.lane.b32.xlu0 %v251, 4
      %v323 = vpop.permute.xlu0 %322
      %324 = vrot.lane.b32.xlu0 %v253, 4
      %v325 = vpop.permute.xlu0 %324
      %326 = vrot.lane.b32.xlu0 %v255, 4
      %v327 = vpop.permute.xlu0 %326
      %328 = vrot.lane.b32.xlu0 %v257, 4
      %v329 = vpop.permute.xlu0 %328
      %330 = vrot.lane.b32.xlu0 %v259, 4
      %v331 = vpop.permute.xlu0 %330
      %332 = vrot.lane.b32.xlu0 %v261, 4
      %v333 = vpop.permute.xlu0 %332
      %334 = vrot.lane.b32.xlu0 %v263, 4
      %v335 = vpop.permute.xlu0 %334
      %336 = vrot.lane.b32.xlu0 %v265, 4
      %v337 = vpop.permute.xlu0 %336
      %338 = vrot.lane.b32.xlu0 %v267, 4
      %v339 = vpop.permute.xlu0 %338
      %340 = vrot.lane.b32.xlu0 %v269, 4
      %v341 = vpop.permute.xlu0 %340
      %342 = vrot.lane.b32.xlu0 %v271, 4
      %v343 = vpop.permute.xlu0 %342
      %344 = vrot.lane.b32.xlu0 %v273, 4
      %v345 = vpop.permute.xlu0 %344
      %346 = vrot.lane.b32.xlu0 %v275, 4
      %v347 = vpop.permute.xlu0 %346
      %348 = vrot.lane.b32.xlu0 %v277, 4
      %v349 = vpop.permute.xlu0 %348
      %350 = vrot.lane.b32.xlu0 %v279, 4
      %v351 = vpop.permute.xlu0 %350
      %352 = vrot.lane.b32.xlu0 %v281, 4
      %v353 = vpop.permute.xlu0 %352
      %354 = vrot.lane.b32.xlu0 %v283, 4
      %v355 = vpop.permute.xlu0 %354
      %356 = vrot.lane.b32.xlu0 %v285, 4
      %v357 = vpop.permute.xlu0 %356
      %358 = vrot.lane.b32.xlu0 %v287, 4
      %v359 = vpop.permute.xlu0 %358
      %360 = vrot.lane.b32.xlu0 %v289, 4
      %v361 = vpop.permute.xlu0 %360
      %362 = vrot.lane.b32.xlu0 %v291, 4
      %v363 = vpop.permute.xlu0 %362
      %364 = vrot.lane.b32.xlu0 %v293, 4
      %v365 = vpop.permute.xlu0 %364
      %366 = vrot.lane.b32.xlu0 %v295, 4
      %v367 = vpop.permute.xlu0 %366
      %vm404 = vcmask 1045504
      %v405 = vrot.slane %v144, 2
      %v406 = vrot.slane %v145, 2
      %v407 = vsel %vm404, %v405, %v406
      %v408 = vrot.slane %v146, 2
      %v409 = vsel %vm404, %v406, %v408
      %v410 = vrot.slane %v147, 2
      %v411 = vsel %vm404, %v408, %v410
      %v412 = vrot.slane %v148, 2
      %v413 = vsel %vm404, %v410, %v412
      %v414 = vrot.slane %v149, 2
      %v415 = vsel %vm404, %v412, %v414
      %v416 = vrot.slane %v150, 2
      %v417 = vsel %vm404, %v414, %v416
      %v418 = vrot.slane %v151, 2
      %v419 = vsel %vm404, %v416, %v418
      %v420 = vrot.slane %v152, 2
      %v421 = vsel %vm404, %v418, %v420
      %v422 = vrot.slane %v153, 2
      %v423 = vsel %vm404, %v420, %v422
      %v424 = vrot.slane %v154, 2
      %v425 = vsel %vm404, %v422, %v424
      %v426 = vrot.slane %v155, 2
      %v427 = vsel %vm404, %v424, %v426
      %v428 = vrot.slane %v156, 2
      %v429 = vsel %vm404, %v426, %v428
      %v430 = vrot.slane %v157, 2
      %v431 = vsel %vm404, %v428, %v430
      %v432 = vrot.slane %v158, 2
      %v433 = vsel %vm404, %v430, %v432
      %v434 = vrot.slane %v159, 2
      %v435 = vsel %vm404, %v432, %v434
      %v436 = vrot.slane %v160, 2
      %v437 = vsel %vm404, %v434, %v436
      %v438 = vrot.slane %v161, 2
      %v439 = vsel %vm404, %v436, %v438
      %v440 = vrot.slane %v162, 2
      %v441 = vsel %vm404, %v438, %v440
      %v442 = vrot.slane %v163, 2
      %v443 = vsel %vm404, %v440, %v442
      %v444 = vrot.slane %v164, 2
      %v445 = vsel %vm404, %v442, %v444
      %v446 = vrot.slane %v165, 2
      %v447 = vsel %vm404, %v444, %v446
      %v448 = vrot.slane %v166, 2
      %v449 = vsel %vm404, %v446, %v448
      %v450 = vrot.slane %v167, 2
      %v451 = vsel %vm404, %v448, %v450
      %v452 = vrot.slane %v168, 2
      %v453 = vsel %vm404, %v450, %v452
      %v454 = vrot.slane %v169, 2
      %v455 = vsel %vm404, %v452, %v454
      %v456 = vrot.slane %v170, 2
      %v457 = vsel %vm404, %v454, %v456
      %v458 = vrot.slane %v171, 2
      %v459 = vsel %vm404, %v456, %v458
      %v460 = vrot.slane %v172, 2
      %v461 = vsel %vm404, %v458, %v460
      %v462 = vrot.slane %v173, 2
      %v463 = vsel %vm404, %v460, %v462
      %v464 = vrot.slane %v174, 2
      %v465 = vsel %vm404, %v462, %v464
      %v466 = vrot.slane %v175, 2
      %v467 = vsel %vm404, %v464, %v466
      %v468 = vrot.slane %v176, 2
      %v469 = vsel %vm404, %v466, %v468
      %v470 = vrot.slane %v177, 2
      %v471 = vsel %vm404, %v468, %v470
      %v472 = vrot.slane %v178, 2
      %v473 = vsel %vm404, %v470, %v472
      %v474 = vrot.slane %v179, 2
      %v475 = vsel %vm404, %v472, %v474
      %v476 = vrot.slane %v180, 2
      %v477 = vsel %vm404, %v474, %v476
      %478 = vrot.lane.b32.xlu0 %v407, 8
      %v479 = vpop.permute.xlu0 %478
      %480 = vrot.lane.b32.xlu0 %v409, 8
      %v481 = vpop.permute.xlu0 %480
      %482 = vrot.lane.b32.xlu0 %v411, 8
      %v483 = vpop.permute.xlu0 %482
      %484 = vrot.lane.b32.xlu0 %v413, 8
      %v485 = vpop.permute.xlu0 %484
      %486 = vrot.lane.b32.xlu0 %v415, 8
      %v487 = vpop.permute.xlu0 %486
      %488 = vrot.lane.b32.xlu0 %v417, 8
      %v489 = vpop.permute.xlu0 %488
      %490 = vrot.lane.b32.xlu0 %v419, 8
      %v491 = vpop.permute.xlu0 %490
      %492 = vrot.lane.b32.xlu0 %v421, 8
      %v493 = vpop.permute.xlu0 %492
      %494 = vrot.lane.b32.xlu0 %v423, 8
      %v495 = vpop.permute.xlu0 %494
      %496 = vrot.lane.b32.xlu0 %v425, 8
      %v497 = vpop.permute.xlu0 %496
      %498 = vrot.lane.b32.xlu0 %v427, 8
      %v499 = vpop.permute.xlu0 %498
      %500 = vrot.lane.b32.xlu0 %v429, 8
      %v501 = vpop.permute.xlu0 %500
      %502 = vrot.lane.b32.xlu0 %v431, 8
      %v503 = vpop.permute.xlu0 %502
      %504 = vrot.lane.b32.xlu0 %v433, 8
      %v505 = vpop.permute.xlu0 %504
      %506 = vrot.lane.b32.xlu0 %v435, 8
      %v507 = vpop.permute.xlu0 %506
      %508 = vrot.lane.b32.xlu0 %v437, 8
      %v509 = vpop.permute.xlu0 %508
      %510 = vrot.lane.b32.xlu0 %v439, 8
      %v511 = vpop.permute.xlu0 %510
      %512 = vrot.lane.b32.xlu0 %v441, 8
      %v513 = vpop.permute.xlu0 %512
      %514 = vrot.lane.b32.xlu0 %v443, 8
      %v515 = vpop.permute.xlu0 %514
      %516 = vrot.lane.b32.xlu0 %v445, 8
      %v517 = vpop.permute.xlu0 %516
      %518 = vrot.lane.b32.xlu0 %v447, 8
      %v519 = vpop.permute.xlu0 %518
      %520 = vrot.lane.b32.xlu0 %v449, 8
      %v521 = vpop.permute.xlu0 %520
      %522 = vrot.lane.b32.xlu0 %v451, 8
      %v523 = vpop.permute.xlu0 %522
      %524 = vrot.lane.b32.xlu0 %v453, 8
      %v525 = vpop.permute.xlu0 %524
      %526 = vrot.lane.b32.xlu0 %v455, 8
      %v527 = vpop.permute.xlu0 %526
      %528 = vrot.lane.b32.xlu0 %v457, 8
      %v529 = vpop.permute.xlu0 %528
      %530 = vrot.lane.b32.xlu0 %v459, 8
      %v531 = vpop.permute.xlu0 %530
      %532 = vrot.lane.b32.xlu0 %v461, 8
      %v533 = vpop.permute.xlu0 %532
      %534 = vrot.lane.b32.xlu0 %v463, 8
      %v535 = vpop.permute.xlu0 %534
      %536 = vrot.lane.b32.xlu0 %v465, 8
      %v537 = vpop.permute.xlu0 %536
      %538 = vrot.lane.b32.xlu0 %v467, 8
      %v539 = vpop.permute.xlu0 %538
      %540 = vrot.lane.b32.xlu0 %v469, 8
      %v541 = vpop.permute.xlu0 %540
      %542 = vrot.lane.b32.xlu0 %v471, 8
      %v543 = vpop.permute.xlu0 %542
      %544 = vrot.lane.b32.xlu0 %v473, 8
      %v545 = vpop.permute.xlu0 %544
      %546 = vrot.lane.b32.xlu0 %v475, 8
      %v547 = vpop.permute.xlu0 %546
      %548 = vrot.lane.b32.xlu0 %v477, 8
      %v549 = vpop.permute.xlu0 %548
      %v588 = vrot.slane %v181, 2
      %v589 = vsel %vm404, %v476, %v588
      %v590 = vrot.slane %v182, 2
      %v591 = vsel %vm404, %v588, %v590
      %592 = vrot.lane.b32.xlu0 %v411, 12
      %v593 = vpop.permute.xlu0 %592
      %594 = vrot.lane.b32.xlu0 %v413, 12
      %v595 = vpop.permute.xlu0 %594
      %596 = vrot.lane.b32.xlu0 %v415, 12
      %v597 = vpop.permute.xlu0 %596
      %598 = vrot.lane.b32.xlu0 %v417, 12
      %v599 = vpop.permute.xlu0 %598
      %600 = vrot.lane.b32.xlu0 %v419, 12
      %v601 = vpop.permute.xlu0 %600
      %602 = vrot.lane.b32.xlu0 %v421, 12
      %v603 = vpop.permute.xlu0 %602
      %604 = vrot.lane.b32.xlu0 %v423, 12
      %v605 = vpop.permute.xlu0 %604
      %606 = vrot.lane.b32.xlu0 %v425, 12
      %v607 = vpop.permute.xlu0 %606
      %608 = vrot.lane.b32.xlu0 %v427, 12
      %v609 = vpop.permute.xlu0 %608
      %610 = vrot.lane.b32.xlu0 %v429, 12
      %v611 = vpop.permute.xlu0 %610
      %612 = vrot.lane.b32.xlu0 %v431, 12
      %v613 = vpop.permute.xlu0 %612
      %614 = vrot.lane.b32.xlu0 %v433, 12
      %v615 = vpop.permute.xlu0 %614
      %616 = vrot.lane.b32.xlu0 %v435, 12
      %v617 = vpop.permute.xlu0 %616
      %618 = vrot.lane.b32.xlu0 %v437, 12
      %v619 = vpop.permute.xlu0 %618
      %620 = vrot.lane.b32.xlu0 %v439, 12
      %v621 = vpop.permute.xlu0 %620
      %622 = vrot.lane.b32.xlu0 %v441, 12
      %v623 = vpop.permute.xlu0 %622
      %624 = vrot.lane.b32.xlu0 %v443, 12
      %v625 = vpop.permute.xlu0 %624
      %626 = vrot.lane.b32.xlu0 %v445, 12
      %v627 = vpop.permute.xlu0 %626
      %628 = vrot.lane.b32.xlu0 %v447, 12
      %v629 = vpop.permute.xlu0 %628
      %630 = vrot.lane.b32.xlu0 %v449, 12
      %v631 = vpop.permute.xlu0 %630
      %632 = vrot.lane.b32.xlu0 %v451, 12
      %v633 = vpop.permute.xlu0 %632
      %634 = vrot.lane.b32.xlu0 %v453, 12
      %v635 = vpop.permute.xlu0 %634
      %636 = vrot.lane.b32.xlu0 %v455, 12
      %v637 = vpop.permute.xlu0 %636
      %638 = vrot.lane.b32.xlu0 %v457, 12
      %v639 = vpop.permute.xlu0 %638
      %640 = vrot.lane.b32.xlu0 %v459, 12
      %v641 = vpop.permute.xlu0 %640
      %642 = vrot.lane.b32.xlu0 %v461, 12
      %v643 = vpop.permute.xlu0 %642
      %644 = vrot.lane.b32.xlu0 %v463, 12
      %v645 = vpop.permute.xlu0 %644
      %646 = vrot.lane.b32.xlu0 %v465, 12
      %v647 = vpop.permute.xlu0 %646
      %648 = vrot.lane.b32.xlu0 %v467, 12
      %v649 = vpop.permute.xlu0 %648
      %650 = vrot.lane.b32.xlu0 %v469, 12
      %v651 = vpop.permute.xlu0 %650
      %652 = vrot.lane.b32.xlu0 %v471, 12
      %v653 = vpop.permute.xlu0 %652
      %654 = vrot.lane.b32.xlu0 %v473, 12
      %v655 = vpop.permute.xlu0 %654
      %656 = vrot.lane.b32.xlu0 %v475, 12
      %v657 = vpop.permute.xlu0 %656
      %658 = vrot.lane.b32.xlu0 %v477, 12
      %v659 = vpop.permute.xlu0 %658
      %660 = vrot.lane.b32.xlu0 %v589, 12
      %v661 = vpop.permute.xlu0 %660
      %662 = vrot.lane.b32.xlu0 %v591, 12
      %v663 = vpop.permute.xlu0 %662
      %vm700 = vcmask 1044480
      %v701 = vrot.slane %v146, 3
      %v702 = vrot.slane %v147, 3
      %v703 = vsel %vm700, %v701, %v702
      %v704 = vrot.slane %v148, 3
      %v705 = vsel %vm700, %v702, %v704
      %v706 = vrot.slane %v149, 3
      %v707 = vsel %vm700, %v704, %v706
      %v708 = vrot.slane %v150, 3
      %v709 = vsel %vm700, %v706, %v708
      %v710 = vrot.slane %v151, 3
      %v711 = vsel %vm700, %v708, %v710
      %v712 = vrot.slane %v152, 3
      %v713 = vsel %vm700, %v710, %v712
      %v714 = vrot.slane %v153, 3
      %v715 = vsel %vm700, %v712, %v714
      %v716 = vrot.slane %v154, 3
      %v717 = vsel %vm700, %v714, %v716
      %v718 = vrot.slane %v155, 3
      %v719 = vsel %vm700, %v716, %v718
      %v720 = vrot.slane %v156, 3
      %v721 = vsel %vm700, %v718, %v720
      %v722 = vrot.slane %v157, 3
      %v723 = vsel %vm700, %v720, %v722
      %v724 = vrot.slane %v158, 3
      %v725 = vsel %vm700, %v722, %v724
      %v726 = vrot.slane %v159, 3
      %v727 = vsel %vm700, %v724, %v726
      %v728 = vrot.slane %v160, 3
      %v729 = vsel %vm700, %v726, %v728
      %v730 = vrot.slane %v161, 3
      %v731 = vsel %vm700, %v728, %v730
      %v732 = vrot.slane %v162, 3
      %v733 = vsel %vm700, %v730, %v732
      %v734 = vrot.slane %v163, 3
      %v735 = vsel %vm700, %v732, %v734
      %v736 = vrot.slane %v164, 3
      %v737 = vsel %vm700, %v734, %v736
      %v738 = vrot.slane %v165, 3
      %v739 = vsel %vm700, %v736, %v738
      %v740 = vrot.slane %v166, 3
      %v741 = vsel %vm700, %v738, %v740
      %v742 = vrot.slane %v167, 3
      %v743 = vsel %vm700, %v740, %v742
      %v744 = vrot.slane %v168, 3
      %v745 = vsel %vm700, %v742, %v744
      %v746 = vrot.slane %v169, 3
      %v747 = vsel %vm700, %v744, %v746
      %v748 = vrot.slane %v170, 3
      %v749 = vsel %vm700, %v746, %v748
      %v750 = vrot.slane %v171, 3
      %v751 = vsel %vm700, %v748, %v750
      %v752 = vrot.slane %v172, 3
      %v753 = vsel %vm700, %v750, %v752
      %v754 = vrot.slane %v173, 3
      %v755 = vsel %vm700, %v752, %v754
      %v756 = vrot.slane %v174, 3
      %v757 = vsel %vm700, %v754, %v756
      %v758 = vrot.slane %v175, 3
      %v759 = vsel %vm700, %v756, %v758
      %v760 = vrot.slane %v176, 3
      %v761 = vsel %vm700, %v758, %v760
      %v762 = vrot.slane %v177, 3
      %v763 = vsel %vm700, %v760, %v762
      %v764 = vrot.slane %v178, 3
      %v765 = vsel %vm700, %v762, %v764
      %v766 = vrot.slane %v179, 3
      %v767 = vsel %vm700, %v764, %v766
      %v768 = vrot.slane %v180, 3
      %v769 = vsel %vm700, %v766, %v768
      %v770 = vrot.slane %v181, 3
      %v771 = vsel %vm700, %v768, %v770
      %v772 = vrot.slane %v182, 3
      %v773 = vsel %vm700, %v770, %v772
      %774 = vrot.lane.b32.xlu0 %v703, 16
      %v775 = vpop.permute.xlu0 %774
      %776 = vrot.lane.b32.xlu0 %v705, 16
      %v777 = vpop.permute.xlu0 %776
      %778 = vrot.lane.b32.xlu0 %v707, 16
      %v779 = vpop.permute.xlu0 %778
      %780 = vrot.lane.b32.xlu0 %v709, 16
      %v781 = vpop.permute.xlu0 %780
      %782 = vrot.lane.b32.xlu0 %v711, 16
      %v783 = vpop.permute.xlu0 %782
      %784 = vrot.lane.b32.xlu0 %v713, 16
      %v785 = vpop.permute.xlu0 %784
      %786 = vrot.lane.b32.xlu0 %v715, 16
      %v787 = vpop.permute.xlu0 %786
      %788 = vrot.lane.b32.xlu0 %v717, 16
      %v789 = vpop.permute.xlu0 %788
      %790 = vrot.lane.b32.xlu0 %v719, 16
      %v791 = vpop.permute.xlu0 %790
      %792 = vrot.lane.b32.xlu0 %v721, 16
      %v793 = vpop.permute.xlu0 %792
      %794 = vrot.lane.b32.xlu0 %v723, 16
      %v795 = vpop.permute.xlu0 %794
      %796 = vrot.lane.b32.xlu0 %v725, 16
      %v797 = vpop.permute.xlu0 %796
      %798 = vrot.lane.b32.xlu0 %v727, 16
      %v799 = vpop.permute.xlu0 %798
      %800 = vrot.lane.b32.xlu0 %v729, 16
      %v801 = vpop.permute.xlu0 %800
      %802 = vrot.lane.b32.xlu0 %v731, 16
      %v803 = vpop.permute.xlu0 %802
      %804 = vrot.lane.b32.xlu0 %v733, 16
      %v805 = vpop.permute.xlu0 %804
      %806 = vrot.lane.b32.xlu0 %v735, 16
      %v807 = vpop.permute.xlu0 %806
      %808 = vrot.lane.b32.xlu0 %v737, 16
      %v809 = vpop.permute.xlu0 %808
      %810 = vrot.lane.b32.xlu0 %v739, 16
      %v811 = vpop.permute.xlu0 %810
      %812 = vrot.lane.b32.xlu0 %v741, 16
      %v813 = vpop.permute.xlu0 %812
      %814 = vrot.lane.b32.xlu0 %v743, 16
      %v815 = vpop.permute.xlu0 %814
      %816 = vrot.lane.b32.xlu0 %v745, 16
      %v817 = vpop.permute.xlu0 %816
      %818 = vrot.lane.b32.xlu0 %v747, 16
      %v819 = vpop.permute.xlu0 %818
      %820 = vrot.lane.b32.xlu0 %v749, 16
      %v821 = vpop.permute.xlu0 %820
      %822 = vrot.lane.b32.xlu0 %v751, 16
      %v823 = vpop.permute.xlu0 %822
      %824 = vrot.lane.b32.xlu0 %v753, 16
      %v825 = vpop.permute.xlu0 %824
      %826 = vrot.lane.b32.xlu0 %v755, 16
      %v827 = vpop.permute.xlu0 %826
      %828 = vrot.lane.b32.xlu0 %v757, 16
      %v829 = vpop.permute.xlu0 %828
      %830 = vrot.lane.b32.xlu0 %v759, 16
      %v831 = vpop.permute.xlu0 %830
      %832 = vrot.lane.b32.xlu0 %v761, 16
      %v833 = vpop.permute.xlu0 %832
      %834 = vrot.lane.b32.xlu0 %v763, 16
      %v835 = vpop.permute.xlu0 %834
      %836 = vrot.lane.b32.xlu0 %v765, 16
      %v837 = vpop.permute.xlu0 %836
      %838 = vrot.lane.b32.xlu0 %v767, 16
      %v839 = vpop.permute.xlu0 %838
      %840 = vrot.lane.b32.xlu0 %v769, 16
      %v841 = vpop.permute.xlu0 %840
      %842 = vrot.lane.b32.xlu0 %v771, 16
      %v843 = vpop.permute.xlu0 %842
      %844 = vrot.lane.b32.xlu0 %v773, 16
      %v845 = vpop.permute.xlu0 %844
      %vm882 = vcmask 1043456
      %v883 = vrot.slane %v146, 4
      %v884 = vrot.slane %v147, 4
      %v885 = vsel %vm882, %v883, %v884
      %v886 = vrot.slane %v148, 4
      %v887 = vsel %vm882, %v884, %v886
      %v888 = vrot.slane %v149, 4
      %v889 = vsel %vm882, %v886, %v888
      %v890 = vrot.slane %v150, 4
      %v891 = vsel %vm882, %v888, %v890
      %v892 = vrot.slane %v151, 4
      %v893 = vsel %vm882, %v890, %v892
      %v894 = vrot.slane %v152, 4
      %v895 = vsel %vm882, %v892, %v894
      %v896 = vrot.slane %v153, 4
      %v897 = vsel %vm882, %v894, %v896
      %v898 = vrot.slane %v154, 4
      %v899 = vsel %vm882, %v896, %v898
      %v900 = vrot.slane %v155, 4
      %v901 = vsel %vm882, %v898, %v900
      %v902 = vrot.slane %v156, 4
      %v903 = vsel %vm882, %v900, %v902
      %v904 = vrot.slane %v157, 4
      %v905 = vsel %vm882, %v902, %v904
      %v906 = vrot.slane %v158, 4
      %v907 = vsel %vm882, %v904, %v906
      %v908 = vrot.slane %v159, 4
      %v909 = vsel %vm882, %v906, %v908
      %v910 = vrot.slane %v160, 4
      %v911 = vsel %vm882, %v908, %v910
      %v912 = vrot.slane %v161, 4
      %v913 = vsel %vm882, %v910, %v912
      %v914 = vrot.slane %v162, 4
      %v915 = vsel %vm882, %v912, %v914
      %v916 = vrot.slane %v163, 4
      %v917 = vsel %vm882, %v914, %v916
      %v918 = vrot.slane %v164, 4
      %v919 = vsel %vm882, %v916, %v918
      %v920 = vrot.slane %v165, 4
      %v921 = vsel %vm882, %v918, %v920
      %v922 = vrot.slane %v166, 4
      %v923 = vsel %vm882, %v920, %v922
      %v924 = vrot.slane %v167, 4
      %v925 = vsel %vm882, %v922, %v924
      %v926 = vrot.slane %v168, 4
      %v927 = vsel %vm882, %v924, %v926
      %v928 = vrot.slane %v169, 4
      %v929 = vsel %vm882, %v926, %v928
      %v930 = vrot.slane %v170, 4
      %v931 = vsel %vm882, %v928, %v930
      %v932 = vrot.slane %v171, 4
      %v933 = vsel %vm882, %v930, %v932
      %v934 = vrot.slane %v172, 4
      %v935 = vsel %vm882, %v932, %v934
      %v936 = vrot.slane %v173, 4
      %v937 = vsel %vm882, %v934, %v936
      %v938 = vrot.slane %v174, 4
      %v939 = vsel %vm882, %v936, %v938
      %v940 = vrot.slane %v175, 4
      %v941 = vsel %vm882, %v938, %v940
      %v942 = vrot.slane %v176, 4
      %v943 = vsel %vm882, %v940, %v942
      %v944 = vrot.slane %v177, 4
      %v945 = vsel %vm882, %v942, %v944
      %v946 = vrot.slane %v178, 4
      %v947 = vsel %vm882, %v944, %v946
      %v948 = vrot.slane %v179, 4
      %v949 = vsel %vm882, %v946, %v948
      %v950 = vrot.slane %v180, 4
      %v951 = vsel %vm882, %v948, %v950
      %v952 = vrot.slane %v181, 4
      %v953 = vsel %vm882, %v950, %v952
      %v954 = vrot.slane %v182, 4
      %v955 = vsel %vm882, %v952, %v954
      %956 = vrot.lane.b32.xlu0 %v885, 20
      %v957 = vpop.permute.xlu0 %956
      %958 = vrot.lane.b32.xlu0 %v887, 20
      %v959 = vpop.permute.xlu0 %958
      %960 = vrot.lane.b32.xlu0 %v889, 20
      %v961 = vpop.permute.xlu0 %960
      %962 = vrot.lane.b32.xlu0 %v891, 20
      %v963 = vpop.permute.xlu0 %962
      %964 = vrot.lane.b32.xlu0 %v893, 20
      %v965 = vpop.permute.xlu0 %964
      %966 = vrot.lane.b32.xlu0 %v895, 20
      %v967 = vpop.permute.xlu0 %966
      %968 = vrot.lane.b32.xlu0 %v897, 20
      %v969 = vpop.permute.xlu0 %968
      %970 = vrot.lane.b32.xlu0 %v899, 20
      %v971 = vpop.permute.xlu0 %970
      %972 = vrot.lane.b32.xlu0 %v901, 20
      %v973 = vpop.permute.xlu0 %972
      %974 = vrot.lane.b32.xlu0 %v903, 20
      %v975 = vpop.permute.xlu0 %974
      %976 = vrot.lane.b32.xlu0 %v905, 20
      %v977 = vpop.permute.xlu0 %976
      %978 = vrot.lane.b32.xlu0 %v907, 20
      %v979 = vpop.permute.xlu0 %978
      %980 = vrot.lane.b32.xlu0 %v909, 20
      %v981 = vpop.permute.xlu0 %980
      %982 = vrot.lane.b32.xlu0 %v911, 20
      %v983 = vpop.permute.xlu0 %982
      %984 = vrot.lane.b32.xlu0 %v913, 20
      %v985 = vpop.permute.xlu0 %984
      %986 = vrot.lane.b32.xlu0 %v915, 20
      %v987 = vpop.permute.xlu0 %986
      %988 = vrot.lane.b32.xlu0 %v917, 20
      %v989 = vpop.permute.xlu0 %988
      %990 = vrot.lane.b32.xlu0 %v919, 20
      %v991 = vpop.permute.xlu0 %990
      %992 = vrot.lane.b32.xlu0 %v921, 20
      %v993 = vpop.permute.xlu0 %992
      %994 = vrot.lane.b32.xlu0 %v923, 20
      %v995 = vpop.permute.xlu0 %994
      %996 = vrot.lane.b32.xlu0 %v925, 20
      %v997 = vpop.permute.xlu0 %996
      %998 = vrot.lane.b32.xlu0 %v927, 20
      %v999 = vpop.permute.xlu0 %998
      %1000 = vrot.lane.b32.xlu0 %v929, 20
      %v1001 = vpop.permute.xlu0 %1000
      %1002 = vrot.lane.b32.xlu0 %v931, 20
      %v1003 = vpop.permute.xlu0 %1002
      %1004 = vrot.lane.b32.xlu0 %v933, 20
      %v1005 = vpop.permute.xlu0 %1004
      %1006 = vrot.lane.b32.xlu0 %v935, 20
      %v1007 = vpop.permute.xlu0 %1006
      %1008 = vrot.lane.b32.xlu0 %v937, 20
      %v1009 = vpop.permute.xlu0 %1008
      %1010 = vrot.lane.b32.xlu0 %v939, 20
      %v1011 = vpop.permute.xlu0 %1010
      %1012 = vrot.lane.b32.xlu0 %v941, 20
      %v1013 = vpop.permute.xlu0 %1012
      %1014 = vrot.lane.b32.xlu0 %v943, 20
      %v1015 = vpop.permute.xlu0 %1014
      %1016 = vrot.lane.b32.xlu0 %v945, 20
      %v1017 = vpop.permute.xlu0 %1016
      %1018 = vrot.lane.b32.xlu0 %v947, 20
      %v1019 = vpop.permute.xlu0 %1018
      %1020 = vrot.lane.b32.xlu0 %v949, 20
      %v1021 = vpop.permute.xlu0 %1020
      %1022 = vrot.lane.b32.xlu0 %v951, 20
      %v1023 = vpop.permute.xlu0 %1022
      %1024 = vrot.lane.b32.xlu0 %v953, 20
      %v1025 = vpop.permute.xlu0 %1024
      %1026 = vrot.lane.b32.xlu0 %v955, 20
      %v1027 = vpop.permute.xlu0 %1026
      %v1066 = vrot.slane %v183, 4
      %v1067 = vsel %vm882, %v954, %v1066
      %v1068 = vrot.slane %v184, 4
      %v1069 = vsel %vm882, %v1066, %v1068
      %1070 = vrot.lane.b32.xlu0 %v889, 24
      %v1071 = vpop.permute.xlu0 %1070
      %1072 = vrot.lane.b32.xlu0 %v891, 24
      %v1073 = vpop.permute.xlu0 %1072
      %1074 = vrot.lane.b32.xlu0 %v893, 24
      %v1075 = vpop.permute.xlu0 %1074
      %1076 = vrot.lane.b32.xlu0 %v895, 24
      %v1077 = vpop.permute.xlu0 %1076
      %1078 = vrot.lane.b32.xlu0 %v897, 24
      %v1079 = vpop.permute.xlu0 %1078
      %1080 = vrot.lane.b32.xlu0 %v899, 24
      %v1081 = vpop.permute.xlu0 %1080
      %1082 = vrot.lane.b32.xlu0 %v901, 24
      %v1083 = vpop.permute.xlu0 %1082
      %1084 = vrot.lane.b32.xlu0 %v903, 24
      %v1085 = vpop.permute.xlu0 %1084
      %1086 = vrot.lane.b32.xlu0 %v905, 24
      %v1087 = vpop.permute.xlu0 %1086
      %1088 = vrot.lane.b32.xlu0 %v907, 24
      %v1089 = vpop.permute.xlu0 %1088
      %1090 = vrot.lane.b32.xlu0 %v909, 24
      %v1091 = vpop.permute.xlu0 %1090
      %1092 = vrot.lane.b32.xlu0 %v911, 24
      %v1093 = vpop.permute.xlu0 %1092
      %1094 = vrot.lane.b32.xlu0 %v913, 24
      %v1095 = vpop.permute.xlu0 %1094
      %1096 = vrot.lane.b32.xlu0 %v915, 24
      %v1097 = vpop.permute.xlu0 %1096
      %1098 = vrot.lane.b32.xlu0 %v917, 24
      %v1099 = vpop.permute.xlu0 %1098
      %1100 = vrot.lane.b32.xlu0 %v919, 24
      %v1101 = vpop.permute.xlu0 %1100
      %1102 = vrot.lane.b32.xlu0 %v921, 24
      %v1103 = vpop.permute.xlu0 %1102
      %1104 = vrot.lane.b32.xlu0 %v923, 24
      %v1105 = vpop.permute.xlu0 %1104
      %1106 = vrot.lane.b32.xlu0 %v925, 24
      %v1107 = vpop.permute.xlu0 %1106
      %1108 = vrot.lane.b32.xlu0 %v927, 24
      %v1109 = vpop.permute.xlu0 %1108
      %1110 = vrot.lane.b32.xlu0 %v929, 24
      %v1111 = vpop.permute.xlu0 %1110
      %1112 = vrot.lane.b32.xlu0 %v931, 24
      %v1113 = vpop.permute.xlu0 %1112
      %1114 = vrot.lane.b32.xlu0 %v933, 24
      %v1115 = vpop.permute.xlu0 %1114
      %1116 = vrot.lane.b32.xlu0 %v935, 24
      %v1117 = vpop.permute.xlu0 %1116
      %1118 = vrot.lane.b32.xlu0 %v937, 24
      %v1119 = vpop.permute.xlu0 %1118
      %1120 = vrot.lane.b32.xlu0 %v939, 24
      %v1121 = vpop.permute.xlu0 %1120
      %1122 = vrot.lane.b32.xlu0 %v941, 24
      %v1123 = vpop.permute.xlu0 %1122
      %1124 = vrot.lane.b32.xlu0 %v943, 24
      %v1125 = vpop.permute.xlu0 %1124
      %1126 = vrot.lane.b32.xlu0 %v945, 24
      %v1127 = vpop.permute.xlu0 %1126
      %1128 = vrot.lane.b32.xlu0 %v947, 24
      %v1129 = vpop.permute.xlu0 %1128
      %1130 = vrot.lane.b32.xlu0 %v949, 24
      %v1131 = vpop.permute.xlu0 %1130
      %1132 = vrot.lane.b32.xlu0 %v951, 24
      %v1133 = vpop.permute.xlu0 %1132
      %1134 = vrot.lane.b32.xlu0 %v953, 24
      %v1135 = vpop.permute.xlu0 %1134
      %1136 = vrot.lane.b32.xlu0 %v955, 24
      %v1137 = vpop.permute.xlu0 %1136
      %1138 = vrot.lane.b32.xlu0 %v1067, 24
      %v1139 = vpop.permute.xlu0 %1138
      %1140 = vrot.lane.b32.xlu0 %v1069, 24
      %v1141 = vpop.permute.xlu0 %1140
      %vm1178 = vcmask 1042432
      %v1179 = vrot.slane %v148, 5
      %v1180 = vrot.slane %v149, 5
      %v1181 = vsel %vm1178, %v1179, %v1180
      %v1182 = vrot.slane %v150, 5
      %v1183 = vsel %vm1178, %v1180, %v1182
      %v1184 = vrot.slane %v151, 5
      %v1185 = vsel %vm1178, %v1182, %v1184
      %v1186 = vrot.slane %v152, 5
      %v1187 = vsel %vm1178, %v1184, %v1186
      %v1188 = vrot.slane %v153, 5
      %v1189 = vsel %vm1178, %v1186, %v1188
      %v1190 = vrot.slane %v154, 5
      %v1191 = vsel %vm1178, %v1188, %v1190
      %v1192 = vrot.slane %v155, 5
      %v1193 = vsel %vm1178, %v1190, %v1192
      %v1194 = vrot.slane %v156, 5
      %v1195 = vsel %vm1178, %v1192, %v1194
      %v1196 = vrot.slane %v157, 5
      %v1197 = vsel %vm1178, %v1194, %v1196
      %v1198 = vrot.slane %v158, 5
      %v1199 = vsel %vm1178, %v1196, %v1198
      %v1200 = vrot.slane %v159, 5
      %v1201 = vsel %vm1178, %v1198, %v1200
      %v1202 = vrot.slane %v160, 5
      %v1203 = vsel %vm1178, %v1200, %v1202
      %v1204 = vrot.slane %v161, 5
      %v1205 = vsel %vm1178, %v1202, %v1204
      %v1206 = vrot.slane %v162, 5
      %v1207 = vsel %vm1178, %v1204, %v1206
      %v1208 = vrot.slane %v163, 5
      %v1209 = vsel %vm1178, %v1206, %v1208
      %v1210 = vrot.slane %v164, 5
      %v1211 = vsel %vm1178, %v1208, %v1210
      %v1212 = vrot.slane %v165, 5
      %v1213 = vsel %vm1178, %v1210, %v1212
      %v1214 = vrot.slane %v166, 5
      %v1215 = vsel %vm1178, %v1212, %v1214
      %v1216 = vrot.slane %v167, 5
      %v1217 = vsel %vm1178, %v1214, %v1216
      %v1218 = vrot.slane %v168, 5
      %v1219 = vsel %vm1178, %v1216, %v1218
      %v1220 = vrot.slane %v169, 5
      %v1221 = vsel %vm1178, %v1218, %v1220
      %v1222 = vrot.slane %v170, 5
      %v1223 = vsel %vm1178, %v1220, %v1222
      %v1224 = vrot.slane %v171, 5
      %v1225 = vsel %vm1178, %v1222, %v1224
      %v1226 = vrot.slane %v172, 5
      %v1227 = vsel %vm1178, %v1224, %v1226
      %v1228 = vrot.slane %v173, 5
      %v1229 = vsel %vm1178, %v1226, %v1228
      %v1230 = vrot.slane %v174, 5
      %v1231 = vsel %vm1178, %v1228, %v1230
      %v1232 = vrot.slane %v175, 5
      %v1233 = vsel %vm1178, %v1230, %v1232
      %v1234 = vrot.slane %v176, 5
      %v1235 = vsel %vm1178, %v1232, %v1234
      %v1236 = vrot.slane %v177, 5
      %v1237 = vsel %vm1178, %v1234, %v1236
      %v1238 = vrot.slane %v178, 5
      %v1239 = vsel %vm1178, %v1236, %v1238
      %v1240 = vrot.slane %v179, 5
      %v1241 = vsel %vm1178, %v1238, %v1240
      %v1242 = vrot.slane %v180, 5
      %v1243 = vsel %vm1178, %v1240, %v1242
      %v1244 = vrot.slane %v181, 5
      %v1245 = vsel %vm1178, %v1242, %v1244
      %v1246 = vrot.slane %v182, 5
      %v1247 = vsel %vm1178, %v1244, %v1246
      %v1248 = vrot.slane %v183, 5
      %v1249 = vsel %vm1178, %v1246, %v1248
      %v1250 = vrot.slane %v184, 5
      %v1251 = vsel %vm1178, %v1248, %v1250
      %1252 = vrot.lane.b32.xlu0 %v1181, 28
      %v1253 = vpop.permute.xlu0 %1252
      %1254 = vrot.lane.b32.xlu0 %v1183, 28
      %v1255 = vpop.permute.xlu0 %1254
      %1256 = vrot.lane.b32.xlu0 %v1185, 28
      %v1257 = vpop.permute.xlu0 %1256
      %1258 = vrot.lane.b32.xlu0 %v1187, 28
      %v1259 = vpop.permute.xlu0 %1258
      %1260 = vrot.lane.b32.xlu0 %v1189, 28
      %v1261 = vpop.permute.xlu0 %1260
      %1262 = vrot.lane.b32.xlu0 %v1191, 28
      %v1263 = vpop.permute.xlu0 %1262
      %1264 = vrot.lane.b32.xlu0 %v1193, 28
      %v1265 = vpop.permute.xlu0 %1264
      %1266 = vrot.lane.b32.xlu0 %v1195, 28
      %v1267 = vpop.permute.xlu0 %1266
      %1268 = vrot.lane.b32.xlu0 %v1197, 28
      %v1269 = vpop.permute.xlu0 %1268
      %1270 = vrot.lane.b32.xlu0 %v1199, 28
      %v1271 = vpop.permute.xlu0 %1270
      %1272 = vrot.lane.b32.xlu0 %v1201, 28
      %v1273 = vpop.permute.xlu0 %1272
      %1274 = vrot.lane.b32.xlu0 %v1203, 28
      %v1275 = vpop.permute.xlu0 %1274
      %1276 = vrot.lane.b32.xlu0 %v1205, 28
      %v1277 = vpop.permute.xlu0 %1276
      %1278 = vrot.lane.b32.xlu0 %v1207, 28
      %v1279 = vpop.permute.xlu0 %1278
      %1280 = vrot.lane.b32.xlu0 %v1209, 28
      %v1281 = vpop.permute.xlu0 %1280
      %1282 = vrot.lane.b32.xlu0 %v1211, 28
      %v1283 = vpop.permute.xlu0 %1282
      %1284 = vrot.lane.b32.xlu0 %v1213, 28
      %v1285 = vpop.permute.xlu0 %1284
      %1286 = vrot.lane.b32.xlu0 %v1215, 28
      %v1287 = vpop.permute.xlu0 %1286
      %1288 = vrot.lane.b32.xlu0 %v1217, 28
      %v1289 = vpop.permute.xlu0 %1288
      %1290 = vrot.lane.b32.xlu0 %v1219, 28
      %v1291 = vpop.permute.xlu0 %1290
      %1292 = vrot.lane.b32.xlu0 %v1221, 28
      %v1293 = vpop.permute.xlu0 %1292
      %1294 = vrot.lane.b32.xlu0 %v1223, 28
      %v1295 = vpop.permute.xlu0 %1294
      %1296 = vrot.lane.b32.xlu0 %v1225, 28
      %v1297 = vpop.permute.xlu0 %1296
      %1298 = vrot.lane.b32.xlu0 %v1227, 28
      %v1299 = vpop.permute.xlu0 %1298
      %1300 = vrot.lane.b32.xlu0 %v1229, 28
      %v1301 = vpop.permute.xlu0 %1300
      %1302 = vrot.lane.b32.xlu0 %v1231, 28
      %v1303 = vpop.permute.xlu0 %1302
      %1304 = vrot.lane.b32.xlu0 %v1233, 28
      %v1305 = vpop.permute.xlu0 %1304
      %1306 = vrot.lane.b32.xlu0 %v1235, 28
      %v1307 = vpop.permute.xlu0 %1306
      %1308 = vrot.lane.b32.xlu0 %v1237, 28
      %v1309 = vpop.permute.xlu0 %1308
      %1310 = vrot.lane.b32.xlu0 %v1239, 28
      %v1311 = vpop.permute.xlu0 %1310
      %1312 = vrot.lane.b32.xlu0 %v1241, 28
      %v1313 = vpop.permute.xlu0 %1312
      %1314 = vrot.lane.b32.xlu0 %v1243, 28
      %v1315 = vpop.permute.xlu0 %1314
      %1316 = vrot.lane.b32.xlu0 %v1245, 28
      %v1317 = vpop.permute.xlu0 %1316
      %1318 = vrot.lane.b32.xlu0 %v1247, 28
      %v1319 = vpop.permute.xlu0 %1318
      %1320 = vrot.lane.b32.xlu0 %v1249, 28
      %v1321 = vpop.permute.xlu0 %1320
      %1322 = vrot.lane.b32.xlu0 %v1251, 28
      %v1323 = vpop.permute.xlu0 %1322
      %vm1360 = vcmask 1041408
      %v1361 = vrot.slane %v148, 6
      %v1362 = vrot.slane %v149, 6
      %v1363 = vsel %vm1360, %v1361, %v1362
      %v1364 = vrot.slane %v150, 6
      %v1365 = vsel %vm1360, %v1362, %v1364
      %v1366 = vrot.slane %v151, 6
      %v1367 = vsel %vm1360, %v1364, %v1366
      %v1368 = vrot.slane %v152, 6
      %v1369 = vsel %vm1360, %v1366, %v1368
      %v1370 = vrot.slane %v153, 6
      %v1371 = vsel %vm1360, %v1368, %v1370
      %v1372 = vrot.slane %v154, 6
      %v1373 = vsel %vm1360, %v1370, %v1372
      %v1374 = vrot.slane %v155, 6
      %v1375 = vsel %vm1360, %v1372, %v1374
      %v1376 = vrot.slane %v156, 6
      %v1377 = vsel %vm1360, %v1374, %v1376
      %v1378 = vrot.slane %v157, 6
      %v1379 = vsel %vm1360, %v1376, %v1378
      %v1380 = vrot.slane %v158, 6
      %v1381 = vsel %vm1360, %v1378, %v1380
      %v1382 = vrot.slane %v159, 6
      %v1383 = vsel %vm1360, %v1380, %v1382
      %v1384 = vrot.slane %v160, 6
      %v1385 = vsel %vm1360, %v1382, %v1384
      %v1386 = vrot.slane %v161, 6
      %v1387 = vsel %vm1360, %v1384, %v1386
      %v1388 = vrot.slane %v162, 6
      %v1389 = vsel %vm1360, %v1386, %v1388
      %v1390 = vrot.slane %v163, 6
      %v1391 = vsel %vm1360, %v1388, %v1390
      %v1392 = vrot.slane %v164, 6
      %v1393 = vsel %vm1360, %v1390, %v1392
      %v1394 = vrot.slane %v165, 6
      %v1395 = vsel %vm1360, %v1392, %v1394
      %v1396 = vrot.slane %v166, 6
      %v1397 = vsel %vm1360, %v1394, %v1396
      %v1398 = vrot.slane %v167, 6
      %v1399 = vsel %vm1360, %v1396, %v1398
      %v1400 = vrot.slane %v168, 6
      %v1401 = vsel %vm1360, %v1398, %v1400
      %v1402 = vrot.slane %v169, 6
      %v1403 = vsel %vm1360, %v1400, %v1402
      %v1404 = vrot.slane %v170, 6
      %v1405 = vsel %vm1360, %v1402, %v1404
      %v1406 = vrot.slane %v171, 6
      %v1407 = vsel %vm1360, %v1404, %v1406
      %v1408 = vrot.slane %v172, 6
      %v1409 = vsel %vm1360, %v1406, %v1408
      %v1410 = vrot.slane %v173, 6
      %v1411 = vsel %vm1360, %v1408, %v1410
      %v1412 = vrot.slane %v174, 6
      %v1413 = vsel %vm1360, %v1410, %v1412
      %v1414 = vrot.slane %v175, 6
      %v1415 = vsel %vm1360, %v1412, %v1414
      %v1416 = vrot.slane %v176, 6
      %v1417 = vsel %vm1360, %v1414, %v1416
      %v1418 = vrot.slane %v177, 6
      %v1419 = vsel %vm1360, %v1416, %v1418
      %v1420 = vrot.slane %v178, 6
      %v1421 = vsel %vm1360, %v1418, %v1420
      %v1422 = vrot.slane %v179, 6
      %v1423 = vsel %vm1360, %v1420, %v1422
      %v1424 = vrot.slane %v180, 6
      %v1425 = vsel %vm1360, %v1422, %v1424
      %v1426 = vrot.slane %v181, 6
      %v1427 = vsel %vm1360, %v1424, %v1426
      %v1428 = vrot.slane %v182, 6
      %v1429 = vsel %vm1360, %v1426, %v1428
      %v1430 = vrot.slane %v183, 6
      %v1431 = vsel %vm1360, %v1428, %v1430
      %v1432 = vrot.slane %v184, 6
      %v1433 = vsel %vm1360, %v1430, %v1432
      %1434 = vrot.lane.b32.xlu0 %v1363, 32
      %v1435 = vpop.permute.xlu0 %1434
      %1436 = vrot.lane.b32.xlu0 %v1365, 32
      %v1437 = vpop.permute.xlu0 %1436
      %1438 = vrot.lane.b32.xlu0 %v1367, 32
      %v1439 = vpop.permute.xlu0 %1438
      %1440 = vrot.lane.b32.xlu0 %v1369, 32
      %v1441 = vpop.permute.xlu0 %1440
      %1442 = vrot.lane.b32.xlu0 %v1371, 32
      %v1443 = vpop.permute.xlu0 %1442
      %1444 = vrot.lane.b32.xlu0 %v1373, 32
      %v1445 = vpop.permute.xlu0 %1444
      %1446 = vrot.lane.b32.xlu0 %v1375, 32
      %v1447 = vpop.permute.xlu0 %1446
      %1448 = vrot.lane.b32.xlu0 %v1377, 32
      %v1449 = vpop.permute.xlu0 %1448
      %1450 = vrot.lane.b32.xlu0 %v1379, 32
      %v1451 = vpop.permute.xlu0 %1450
      %1452 = vrot.lane.b32.xlu0 %v1381, 32
      %v1453 = vpop.permute.xlu0 %1452
      %1454 = vrot.lane.b32.xlu0 %v1383, 32
      %v1455 = vpop.permute.xlu0 %1454
      %1456 = vrot.lane.b32.xlu0 %v1385, 32
      %v1457 = vpop.permute.xlu0 %1456
      %1458 = vrot.lane.b32.xlu0 %v1387, 32
      %v1459 = vpop.permute.xlu0 %1458
      %1460 = vrot.lane.b32.xlu0 %v1389, 32
      %v1461 = vpop.permute.xlu0 %1460
      %1462 = vrot.lane.b32.xlu0 %v1391, 32
      %v1463 = vpop.permute.xlu0 %1462
      %1464 = vrot.lane.b32.xlu0 %v1393, 32
      %v1465 = vpop.permute.xlu0 %1464
      %1466 = vrot.lane.b32.xlu0 %v1395, 32
      %v1467 = vpop.permute.xlu0 %1466
      %1468 = vrot.lane.b32.xlu0 %v1397, 32
      %v1469 = vpop.permute.xlu0 %1468
      %1470 = vrot.lane.b32.xlu0 %v1399, 32
      %v1471 = vpop.permute.xlu0 %1470
      %1472 = vrot.lane.b32.xlu0 %v1401, 32
      %v1473 = vpop.permute.xlu0 %1472
      %1474 = vrot.lane.b32.xlu0 %v1403, 32
      %v1475 = vpop.permute.xlu0 %1474
      %1476 = vrot.lane.b32.xlu0 %v1405, 32
      %v1477 = vpop.permute.xlu0 %1476
      %1478 = vrot.lane.b32.xlu0 %v1407, 32
      %v1479 = vpop.permute.xlu0 %1478
      %1480 = vrot.lane.b32.xlu0 %v1409, 32
      %v1481 = vpop.permute.xlu0 %1480
      %1482 = vrot.lane.b32.xlu0 %v1411, 32
      %v1483 = vpop.permute.xlu0 %1482
      %1484 = vrot.lane.b32.xlu0 %v1413, 32
      %v1485 = vpop.permute.xlu0 %1484
      %1486 = vrot.lane.b32.xlu0 %v1415, 32
      %v1487 = vpop.permute.xlu0 %1486
      %1488 = vrot.lane.b32.xlu0 %v1417, 32
      %v1489 = vpop.permute.xlu0 %1488
      %1490 = vrot.lane.b32.xlu0 %v1419, 32
      %v1491 = vpop.permute.xlu0 %1490
      %1492 = vrot.lane.b32.xlu0 %v1421, 32
      %v1493 = vpop.permute.xlu0 %1492
      %1494 = vrot.lane.b32.xlu0 %v1423, 32
      %v1495 = vpop.permute.xlu0 %1494
      %1496 = vrot.lane.b32.xlu0 %v1425, 32
      %v1497 = vpop.permute.xlu0 %1496
      %1498 = vrot.lane.b32.xlu0 %v1427, 32
      %v1499 = vpop.permute.xlu0 %1498
      %1500 = vrot.lane.b32.xlu0 %v1429, 32
      %v1501 = vpop.permute.xlu0 %1500
      %1502 = vrot.lane.b32.xlu0 %v1431, 32
      %v1503 = vpop.permute.xlu0 %1502
      %1504 = vrot.lane.b32.xlu0 %v1433, 32
      %v1505 = vpop.permute.xlu0 %1504
      %vm1542 = vcmask 31744
      %v1543 = vsel %vm1542, %v144, %v297
      %v1544 = vsel %vm1542, %v145, %v299
      %v1545 = vsel %vm1542, %v146, %v301
      %v1546 = vsel %vm1542, %v147, %v303
      %v1547 = vsel %vm1542, %v148, %v305
      %v1548 = vsel %vm1542, %v149, %v307
      %v1549 = vsel %vm1542, %v150, %v309
      %v1550 = vsel %vm1542, %v151, %v311
      %v1551 = vsel %vm1542, %v152, %v313
      %v1552 = vsel %vm1542, %v153, %v315
      %v1553 = vsel %vm1542, %v154, %v317
      %v1554 = vsel %vm1542, %v155, %v319
      %v1555 = vsel %vm1542, %v156, %v321
      %v1556 = vsel %vm1542, %v157, %v323
      %v1557 = vsel %vm1542, %v158, %v325
      %v1558 = vsel %vm1542, %v159, %v327
      %v1559 = vsel %vm1542, %v160, %v329
      %v1560 = vsel %vm1542, %v161, %v331
      %v1561 = vsel %vm1542, %v162, %v333
      %v1562 = vsel %vm1542, %v163, %v335
      %v1563 = vsel %vm1542, %v164, %v337
      %v1564 = vsel %vm1542, %v165, %v339
      %v1565 = vsel %vm1542, %v166, %v341
      %v1566 = vsel %vm1542, %v167, %v343
      %v1567 = vsel %vm1542, %v168, %v345
      %v1568 = vsel %vm1542, %v169, %v347
      %v1569 = vsel %vm1542, %v170, %v349
      %v1570 = vsel %vm1542, %v171, %v351
      %v1571 = vsel %vm1542, %v172, %v353
      %v1572 = vsel %vm1542, %v173, %v355
      %v1573 = vsel %vm1542, %v174, %v357
      %v1574 = vsel %vm1542, %v175, %v359
      %v1575 = vsel %vm1542, %v176, %v361
      %v1576 = vsel %vm1542, %v177, %v363
      %v1577 = vsel %vm1542, %v178, %v365
      %v1578 = vsel %vm1542, %v179, %v367
      %vm1579 = vcmask 64512
      %v1580 = vsel %vm1579, %v1543, %v479
      %v1581 = vsel %vm1579, %v1544, %v481
      %v1582 = vsel %vm1579, %v1545, %v483
      %v1583 = vsel %vm1579, %v1546, %v485
      %v1584 = vsel %vm1579, %v1547, %v487
      %v1585 = vsel %vm1579, %v1548, %v489
      %v1586 = vsel %vm1579, %v1549, %v491
      %v1587 = vsel %vm1579, %v1550, %v493
      %v1588 = vsel %vm1579, %v1551, %v495
      %v1589 = vsel %vm1579, %v1552, %v497
      %v1590 = vsel %vm1579, %v1553, %v499
      %v1591 = vsel %vm1579, %v1554, %v501
      %v1592 = vsel %vm1579, %v1555, %v503
      %v1593 = vsel %vm1579, %v1556, %v505
      %v1594 = vsel %vm1579, %v1557, %v507
      %v1595 = vsel %vm1579, %v1558, %v509
      %v1596 = vsel %vm1579, %v1559, %v511
      %v1597 = vsel %vm1579, %v1560, %v513
      %v1598 = vsel %vm1579, %v1561, %v515
      %v1599 = vsel %vm1579, %v1562, %v517
      %v1600 = vsel %vm1579, %v1563, %v519
      %v1601 = vsel %vm1579, %v1564, %v521
      %v1602 = vsel %vm1579, %v1565, %v523
      %v1603 = vsel %vm1579, %v1566, %v525
      %v1604 = vsel %vm1579, %v1567, %v527
      %v1605 = vsel %vm1579, %v1568, %v529
      %v1606 = vsel %vm1579, %v1569, %v531
      %v1607 = vsel %vm1579, %v1570, %v533
      %v1608 = vsel %vm1579, %v1571, %v535
      %v1609 = vsel %vm1579, %v1572, %v537
      %v1610 = vsel %vm1579, %v1573, %v539
      %v1611 = vsel %vm1579, %v1574, %v541
      %v1612 = vsel %vm1579, %v1575, %v543
      %v1613 = vsel %vm1579, %v1576, %v545
      %v1614 = vsel %vm1579, %v1577, %v547
      %v1615 = vsel %vm1579, %v1578, %v549
      %vm1616 = vcmask 97280
      %v1617 = vsel %vm1616, %v1580, %v593
      %v1618 = vsel %vm1616, %v1581, %v595
      %v1619 = vsel %vm1616, %v1582, %v597
      %v1620 = vsel %vm1616, %v1583, %v599
      %v1621 = vsel %vm1616, %v1584, %v601
      %v1622 = vsel %vm1616, %v1585, %v603
      %v1623 = vsel %vm1616, %v1586, %v605
      %v1624 = vsel %vm1616, %v1587, %v607
      %v1625 = vsel %vm1616, %v1588, %v609
      %v1626 = vsel %vm1616, %v1589, %v611
      %v1627 = vsel %vm1616, %v1590, %v613
      %v1628 = vsel %vm1616, %v1591, %v615
      %v1629 = vsel %vm1616, %v1592, %v617
      %v1630 = vsel %vm1616, %v1593, %v619
      %v1631 = vsel %vm1616, %v1594, %v621
      %v1632 = vsel %vm1616, %v1595, %v623
      %v1633 = vsel %vm1616, %v1596, %v625
      %v1634 = vsel %vm1616, %v1597, %v627
      %v1635 = vsel %vm1616, %v1598, %v629
      %v1636 = vsel %vm1616, %v1599, %v631
      %v1637 = vsel %vm1616, %v1600, %v633
      %v1638 = vsel %vm1616, %v1601, %v635
      %v1639 = vsel %vm1616, %v1602, %v637
      %v1640 = vsel %vm1616, %v1603, %v639
      %v1641 = vsel %vm1616, %v1604, %v641
      %v1642 = vsel %vm1616, %v1605, %v643
      %v1643 = vsel %vm1616, %v1606, %v645
      %v1644 = vsel %vm1616, %v1607, %v647
      %v1645 = vsel %vm1616, %v1608, %v649
      %v1646 = vsel %vm1616, %v1609, %v651
      %v1647 = vsel %vm1616, %v1610, %v653
      %v1648 = vsel %vm1616, %v1611, %v655
      %v1649 = vsel %vm1616, %v1612, %v657
      %v1650 = vsel %vm1616, %v1613, %v659
      %v1651 = vsel %vm1616, %v1614, %v661
      %v1652 = vsel %vm1616, %v1615, %v663
      %vm1653 = vcmask 130048
      %v1654 = vsel %vm1653, %v1617, %v775
      %v1655 = vsel %vm1653, %v1618, %v777
      %v1656 = vsel %vm1653, %v1619, %v779
      %v1657 = vsel %vm1653, %v1620, %v781
      %v1658 = vsel %vm1653, %v1621, %v783
      %v1659 = vsel %vm1653, %v1622, %v785
      %v1660 = vsel %vm1653, %v1623, %v787
      %v1661 = vsel %vm1653, %v1624, %v789
      %v1662 = vsel %vm1653, %v1625, %v791
      %v1663 = vsel %vm1653, %v1626, %v793
      %v1664 = vsel %vm1653, %v1627, %v795
      %v1665 = vsel %vm1653, %v1628, %v797
      %v1666 = vsel %vm1653, %v1629, %v799
      %v1667 = vsel %vm1653, %v1630, %v801
      %v1668 = vsel %vm1653, %v1631, %v803
      %v1669 = vsel %vm1653, %v1632, %v805
      %v1670 = vsel %vm1653, %v1633, %v807
      %v1671 = vsel %vm1653, %v1634, %v809
      %v1672 = vsel %vm1653, %v1635, %v811
      %v1673 = vsel %vm1653, %v1636, %v813
      %v1674 = vsel %vm1653, %v1637, %v815
      %v1675 = vsel %vm1653, %v1638, %v817
      %v1676 = vsel %vm1653, %v1639, %v819
      %v1677 = vsel %vm1653, %v1640, %v821
      %v1678 = vsel %vm1653, %v1641, %v823
      %v1679 = vsel %vm1653, %v1642, %v825
      %v1680 = vsel %vm1653, %v1643, %v827
      %v1681 = vsel %vm1653, %v1644, %v829
      %v1682 = vsel %vm1653, %v1645, %v831
      %v1683 = vsel %vm1653, %v1646, %v833
      %v1684 = vsel %vm1653, %v1647, %v835
      %v1685 = vsel %vm1653, %v1648, %v837
      %v1686 = vsel %vm1653, %v1649, %v839
      %v1687 = vsel %vm1653, %v1650, %v841
      %v1688 = vsel %vm1653, %v1651, %v843
      %v1689 = vsel %vm1653, %v1652, %v845
      %vm1690 = vcmask 162816
      %v1691 = vsel %vm1690, %v1654, %v957
      %v1692 = vsel %vm1690, %v1655, %v959
      %v1693 = vsel %vm1690, %v1656, %v961
      %v1694 = vsel %vm1690, %v1657, %v963
      %v1695 = vsel %vm1690, %v1658, %v965
      %v1696 = vsel %vm1690, %v1659, %v967
      %v1697 = vsel %vm1690, %v1660, %v969
      %v1698 = vsel %vm1690, %v1661, %v971
      %v1699 = vsel %vm1690, %v1662, %v973
      %v1700 = vsel %vm1690, %v1663, %v975
      %v1701 = vsel %vm1690, %v1664, %v977
      %v1702 = vsel %vm1690, %v1665, %v979
      %v1703 = vsel %vm1690, %v1666, %v981
      %v1704 = vsel %vm1690, %v1667, %v983
      %v1705 = vsel %vm1690, %v1668, %v985
      %v1706 = vsel %vm1690, %v1669, %v987
      %v1707 = vsel %vm1690, %v1670, %v989
      %v1708 = vsel %vm1690, %v1671, %v991
      %v1709 = vsel %vm1690, %v1672, %v993
      %v1710 = vsel %vm1690, %v1673, %v995
      %v1711 = vsel %vm1690, %v1674, %v997
      %v1712 = vsel %vm1690, %v1675, %v999
      %v1713 = vsel %vm1690, %v1676, %v1001
      %v1714 = vsel %vm1690, %v1677, %v1003
      %v1715 = vsel %vm1690, %v1678, %v1005
      %v1716 = vsel %vm1690, %v1679, %v1007
      %v1717 = vsel %vm1690, %v1680, %v1009
      %v1718 = vsel %vm1690, %v1681, %v1011
      %v1719 = vsel %vm1690, %v1682, %v1013
      %v1720 = vsel %vm1690, %v1683, %v1015
      %v1721 = vsel %vm1690, %v1684, %v1017
      %v1722 = vsel %vm1690, %v1685, %v1019
      %v1723 = vsel %vm1690, %v1686, %v1021
      %v1724 = vsel %vm1690, %v1687, %v1023
      %v1725 = vsel %vm1690, %v1688, %v1025
      %v1726 = vsel %vm1690, %v1689, %v1027
      %vm1727 = vcmask 195584
      %v1728 = vsel %vm1727, %v1691, %v1071
      %v1729 = vsel %vm1727, %v1692, %v1073
      %v1730 = vsel %vm1727, %v1693, %v1075
      %v1731 = vsel %vm1727, %v1694, %v1077
      %v1732 = vsel %vm1727, %v1695, %v1079
      %v1733 = vsel %vm1727, %v1696, %v1081
      %v1734 = vsel %vm1727, %v1697, %v1083
      %v1735 = vsel %vm1727, %v1698, %v1085
      %v1736 = vsel %vm1727, %v1699, %v1087
      %v1737 = vsel %vm1727, %v1700, %v1089
      %v1738 = vsel %vm1727, %v1701, %v1091
      %v1739 = vsel %vm1727, %v1702, %v1093
      %v1740 = vsel %vm1727, %v1703, %v1095
      %v1741 = vsel %vm1727, %v1704, %v1097
      %v1742 = vsel %vm1727, %v1705, %v1099
      %v1743 = vsel %vm1727, %v1706, %v1101
      %v1744 = vsel %vm1727, %v1707, %v1103
      %v1745 = vsel %vm1727, %v1708, %v1105
      %v1746 = vsel %vm1727, %v1709, %v1107
      %v1747 = vsel %vm1727, %v1710, %v1109
      %v1748 = vsel %vm1727, %v1711, %v1111
      %v1749 = vsel %vm1727, %v1712, %v1113
      %v1750 = vsel %vm1727, %v1713, %v1115
      %v1751 = vsel %vm1727, %v1714, %v1117
      %v1752 = vsel %vm1727, %v1715, %v1119
      %v1753 = vsel %vm1727, %v1716, %v1121
      %v1754 = vsel %vm1727, %v1717, %v1123
      %v1755 = vsel %vm1727, %v1718, %v1125
      %v1756 = vsel %vm1727, %v1719, %v1127
      %v1757 = vsel %vm1727, %v1720, %v1129
      %v1758 = vsel %vm1727, %v1721, %v1131
      %v1759 = vsel %vm1727, %v1722, %v1133
      %v1760 = vsel %vm1727, %v1723, %v1135
      %v1761 = vsel %vm1727, %v1724, %v1137
      %v1762 = vsel %vm1727, %v1725, %v1139
      %v1763 = vsel %vm1727, %v1726, %v1141
      %vm1764 = vcmask 228352
      %v1765 = vsel %vm1764, %v1728, %v1253
      %v1766 = vsel %vm1764, %v1729, %v1255
      %v1767 = vsel %vm1764, %v1730, %v1257
      %v1768 = vsel %vm1764, %v1731, %v1259
      %v1769 = vsel %vm1764, %v1732, %v1261
      %v1770 = vsel %vm1764, %v1733, %v1263
      %v1771 = vsel %vm1764, %v1734, %v1265
      %v1772 = vsel %vm1764, %v1735, %v1267
      %v1773 = vsel %vm1764, %v1736, %v1269
      %v1774 = vsel %vm1764, %v1737, %v1271
      %v1775 = vsel %vm1764, %v1738, %v1273
      %v1776 = vsel %vm1764, %v1739, %v1275
      %v1777 = vsel %vm1764, %v1740, %v1277
      %v1778 = vsel %vm1764, %v1741, %v1279
      %v1779 = vsel %vm1764, %v1742, %v1281
      %v1780 = vsel %vm1764, %v1743, %v1283
      %v1781 = vsel %vm1764, %v1744, %v1285
      %v1782 = vsel %vm1764, %v1745, %v1287
      %v1783 = vsel %vm1764, %v1746, %v1289
      %v1784 = vsel %vm1764, %v1747, %v1291
      %v1785 = vsel %vm1764, %v1748, %v1293
      %v1786 = vsel %vm1764, %v1749, %v1295
      %v1787 = vsel %vm1764, %v1750, %v1297
      %v1788 = vsel %vm1764, %v1751, %v1299
      %v1789 = vsel %vm1764, %v1752, %v1301
      %v1790 = vsel %vm1764, %v1753, %v1303
      %v1791 = vsel %vm1764, %v1754, %v1305
      %v1792 = vsel %vm1764, %v1755, %v1307
      %v1793 = vsel %vm1764, %v1756, %v1309
      %v1794 = vsel %vm1764, %v1757, %v1311
      %v1795 = vsel %vm1764, %v1758, %v1313
      %v1796 = vsel %vm1764, %v1759, %v1315
      %v1797 = vsel %vm1764, %v1760, %v1317
      %v1798 = vsel %vm1764, %v1761, %v1319
      %v1799 = vsel %vm1764, %v1762, %v1321
      %v1800 = vsel %vm1764, %v1763, %v1323
      %vm1801 = vcmask 261120
      %v1802 = vsel %vm1801, %v1765, %v1435
      %v1803 = vsel %vm1801, %v1766, %v1437
      %v1804 = vsel %vm1801, %v1767, %v1439
      %v1805 = vsel %vm1801, %v1768, %v1441
      %v1806 = vsel %vm1801, %v1769, %v1443
      %v1807 = vsel %vm1801, %v1770, %v1445
      %v1808 = vsel %vm1801, %v1771, %v1447
      %v1809 = vsel %vm1801, %v1772, %v1449
      %v1810 = vsel %vm1801, %v1773, %v1451
      %v1811 = vsel %vm1801, %v1774, %v1453
      %v1812 = vsel %vm1801, %v1775, %v1455
      %v1813 = vsel %vm1801, %v1776, %v1457
      %v1814 = vsel %vm1801, %v1777, %v1459
      %v1815 = vsel %vm1801, %v1778, %v1461
      %v1816 = vsel %vm1801, %v1779, %v1463
      %v1817 = vsel %vm1801, %v1780, %v1465
      %v1818 = vsel %vm1801, %v1781, %v1467
      %v1819 = vsel %vm1801, %v1782, %v1469
      %v1820 = vsel %vm1801, %v1783, %v1471
      %v1821 = vsel %vm1801, %v1784, %v1473
      %v1822 = vsel %vm1801, %v1785, %v1475
      %v1823 = vsel %vm1801, %v1786, %v1477
      %v1824 = vsel %vm1801, %v1787, %v1479
      %v1825 = vsel %vm1801, %v1788, %v1481
      %v1826 = vsel %vm1801, %v1789, %v1483
      %v1827 = vsel %vm1801, %v1790, %v1485
      %v1828 = vsel %vm1801, %v1791, %v1487
      %v1829 = vsel %vm1801, %v1792, %v1489
      %v1830 = vsel %vm1801, %v1793, %v1491
      %v1831 = vsel %vm1801, %v1794, %v1493
      %v1832 = vsel %vm1801, %v1795, %v1495
      %v1833 = vsel %vm1801, %v1796, %v1497
      %v1834 = vsel %vm1801, %v1797, %v1499
      %v1835 = vsel %vm1801, %v1798, %v1501
      %v1836 = vsel %vm1801, %v1799, %v1503
      %v1837 = vsel %vm1801, %v1800, %v1505
      %v1838 = vld [vmem:[%s1] sm:$0xff]
      %v1839 = vld [vmem:[%s1 + $0x8] sm:$0xff]
      %v1840 = vld [vmem:[%s1 + $0x10] sm:$0xff]
      %v1841 = vld [vmem:[%s1 + $0x18] sm:$0xff]
      %v1842 = vld [vmem:[%s1 + $0x20] sm:$0xf]
      %vm1843 = vcmask 293888
      %v1845 = vsel %vm1843, %v1802, 0
      %v1848 = vsel %vm1843, %v1803, 0
      %v1851 = vsel %vm1843, %v1804, 0
      %v1854 = vsel %vm1843, %v1805, 0
      %v1857 = vsel %vm1843, %v1806, 0
      %v1860 = vsel %vm1843, %v1807, 0
      %v1863 = vsel %vm1843, %v1808, 0
      %v1866 = vsel %vm1843, %v1809, 0
      %v1869 = vsel %vm1843, %v1810, 0
      %v1872 = vsel %vm1843, %v1811, 0
      %v1875 = vsel %vm1843, %v1812, 0
      %v1878 = vsel %vm1843, %v1813, 0
      %v1881 = vsel %vm1843, %v1814, 0
      %v1884 = vsel %vm1843, %v1815, 0
      %v1887 = vsel %vm1843, %v1816, 0
      %v1890 = vsel %vm1843, %v1817, 0
      %v1893 = vsel %vm1843, %v1818, 0
      %v1896 = vsel %vm1843, %v1819, 0
      %v1899 = vsel %vm1843, %v1820, 0
      %v1902 = vsel %vm1843, %v1821, 0
      %v1905 = vsel %vm1843, %v1822, 0
      %v1908 = vsel %vm1843, %v1823, 0
      %v1911 = vsel %vm1843, %v1824, 0
      %v1914 = vsel %vm1843, %v1825, 0
      %v1917 = vsel %vm1843, %v1826, 0
      %v1920 = vsel %vm1843, %v1827, 0
      %v1923 = vsel %vm1843, %v1828, 0
      %v1926 = vsel %vm1843, %v1829, 0
      %v1929 = vsel %vm1843, %v1830, 0
      %v1932 = vsel %vm1843, %v1831, 0
      %v1935 = vsel %vm1843, %v1832, 0
      %v1938 = vsel %vm1843, %v1833, 0
      %v1941 = vsel %vm1843, %v1834, 0
      %v1944 = vsel %vm1843, %v1835, 0
      %v1947 = vsel %vm1843, %v1836, 0
      %v1950 = vsel %vm1843, %v1837, 0
      %v1953 = vsel %vm882, %v1842, 0
      %1955 = vmatprep.subr.mxu0 0.0
      %1956 = vmatpush1.msra.mxu0 %v1838
      %1957 = vmatprep.subr.mxu0 0.0
      %1958 = vmatpush1.msra.mxu0 %v1839
      %1959 = vmatprep.subr.mxu0 0.0
      %1960 = vmatpush1.msra.mxu0 %v1840
      %1961 = vmatprep.subr.mxu0 0.0
      %1962 = vmatpush1.msra.mxu0 %v1841
      %1963 = vmatprep.subr.mxu0 0.0
      %1964 = vmatpush1.msra.mxu0 %v1953
      %1965 = vmatprep.subr.mxu0 0.0
      %1966 = vmatpush1.msra.mxu0 0.0
      %1967 = vmatprep.subr.mxu0 0.0
      %1968 = vmatpush1.msra.mxu0 0.0
      %1969 = vmatprep.subr.mxu0 0.0
      %1970 = vmatpush1.msra.mxu0 0.0
      %1971 = vmatprep.subr.mxu0 0.0
      %1972 = vmatpush1.msra.mxu0 0.0
      %1973 = vmatprep.subr.mxu0 0.0
      %1974 = vmatpush1.msra.mxu0 0.0
      %1975 = vmatprep.subr.mxu0 0.0
      %1976 = vmatpush1.msra.mxu0 0.0
      %1977 = vmatprep.subr.mxu0 0.0
      %1978 = vmatpush1.msra.mxu0 0.0
      %1979 = vmatprep.subr.mxu0 0.0
      %1980 = vmatpush1.msra.mxu0 0.0
      %1981 = vmatprep.subr.mxu0 0.0
      %1982 = vmatpush1.msra.mxu0 0.0
      %1983 = vmatprep.subr.mxu0 0.0
      %1984 = vmatpush1.msra.mxu0 0.0
      %1985 = vmatprep.subr.mxu0 0.0
      %1986 = vmatpush1.msra.mxu0 0.0
      %1987 = vmatprep.subr.mxu0 0.0
      %1988 = vmatpush1.msra.mxu0 0.0
      %1989 = vmatprep.subr.mxu0 0.0
      %1990 = vmatpush1.msra.mxu0 0.0
      %1991 = vmatprep.subr.mxu0 0.0
      %1992 = vmatpush1.msra.mxu0 0.0
      %1993 = vmatprep.subr.mxu0 0.0
      %1994 = vmatpush1.msra.mxu0 0.0
      %1995 = vmatprep.subr.mxu0 0.0
      %1996 = vmatpush1.msra.mxu0 0.0
      %1997 = vmatprep.subr.mxu0 0.0
      %1998 = vmatpush1.msra.mxu0 0.0
      %1999 = vmatprep.subr.mxu0 0.0
      %2000 = vmatpush1.msra.mxu0 0.0
      %2001 = vmatprep.subr.mxu0 0.0
      %2002 = vmatpush1.msra.mxu0 0.0
      %2003 = vmatprep.subr.mxu0 0.0
      %2004 = vmatpush1.msra.mxu0 0.0
      %2005 = vmatprep.subr.mxu0 0.0
      %2006 = vmatpush1.msra.mxu0 0.0
      %2007 = vmatprep.subr.mxu0 0.0
      %2008 = vmatpush1.msra.mxu0 0.0
      %2009 = vmatprep.subr.mxu0 0.0
      %2010 = vmatpush1.msra.mxu0 0.0
      %2011 = vmatprep.subr.mxu0 0.0
      %2012 = vmatpush1.msra.mxu0 0.0
      %2013 = vmatprep.subr.mxu0 0.0
      %2014 = vmatpush1.msra.mxu0 0.0
      %2015 = vmatprep.subr.mxu0 0.0
      %2016 = vmatpush1.msra.mxu0 0.0
      %2017 = vmatprep.subr.mxu0 0.0
      %2018 = vmatpush1.msra.mxu0 0.0
      %2019 = vmatprep.mubr.f32.mxu0 0.0
      %2020 = vmatmul.mubr.f32.gmra.mrb[0].mxu0 %v1845
      %v2021 = vpop.f32.mrb[0].mxu0
      %v2022 = vadd.f32 0.0, %v2021
      %v2023 = vpop.f32.mrb[0].mxu0
      %2024 = vmatprep.mubr.f32.mxu0 0.0
      %2025 = vmatmul.mubr.f32.gmra.mrb[0].mxu0 %v1848
      %v2026 = vpop.f32.mrb[0].mxu0
      %v2027 = vadd.f32 0.0, %v2026
      %v2028 = vpop.f32.mrb[0].mxu0
      %2029 = vmatprep.mubr.f32.mxu0 0.0
      %2030 = vmatmul.mubr.f32.gmra.mrb[0].mxu0 %v1851
      %v2031 = vpop.f32.mrb[0].mxu0
      %v2032 = vadd.f32 0.0, %v2031
      %v2033 = vpop.f32.mrb[0].mxu0
      %2034 = vmatprep.mubr.f32.mxu0 0.0
      %2035 = vmatmul.mubr.f32.gmra.mrb[0].mxu0 %v1854
      %v2036 = vpop.f32.mrb[0].mxu0
      %v2037 = vadd.f32 0.0, %v2036
      %v2038 = vpop.f32.mrb[0].mxu0
      %2039 = vmatprep.mubr.f32.mxu0 0.0
      %2040 = vmatmul.mubr.f32.gmra.mrb[0].mxu0 %v1857
      %v2041 = vpop.f32.mrb[0].mxu0
      %v2042 = vadd.f32 0.0, %v2041
      %v2043 = vpop.f32.mrb[0].mxu0
      %2044 = vmatprep.mubr.f32.mxu0 0.0
      %2045 = vmatmul.mubr.f32.gmra.mrb[0].mxu0 %v1860
      %v2046 = vpop.f32.mrb[0].mxu0
      %v2047 = vadd.f32 0.0, %v2046
      %v2048 = vpop.f32.mrb[0].mxu0
      %2049 = vmatprep.mubr.f32.mxu0 0.0
      %2050 = vmatmul.mubr.f32.gmra.mrb[0].mxu0 %v1863
      %v2051 = vpop.f32.mrb[0].mxu0
      %v2052 = vadd.f32 0.0, %v2051
      %v2053 = vpop.f32.mrb[0].mxu0
      %2054 = vmatprep.mubr.f32.mxu0 0.0
      %2055 = vmatmul.mubr.f32.gmra.mrb[0].mxu0 %v1866
      %v2056 = vpop.f32.mrb[0].mxu0
      %v2057 = vadd.f32 0.0, %v2056
      %v2058 = vpop.f32.mrb[0].mxu0
      %2059 = vmatprep.mubr.f32.mxu0 0.0
      %2060 = vmatmul.mubr.f32.gmra.mrb[0].mxu0 %v1869
      %v2061 = vpop.f32.mrb[0].mxu0
      %v2062 = vadd.f32 0.0, %v2061
      %v2063 = vpop.f32.mrb[0].mxu0
      %2064 = vmatprep.mubr.f32.mxu0 0.0
      %2065 = vmatmul.mubr.f32.gmra.mrb[0].mxu0 %v1872
      %v2066 = vpop.f32.mrb[0].mxu0
      %v2067 = vadd.f32 0.0, %v2066
      %v2068 = vpop.f32.mrb[0].mxu0
      %2069 = vmatprep.mubr.f32.mxu0 0.0
      %2070 = vmatmul.mubr.f32.gmra.mrb[0].mxu0 %v1875
      %v2071 = vpop.f32.mrb[0].mxu0
      %v2072 = vadd.f32 0.0, %v2071
      %v2073 = vpop.f32.mrb[0].mxu0
      %2074 = vmatprep.mubr.f32.mxu0 0.0
      %2075 = vmatmul.mubr.f32.gmra.mrb[0].mxu0 %v1878
      %v2076 = vpop.f32.mrb[0].mxu0
      %v2077 = vadd.f32 0.0, %v2076
      %v2078 = vpop.f32.mrb[0].mxu0
      %2079 = vmatprep.mubr.f32.mxu0 0.0
      %2080 = vmatmul.mubr.f32.gmra.mrb[0].mxu0 %v1881
      %v2081 = vpop.f32.mrb[0].mxu0
      %v2082 = vadd.f32 0.0, %v2081
      %v2083 = vpop.f32.mrb[0].mxu0
      %2084 = vmatprep.mubr.f32.mxu0 0.0
      %2085 = vmatmul.mubr.f32.gmra.mrb[0].mxu0 %v1884
      %v2086 = vpop.f32.mrb[0].mxu0
      %v2087 = vadd.f32 0.0, %v2086
      %v2088 = vpop.f32.mrb[0].mxu0
      %2089 = vmatprep.mubr.f32.mxu0 0.0
      %2090 = vmatmul.mubr.f32.gmra.mrb[0].mxu0 %v1887
      %v2091 = vpop.f32.mrb[0].mxu0
      %v2092 = vadd.f32 0.0, %v2091
      %v2093 = vpop.f32.mrb[0].mxu0
      %2094 = vmatprep.mubr.f32.mxu0 0.0
      %2095 = vmatmul.mubr.f32.gmra.mrb[0].mxu0 %v1890
      %v2096 = vpop.f32.mrb[0].mxu0
      %v2097 = vadd.f32 0.0, %v2096
      %v2098 = vpop.f32.mrb[0].mxu0
      %2099 = vmatprep.mubr.f32.mxu0 0.0
      %2100 = vmatmul.mubr.f32.gmra.mrb[0].mxu0 %v1893
      %v2101 = vpop.f32.mrb[0].mxu0
      %v2102 = vadd.f32 0.0, %v2101
      %v2103 = vpop.f32.mrb[0].mxu0
      %2104 = vmatprep.mubr.f32.mxu0 0.0
      %2105 = vmatmul.mubr.f32.gmra.mrb[0].mxu0 %v1896
      %v2106 = vpop.f32.mrb[0].mxu0
      %v2107 = vadd.f32 0.0, %v2106
      %v2108 = vpop.f32.mrb[0].mxu0
      %2109 = vmatprep.mubr.f32.mxu0 0.0
      %2110 = vmatmul.mubr.f32.gmra.mrb[0].mxu0 %v1899
      %v2111 = vpop.f32.mrb[0].mxu0
      %v2112 = vadd.f32 0.0, %v2111
      %v2113 = vpop.f32.mrb[0].mxu0
      %2114 = vmatprep.mubr.f32.mxu0 0.0
      %2115 = vmatmul.mubr.f32.gmra.mrb[0].mxu0 %v1902
      %v2116 = vpop.f32.mrb[0].mxu0
      %v2117 = vadd.f32 0.0, %v2116
      %v2118 = vpop.f32.mrb[0].mxu0
      %2119 = vmatprep.mubr.f32.mxu0 0.0
      %2120 = vmatmul.mubr.f32.gmra.mrb[0].mxu0 %v1905
      %v2121 = vpop.f32.mrb[0].mxu0
      %v2122 = vadd.f32 0.0, %v2121
      %v2123 = vpop.f32.mrb[0].mxu0
      %2124 = vmatprep.mubr.f32.mxu0 0.0
      %2125 = vmatmul.mubr.f32.gmra.mrb[0].mxu0 %v1908
      %v2126 = vpop.f32.mrb[0].mxu0
      %v2127 = vadd.f32 0.0, %v2126
      %v2128 = vpop.f32.mrb[0].mxu0
      %2129 = vmatprep.mubr.f32.mxu0 0.0
      %2130 = vmatmul.mubr.f32.gmra.mrb[0].mxu0 %v1911
      %v2131 = vpop.f32.mrb[0].mxu0
      %v2132 = vadd.f32 0.0, %v2131
      %v2133 = vpop.f32.mrb[0].mxu0
      %2134 = vmatprep.mubr.f32.mxu0 0.0
      %2135 = vmatmul.mubr.f32.gmra.mrb[0].mxu0 %v1914
      %v2136 = vpop.f32.mrb[0].mxu0
      %v2137 = vadd.f32 0.0, %v2136
      %v2138 = vpop.f32.mrb[0].mxu0
      %2139 = vmatprep.mubr.f32.mxu0 0.0
      %2140 = vmatmul.mubr.f32.gmra.mrb[0].mxu0 %v1917
      %v2141 = vpop.f32.mrb[0].mxu0
      %v2142 = vadd.f32 0.0, %v2141
      %v2143 = vpop.f32.mrb[0].mxu0
      %2144 = vmatprep.mubr.f32.mxu0 0.0
      %2145 = vmatmul.mubr.f32.gmra.mrb[0].mxu0 %v1920
      %v2146 = vpop.f32.mrb[0].mxu0
      %v2147 = vadd.f32 0.0, %v2146
      %v2148 = vpop.f32.mrb[0].mxu0
      %2149 = vmatprep.mubr.f32.mxu0 0.0
      %2150 = vmatmul.mubr.f32.gmra.mrb[0].mxu0 %v1923
      %v2151 = vpop.f32.mrb[0].mxu0
      %v2152 = vadd.f32 0.0, %v2151
      %v2153 = vpop.f32.mrb[0].mxu0
      %2154 = vmatprep.mubr.f32.mxu0 0.0
      %2155 = vmatmul.mubr.f32.gmra.mrb[0].mxu0 %v1926
      %v2156 = vpop.f32.mrb[0].mxu0
      %v2157 = vadd.f32 0.0, %v2156
      %v2158 = vpop.f32.mrb[0].mxu0
      %2159 = vmatprep.mubr.f32.mxu0 0.0
      %2160 = vmatmul.mubr.f32.gmra.mrb[0].mxu0 %v1929
      %v2161 = vpop.f32.mrb[0].mxu0
      %v2162 = vadd.f32 0.0, %v2161
      %v2163 = vpop.f32.mrb[0].mxu0
      %2164 = vmatprep.mubr.f32.mxu0 0.0
      %2165 = vmatmul.mubr.f32.gmra.mrb[0].mxu0 %v1932
      %v2166 = vpop.f32.mrb[0].mxu0
      %v2167 = vadd.f32 0.0, %v2166
      %v2168 = vpop.f32.mrb[0].mxu0
      %2169 = vmatprep.mubr.f32.mxu0 0.0
      %2170 = vmatmul.mubr.f32.gmra.mrb[0].mxu0 %v1935
      %v2171 = vpop.f32.mrb[0].mxu0
      %v2172 = vadd.f32 0.0, %v2171
      %v2173 = vpop.f32.mrb[0].mxu0
      %2174 = vmatprep.mubr.f32.mxu0 0.0
      %2175 = vmatmul.mubr.f32.gmra.mrb[0].mxu0 %v1938
      %v2176 = vpop.f32.mrb[0].mxu0
      %v2177 = vadd.f32 0.0, %v2176
      %v2178 = vpop.f32.mrb[0].mxu0
      %2179 = vmatprep.mubr.f32.mxu0 0.0
      %2180 = vmatmul.mubr.f32.gmra.mrb[0].mxu0 %v1941
      %v2181 = vpop.f32.mrb[0].mxu0
      %v2182 = vadd.f32 0.0, %v2181
      %v2183 = vpop.f32.mrb[0].mxu0
      %2184 = vmatprep.mubr.f32.mxu0 0.0
      %2185 = vmatmul.mubr.f32.gmra.mrb[0].mxu0 %v1944
      %v2186 = vpop.f32.mrb[0].mxu0
      %v2187 = vadd.f32 0.0, %v2186
      %v2188 = vpop.f32.mrb[0].mxu0
      %2189 = vmatprep.mubr.f32.mxu0 0.0
      %2190 = vmatmul.mubr.f32.gmra.mrb[0].mxu0 %v1947
      %v2191 = vpop.f32.mrb[0].mxu0
      %v2192 = vadd.f32 0.0, %v2191
      %v2193 = vpop.f32.mrb[0].mxu0
      %2194 = vmatprep.mubr.f32.mxu0 0.0
      %2195 = vmatmul.mubr.f32.gmra.mrb[0].mxu0 %v1950
      %v2196 = vpop.f32.mrb[0].mxu0
      %v2197 = vadd.f32 0.0, %v2196
      %v2198 = vpop.f32.mrb[0].mxu0
      %2199 = vdwg.mxu0
      %2200 = vst.msk [vmem:[%s143] sm:$0xff] %vm1579, %v2022
      %2201 = vst.msk [vmem:[%s143 + $0x8] sm:$0xff] %vm1579, %v2027
      %2202 = vst.msk [vmem:[%s143 + $0x10] sm:$0xff] %vm1579, %v2032
      %2203 = vst.msk [vmem:[%s143 + $0x18] sm:$0xff] %vm1579, %v2037
      %2204 = vst.msk [vmem:[%s143 + $0x20] sm:$0xff] %vm1579, %v2042
      %2205 = vst.msk [vmem:[%s143 + $0x28] sm:$0xff] %vm1579, %v2047
      %2206 = vst.msk [vmem:[%s143 + $0x30] sm:$0xff] %vm1579, %v2052
      %2207 = vst.msk [vmem:[%s143 + $0x38] sm:$0xff] %vm1579, %v2057
      %2208 = vst.msk [vmem:[%s143 + $0x40] sm:$0xff] %vm1579, %v2062
      %2209 = vst.msk [vmem:[%s143 + $0x48] sm:$0xff] %vm1579, %v2067
      %2210 = vst.msk [vmem:[%s143 + $0x50] sm:$0xff] %vm1579, %v2072
      %2211 = vst.msk [vmem:[%s143 + $0x58] sm:$0xff] %vm1579, %v2077
      %2212 = vst.msk [vmem:[%s143 + $0x60] sm:$0xff] %vm1579, %v2082
      %2213 = vst.msk [vmem:[%s143 + $0x68] sm:$0xff] %vm1579, %v2087
      %2214 = vst.msk [vmem:[%s143 + $0x70] sm:$0xff] %vm1579, %v2092
      %2215 = vst.msk [vmem:[%s143 + $0x78] sm:$0xff] %vm1579, %v2097
      %2216 = vst.msk [vmem:[%s143 + $0x80] sm:$0xff] %vm1579, %v2102
      %2217 = vst.msk [vmem:[%s143 + $0x88] sm:$0xff] %vm1579, %v2107
      %2218 = vst.msk [vmem:[%s143 + $0x90] sm:$0xff] %vm1579, %v2112
      %2219 = vst.msk [vmem:[%s143 + $0x98] sm:$0xff] %vm1579, %v2117
      %2220 = vst.msk [vmem:[%s143 + $0xa0] sm:$0xff] %vm1579, %v2122
      %2221 = vst.msk [vmem:[%s143 + $0xa8] sm:$0xff] %vm1579, %v2127
      %2222 = vst.msk [vmem:[%s143 + $0xb0] sm:$0xff] %vm1579, %v2132
      %2223 = vst.msk [vmem:[%s143 + $0xb8] sm:$0xff] %vm1579, %v2137
      %2224 = vst.msk [vmem:[%s143 + $0xc0] sm:$0xff] %vm1579, %v2142
      %2225 = vst.msk [vmem:[%s143 + $0xc8] sm:$0xff] %vm1579, %v2147
      %2226 = vst.msk [vmem:[%s143 + $0xd0] sm:$0xff] %vm1579, %v2152
      %2227 = vst.msk [vmem:[%s143 + $0xd8] sm:$0xff] %vm1579, %v2157
      %2228 = vst.msk [vmem:[%s143 + $0xe0] sm:$0xff] %vm1579, %v2162
      %2229 = vst.msk [vmem:[%s143 + $0xe8] sm:$0xff] %vm1579, %v2167
      %2230 = vst.msk [vmem:[%s143 + $0xf0] sm:$0xff] %vm1579, %v2172
      %2231 = vst.msk [vmem:[%s143 + $0xf8] sm:$0xff] %vm1579, %v2177
      %2232 = vst.msk [vmem:[%s143 + $0x100] sm:$0xff] %vm1579, %v2182
      %2233 = vst.msk [vmem:[%s143 + $0x108] sm:$0xff] %vm1579, %v2187
      %2234 = vst.msk [vmem:[%s143 + $0x110] sm:$0xff] %vm1579, %v2192
      %2235 = vst.msk [vmem:[%s143 + $0x118] sm:$0xff] %vm1579, %v2197
      %p2236 = scmp.lt.s32.totalorder %s13, 1
      %s2237 = scalar_select %p2236, %s13, 1
      %s2238 = smul.addr %s2237, 36
      %s2239 = smul.addr %s2238, 8
      %s2240 = scalar_lea.vmem %s2, %s2239
      // Predicated region
      $region29: #{tpu_custom_call.1} parent=27 // pred_check
        %p2241 = pneg %p78
      $region30: #{tpu_custom_call.1} parent=27 // pred_check_branch
        %2243 = sbr.rel (%p2241) target = $region32
      $region31: #{tpu_custom_call.1} parent=27 // pred_region
        _
      $region32: #{tpu_custom_call.1} parent=27 // pred_fallthru
        _
    $region28: #{tpu_custom_call.1} parent=5 // pred_fallthru
      _
    %p2244 = scmp.le.s32.totalorder 2, %s8
    // Predicated region
    $region33: #{tpu_custom_call.1} parent=5 // pred_check
      %p2245 = pneg %p2244
    $region34: #{tpu_custom_call.1} parent=5 // pred_check_branch
      %2247 = sbr.rel (%p2245) target = $region36
    $region35: #{tpu_custom_call.1} parent=5 // pred_region
      %s2248 = ssub.s32 %s8, 2
      // Predicated region
      $region37: #{tpu_custom_call.1} parent=35 // pred_check
        %p2249 = pneg %p84
      $region38: #{tpu_custom_call.1} parent=35 // pred_check_branch
        %2251 = sbr.rel (%p2249) target = $region40
      $region39: #{tpu_custom_call.1} parent=35 // pred_region
        %p2252 = scmp.lt.s32.totalorder %s14, 1
        %s2253 = scalar_select %p2252, %s14, 1
        %s2254 = smul.addr %s2253, 36
        %s2255 = smul.addr %s2254, 8
        %s2256 = scalar_lea.vmem %s2, %s2255
      $region40: #{tpu_custom_call.1} parent=35 // pred_fallthru
        _
    $region36: #{tpu_custom_call.1} parent=5 // pred_fallthru
      _
  $region6: #{tpu_custom_call.1} parent=0 // loop_footer
    %s12 = sadd.s32 1, %s8
  $region7: #{tpu_custom_call.1} parent=0 // loop_footer_branch
    %7 = sbr.rel target = $region3
  $region8: #{tpu_custom_call.1} parent=0 // loop_exit
    _

// kernel: tpu_custom_call.1
$region0: #{tpu_custom_call.1}
  #allocation0 [shape = 'u32[]', space=smem, size = 0x4, offset = 0x4, fixed_abs, tag = 'smem constant byte address 0x4 - core index']
  #allocation1 [shape = 'u32[144,128]{1,0:T(1,128)}', space=vmem, size = 0x12000, scoped, tag = 'internal scratch']
  %s0 = inlined_call_operand.vmem [shape: f32[2,342,4], index: 0, kind: input, shape index: {}]
  %s1 = inlined_call_operand.vmem [shape: f32[36,8], index: 1, kind: input, shape index: {}]
  %s2 = inlined_call_operand.vmem [shape: f32[2,288,8], index: 2, kind: output, shape index: {}]
  %s3 = sld [smem:[#allocation0]]
  $region41: #{tpu_custom_call.1} parent=0
    _
  %s5 = ssub.s32 1, %s3
  %s6 = scalar_select 0, %s5, %s3
  loop: start=0, step=1, limit=4
  $region2: #{tpu_custom_call.1} parent=0 // loop_pre_header
    _
  $region3: #{tpu_custom_call.1} parent=0 // loop_header
    %s8 = sphi 0, %s12
    %p9 = scmp.ge.s32.totalorder %s8, 4
    %s18 = sphi 0, %s20
    %s21 = sphi 0, %s18
    %s22 = sphi 0, %s21
    %s38 = sphi 0, %s22
    %s42 = sphi 0, %s42
    %s44 = sphi 0, %s42
    %s45 = sphi 0, %s44
    %s59 = sphi 0, %s45
    %s65 = sphi 0, %s67
    %s68 = sphi 0, %s65
    %s69 = sphi 0, %s68
    %s85 = sphi 0, %s69
  $region4: #{tpu_custom_call.1} parent=0 // loop_header_branch
    %11 = sbr.rel (%p9) target = $region8
  $region5: #{tpu_custom_call.1} parent=0 // loop_body
    %s13 = ssub.s32 %s8, 1
    %s14 = ssub.s32 %s8, 2
    %s15 = sadd.s32 %s8, 1
    %s16 = ssub.s32 %s8, %s15
    %p17 = scmp.eq.s32.totalorder %s16, 0
    %s19 = sadd.s32 %s18, 1
    %s20 = scalar_select %p17, %s18, %s19
    %p23 = pneg %p17
    %p24 = scmp.eq.s32.totalorder %s8, 1
    %p25 = por %p23, %p24
    %p26 = scmp.ne.s32.totalorder %s18, %s21
    %p27 = scmp.eq.s32.totalorder %s8, 0
    %p28 = por %p26, %p27
    %p29 = scmp.ne.s32.totalorder %s18, %s21
    %p30 = scmp.eq.s32.totalorder %s13, 1
    %p31 = por %p29, %p30
    %p32 = scmp.ne.s32.totalorder %s21, %s22
    %p33 = scmp.eq.s32.totalorder %s13, 0
    %p34 = por %p32, %p33
    %p35 = scmp.ne.s32.totalorder %s21, %s22
    %p36 = scmp.eq.s32.totalorder %s14, 1
    %p37 = por %p35, %p36
    %p39 = scmp.ne.s32.totalorder %s22, %s38
    %p40 = scmp.eq.s32.totalorder %s14, 0
    %p41 = por %p39, %p40
    %s43 = sadd.s32 %s42, 1
    %p46 = scmp.eq.s32.totalorder %s8, 1
    %p47 = scmp.ne.s32.totalorder %s42, %s44
    %p48 = scmp.eq.s32.totalorder %s8, 0
    %p49 = por %p47, %p48
    %p50 = scmp.ne.s32.totalorder %s42, %s44
    %p51 = scmp.eq.s32.totalorder %s13, 1
    %p52 = por %p50, %p51
    %p53 = scmp.ne.s32.totalorder %s44, %s45
    %p54 = scmp.eq.s32.totalorder %s13, 0
    %p55 = por %p53, %p54
    %p56 = scmp.ne.s32.totalorder %s44, %s45
    %p57 = scmp.eq.s32.totalorder %s14, 1
    %p58 = por %p56, %p57
    %p60 = scmp.ne.s32.totalorder %s45, %s59
    %p61 = scmp.eq.s32.totalorder %s14, 0
    %p62 = por %p60, %p61
    %s63 = ssub.s32 %s8, %s15
    %p64 = scmp.eq.s32.totalorder %s63, 0
    %s66 = sadd.s32 %s65, 1
    %s67 = scalar_select %p64, %s65, %s66
    %p70 = pneg %p64
    %p71 = scmp.eq.s32.totalorder %s8, 1
    %p72 = por %p70, %p71
    %p73 = scmp.ne.s32.totalorder %s65, %s68
    %p74 = scmp.eq.s32.totalorder %s8, 0
    %p75 = por %p73, %p74
    %p76 = scmp.ne.s32.totalorder %s65, %s68
    %p77 = scmp.eq.s32.totalorder %s13, 1
    %p78 = por %p76, %p77
    %p79 = scmp.ne.s32.totalorder %s68, %s69
    %p80 = scmp.eq.s32.totalorder %s13, 0
    %p81 = por %p79, %p80
    %p82 = scmp.ne.s32.totalorder %s68, %s69
    %p83 = scmp.eq.s32.totalorder %s14, 1
    %p84 = por %p82, %p83
    %p86 = scmp.ne.s32.totalorder %s69, %s85
    %p87 = scmp.eq.s32.totalorder %s14, 0
    %p88 = por %p86, %p87
    %p89 = scmp.le.s32.totalorder 1, %s8
    %p90 = scmp.lt.s32.totalorder %s8, 3
    %p91 = pnand %p89, %p90
    %p92 = pneg %p91
    // Predicated region
    $region9: #{tpu_custom_call.1} parent=5 // pred_check
      _
    $region10: #{tpu_custom_call.1} parent=5 // pred_check_branch
      %94 = sbr.rel (%p91) target = $region12
    $region11: #{tpu_custom_call.1} parent=5 // pred_region
      %s95 = ssub.s32 %s8, 1
      // Predicated region
      $region13: #{tpu_custom_call.1} parent=11 // pred_check
        %p96 = pneg %p55
      $region14: #{tpu_custom_call.1} parent=11 // pred_check_branch
        %98 = sbr.rel (%p96) target = $region16
      $region15: #{tpu_custom_call.1} parent=11 // pred_region
        _
      $region16: #{tpu_custom_call.1} parent=11 // pred_fallthru
        _
    $region12: #{tpu_custom_call.1} parent=5 // pred_fallthru
      _
    %p99 = scmp.lt.s32.totalorder %s8, 2
    // Predicated region
    $region17: #{tpu_custom_call.1} parent=5 // pred_check
      %p100 = pneg %p99
    $region18: #{tpu_custom_call.1} parent=5 // pred_check_branch
      %102 = sbr.rel (%p100) target = $region20
    $region19: #{tpu_custom_call.1} parent=5 // pred_region
      // Predicated region
      $region21: #{tpu_custom_call.1} parent=19 // pred_check
        %p103 = pneg %p28
      $region22: #{tpu_custom_call.1} parent=19 // pred_check_branch
        %105 = sbr.rel (%p103) target = $region24
      $region23: #{tpu_custom_call.1} parent=19 // pred_region
        %p106 = scmp.lt.s32.totalorder %s8, 1
        %s107 = scalar_select %p106, %s8, 1
        %s108 = smul.addr %s107, 43
        %s109 = smul.addr %s108, 8
        %s110 = scalar_lea.vmem %s0, %s109
      $region24: #{tpu_custom_call.1} parent=19 // pred_fallthru
        _
    $region20: #{tpu_custom_call.1} parent=5 // pred_fallthru
      _
    %p111 = scmp.le.s32.totalorder 1, %s8
    %p112 = scmp.lt.s32.totalorder %s8, 3
    %p113 = pnand %p111, %p112
    %p114 = pneg %p113
    // Predicated region
    $region25: #{tpu_custom_call.1} parent=5 // pred_check
      _
    $region26: #{tpu_custom_call.1} parent=5 // pred_check_branch
      %116 = sbr.rel (%p113) target = $region28
    $region27: #{tpu_custom_call.1} parent=5 // pred_region
      %s117 = ssub.s32 %s8, 1
      %p118 = scmp.lt.s32.totalorder %s13, 1
      %s119 = scalar_select %p118, %s13, 1
      %s120 = smul.addr %s119, 43
      %s121 = smul.addr %s120, 8
      %s122 = scalar_lea.vmem %s0, %s121
      %p123 = pneg %p34
      %p124 = pneg %p31
      %p125 = pneg %p55
      %p126 = pneg %p52
      %p127 = pneg %p81
      %p128 = pneg %p78
      %p129 = scmp.lt.s32.totalorder %s13, 1
      %s130 = scalar_select %p129, %s13, 1
      %s131 = smul.addr %s130, 36
      %s132 = smul.addr %s131, 8
      %s133 = scalar_lea.vmem %s2, %s132
      %p134 = scmp.lt.s32.totalorder %s13, 1
      %s135 = scalar_select %p134, %s13, 1
      %s136 = smul.addr %s135, 43
      %s137 = smul.addr %s136, 8
      %s138 = scalar_lea.vmem %s0, %s137
      %p139 = scmp.lt.s32.totalorder %s13, 1
      %s140 = scalar_select %p139, %s13, 1
      %s141 = smul.addr %s140, 36
      %s142 = smul.addr %s141, 8
      %s143 = scalar_lea.vmem %s2, %s142
      %v144 = vld [vmem:[%s138] sm:$0xff]
      %v145 = vld [vmem:[%s138 + $0x8] sm:$0xff]
      %v146 = vld [vmem:[%s138 + $0x10] sm:$0xff]
      %v147 = vld [vmem:[%s138 + $0x18] sm:$0xff]
      %v148 = vld [vmem:[%s138 + $0x20] sm:$0xff]
      %v149 = vld [vmem:[%s138 + $0x28] sm:$0xff]
      %v150 = vld [vmem:[%s138 + $0x30] sm:$0xff]
      %v151 = vld [vmem:[%s138 + $0x38] sm:$0xff]
      %v152 = vld [vmem:[%s138 + $0x40] sm:$0xff]
      %v153 = vld [vmem:[%s138 + $0x48] sm:$0xff]
      %v154 = vld [vmem:[%s138 + $0x50] sm:$0xff]
      %v155 = vld [vmem:[%s138 + $0x58] sm:$0xff]
      %v156 = vld [vmem:[%s138 + $0x60] sm:$0xff]
      %v157 = vld [vmem:[%s138 + $0x68] sm:$0xff]
      %v158 = vld [vmem:[%s138 + $0x70] sm:$0xff]
      %v159 = vld [vmem:[%s138 + $0x78] sm:$0xff]
      %v160 = vld [vmem:[%s138 + $0x80] sm:$0xff]
      %v161 = vld [vmem:[%s138 + $0x88] sm:$0xff]
      %v162 = vld [vmem:[%s138 + $0x90] sm:$0xff]
      %v163 = vld [vmem:[%s138 + $0x98] sm:$0xff]
      %v164 = vld [vmem:[%s138 + $0xa0] sm:$0xff]
      %v165 = vld [vmem:[%s138 + $0xa8] sm:$0xff]
      %v166 = vld [vmem:[%s138 + $0xb0] sm:$0xff]
      %v167 = vld [vmem:[%s138 + $0xb8] sm:$0xff]
      %v168 = vld [vmem:[%s138 + $0xc0] sm:$0xff]
      %v169 = vld [vmem:[%s138 + $0xc8] sm:$0xff]
      %v170 = vld [vmem:[%s138 + $0xd0] sm:$0xff]
      %v171 = vld [vmem:[%s138 + $0xd8] sm:$0xff]
      %v172 = vld [vmem:[%s138 + $0xe0] sm:$0xff]
      %v173 = vld [vmem:[%s138 + $0xe8] sm:$0xff]
      %v174 = vld [vmem:[%s138 + $0xf0] sm:$0xff]
      %v175 = vld [vmem:[%s138 + $0xf8] sm:$0xff]
      %v176 = vld [vmem:[%s138 + $0x100] sm:$0xff]
      %v177 = vld [vmem:[%s138 + $0x108] sm:$0xff]
      %v178 = vld [vmem:[%s138 + $0x110] sm:$0xff]
      %v179 = vld [vmem:[%s138 + $0x118] sm:$0xff]
      %v180 = vld [vmem:[%s138 + $0x120] sm:$0xff]
      %v181 = vld [vmem:[%s138 + $0x128] sm:$0xff]
      %v182 = vld [vmem:[%s138 + $0x130] sm:$0xff]
      %v183 = vld [vmem:[%s138 + $0x138] sm:$0xff]
      %v184 = vld [vmem:[%s138 + $0x140] sm:$0xff]
      %v185 = vld [vmem:[%s1] sm:$0xf]
      %v186 = vld [vmem:[%s1 + $0x4] sm:$0xf]
      %vm224 = vcmask 1046528
      %v225 = vrot.slane %v144, 1
      %v226 = vrot.slane %v145, 1
      %v227 = vsel %vm224, %v225, %v226
      %v228 = vrot.slane %v146, 1
      %v229 = vsel %vm224, %v226, %v228
      %v230 = vrot.slane %v147, 1
      %v231 = vsel %vm224, %v228, %v230
      %v232 = vrot.slane %v148, 1
      %v233 = vsel %vm224, %v230, %v232
      %v234 = vrot.slane %v149, 1
      %v235 = vsel %vm224, %v232, %v234
      %v236 = vrot.slane %v150, 1
      %v237 = vsel %vm224, %v234, %v236
      %v238 = vrot.slane %v151, 1
      %v239 = vsel %vm224, %v236, %v238
      %v240 = vrot.slane %v152, 1
      %v241 = vsel %vm224, %v238, %v240
      %v242 = vrot.slane %v153, 1
      %v243 = vsel %vm224, %v240, %v242
      %v244 = vrot.slane %v154, 1
      %v245 = vsel %vm224, %v242, %v244
      %v246 = vrot.slane %v155, 1
      %v247 = vsel %vm224, %v244, %v246
      %v248 = vrot.slane %v156, 1
      %v249 = vsel %vm224, %v246, %v248
      %v250 = vrot.slane %v157, 1
      %v251 = vsel %vm224, %v248, %v250
      %v252 = vrot.slane %v158, 1
      %v253 = vsel %vm224, %v250, %v252
      %v254 = vrot.slane %v159, 1
      %v255 = vsel %vm224, %v252, %v254
      %v256 = vrot.slane %v160, 1
      %v257 = vsel %vm224, %v254, %v256
      %v258 = vrot.slane %v161, 1
      %v259 = vsel %vm224, %v256, %v258
      %v260 = vrot.slane %v162, 1
      %v261 = vsel %vm224, %v258, %v260
      %v262 = vrot.slane %v163, 1
      %v263 = vsel %vm224, %v260, %v262
      %v264 = vrot.slane %v164, 1
      %v265 = vsel %vm224, %v262, %v264
      %v266 = vrot.slane %v165, 1
      %v267 = vsel %vm224, %v264, %v266
      %v268 = vrot.slane %v166, 1
      %v269 = vsel %vm224, %v266, %v268
      %v270 = vrot.slane %v167, 1
      %v271 = vsel %vm224, %v268, %v270
      %v272 = vrot.slane %v168, 1
      %v273 = vsel %vm224, %v270, %v272
      %v274 = vrot.slane %v169, 1
      %v275 = vsel %vm224, %v272, %v274
      %v276 = vrot.slane %v170, 1
      %v277 = vsel %vm224, %v274, %v276
      %v278 = vrot.slane %v171, 1
      %v279 = vsel %vm224, %v276, %v278
      %v280 = vrot.slane %v172, 1
      %v281 = vsel %vm224, %v278, %v280
      %v282 = vrot.slane %v173, 1
      %v283 = vsel %vm224, %v280, %v282
      %v284 = vrot.slane %v174, 1
      %v285 = vsel %vm224, %v282, %v284
      %v286 = vrot.slane %v175, 1
      %v287 = vsel %vm224, %v284, %v286
      %v288 = vrot.slane %v176, 1
      %v289 = vsel %vm224, %v286, %v288
      %v290 = vrot.slane %v177, 1
      %v291 = vsel %vm224, %v288, %v290
      %v292 = vrot.slane %v178, 1
      %v293 = vsel %vm224, %v290, %v292
      %v294 = vrot.slane %v179, 1
      %v295 = vsel %vm224, %v292, %v294
      %v296 = vrot.slane %v180, 1
      %v297 = vsel %vm224, %v294, %v296
      %vm298 = vcmask 31744
      %v299 = vsel %vm298, %v227, 0
      %v301 = vsel %vm298, %v229, 0
      %v303 = vsel %vm298, %v231, 0
      %v305 = vsel %vm298, %v233, 0
      %v307 = vsel %vm298, %v235, 0
      %v309 = vsel %vm298, %v237, 0
      %v311 = vsel %vm298, %v239, 0
      %v313 = vsel %vm298, %v241, 0
      %v315 = vsel %vm298, %v243, 0
      %v317 = vsel %vm298, %v245, 0
      %v319 = vsel %vm298, %v247, 0
      %v321 = vsel %vm298, %v249, 0
      %v323 = vsel %vm298, %v251, 0
      %v325 = vsel %vm298, %v253, 0
      %v327 = vsel %vm298, %v255, 0
      %v329 = vsel %vm298, %v257, 0
      %v331 = vsel %vm298, %v259, 0
      %v333 = vsel %vm298, %v261, 0
      %v335 = vsel %vm298, %v263, 0
      %v337 = vsel %vm298, %v265, 0
      %v339 = vsel %vm298, %v267, 0
      %v341 = vsel %vm298, %v269, 0
      %v343 = vsel %vm298, %v271, 0
      %v345 = vsel %vm298, %v273, 0
      %v347 = vsel %vm298, %v275, 0
      %v349 = vsel %vm298, %v277, 0
      %v351 = vsel %vm298, %v279, 0
      %v353 = vsel %vm298, %v281, 0
      %v355 = vsel %vm298, %v283, 0
      %v357 = vsel %vm298, %v285, 0
      %v359 = vsel %vm298, %v287, 0
      %v361 = vsel %vm298, %v289, 0
      %v363 = vsel %vm298, %v291, 0
      %v365 = vsel %vm298, %v293, 0
      %v367 = vsel %vm298, %v295, 0
      %v369 = vsel %vm298, %v297, 0
      %vm371 = vcmask 1043456
      %v373 = vsel %vm371, %v186, 0
      %375 = vmatprep.subr.mxu0 0.0
      %376 = vmatpush1.msra.mxu0 %v373
      %377 = vmatprep.subr.mxu0 0.0
      %378 = vmatpush1.msra.mxu0 0.0
      %379 = vmatprep.subr.mxu0 0.0
      %380 = vmatpush1.msra.mxu0 0.0
      %381 = vmatprep.subr.mxu0 0.0
      %382 = vmatpush1.msra.mxu0 0.0
      %383 = vmatprep.subr.mxu0 0.0
      %384 = vmatpush1.msra.mxu0 0.0
      %385 = vmatprep.subr.mxu0 0.0
      %386 = vmatpush1.msra.mxu0 0.0
      %387 = vmatprep.subr.mxu0 0.0
      %388 = vmatpush1.msra.mxu0 0.0
      %389 = vmatprep.subr.mxu0 0.0
      %390 = vmatpush1.msra.mxu0 0.0
      %391 = vmatprep.subr.mxu0 0.0
      %392 = vmatpush1.msra.mxu0 0.0
      %393 = vmatprep.subr.mxu0 0.0
      %394 = vmatpush1.msra.mxu0 0.0
      %395 = vmatprep.subr.mxu0 0.0
      %396 = vmatpush1.msra.mxu0 0.0
      %397 = vmatprep.subr.mxu0 0.0
      %398 = vmatpush1.msra.mxu0 0.0
      %399 = vmatprep.subr.mxu0 0.0
      %400 = vmatpush1.msra.mxu0 0.0
      %401 = vmatprep.subr.mxu0 0.0
      %402 = vmatpush1.msra.mxu0 0.0
      %403 = vmatprep.subr.mxu0 0.0
      %404 = vmatpush1.msra.mxu0 0.0
      %405 = vmatprep.subr.mxu0 0.0
      %406 = vmatpush1.msra.mxu0 0.0
      %407 = vmatprep.subr.mxu0 0.0
      %408 = vmatpush1.msra.mxu0 0.0
      %409 = vmatprep.subr.mxu0 0.0
      %410 = vmatpush1.msra.mxu0 0.0
      %411 = vmatprep.subr.mxu0 0.0
      %412 = vmatpush1.msra.mxu0 0.0
      %413 = vmatprep.subr.mxu0 0.0
      %414 = vmatpush1.msra.mxu0 0.0
      %415 = vmatprep.subr.mxu0 0.0
      %416 = vmatpush1.msra.mxu0 0.0
      %417 = vmatprep.subr.mxu0 0.0
      %418 = vmatpush1.msra.mxu0 0.0
      %419 = vmatprep.subr.mxu0 0.0
      %420 = vmatpush1.msra.mxu0 0.0
      %421 = vmatprep.subr.mxu0 0.0
      %422 = vmatpush1.msra.mxu0 0.0
      %423 = vmatprep.subr.mxu0 0.0
      %424 = vmatpush1.msra.mxu0 0.0
      %425 = vmatprep.subr.mxu0 0.0
      %426 = vmatpush1.msra.mxu0 0.0
      %427 = vmatprep.subr.mxu0 0.0
      %428 = vmatpush1.msra.mxu0 0.0
      %429 = vmatprep.subr.mxu0 0.0
      %430 = vmatpush1.msra.mxu0 0.0
      %431 = vmatprep.subr.mxu0 0.0
      %432 = vmatpush1.msra.mxu0 0.0
      %433 = vmatprep.subr.mxu0 0.0
      %434 = vmatpush1.msra.mxu0 0.0
      %435 = vmatprep.subr.mxu0 0.0
      %436 = vmatpush1.msra.mxu0 0.0
      %437 = vmatprep.subr.mxu0 0.0
      %438 = vmatpush1.msra.mxu0 0.0
      %439 = vmatprep.mubr.f32.mxu0 0.0
      %440 = vmatmul.mubr.f32.gmra.mrb[0].mxu0 %v299
      %v441 = vpop.f32.mrb[0].mxu0
      %v442 = vadd.f32 0.0, %v441
      %v443 = vpop.f32.mrb[0].mxu0
      %444 = vmatprep.mubr.f32.mxu0 0.0
      %445 = vmatmul.mubr.f32.gmra.mrb[0].mxu0 %v301
      %v446 = vpop.f32.mrb[0].mxu0
      %v447 = vadd.f32 0.0, %v446
      %v448 = vpop.f32.mrb[0].mxu0
      %449 = vmatprep.mubr.f32.mxu0 0.0
      %450 = vmatmul.mubr.f32.gmra.mrb[0].mxu0 %v303
      %v451 = vpop.f32.mrb[0].mxu0
      %v452 = vadd.f32 0.0, %v451
      %v453 = vpop.f32.mrb[0].mxu0
      %454 = vmatprep.mubr.f32.mxu0 0.0
      %455 = vmatmul.mubr.f32.gmra.mrb[0].mxu0 %v305
      %v456 = vpop.f32.mrb[0].mxu0
      %v457 = vadd.f32 0.0, %v456
      %v458 = vpop.f32.mrb[0].mxu0
      %459 = vmatprep.mubr.f32.mxu0 0.0
      %460 = vmatmul.mubr.f32.gmra.mrb[0].mxu0 %v307
      %v461 = vpop.f32.mrb[0].mxu0
      %v462 = vadd.f32 0.0, %v461
      %v463 = vpop.f32.mrb[0].mxu0
      %464 = vmatprep.mubr.f32.mxu0 0.0
      %465 = vmatmul.mubr.f32.gmra.mrb[0].mxu0 %v309
      %v466 = vpop.f32.mrb[0].mxu0
      %v467 = vadd.f32 0.0, %v466
      %v468 = vpop.f32.mrb[0].mxu0
      %469 = vmatprep.mubr.f32.mxu0 0.0
      %470 = vmatmul.mubr.f32.gmra.mrb[0].mxu0 %v311
      %v471 = vpop.f32.mrb[0].mxu0
      %v472 = vadd.f32 0.0, %v471
      %v473 = vpop.f32.mrb[0].mxu0
      %474 = vmatprep.mubr.f32.mxu0 0.0
      %475 = vmatmul.mubr.f32.gmra.mrb[0].mxu0 %v313
      %v476 = vpop.f32.mrb[0].mxu0
      %v477 = vadd.f32 0.0, %v476
      %v478 = vpop.f32.mrb[0].mxu0
      %479 = vmatprep.mubr.f32.mxu0 0.0
      %480 = vmatmul.mubr.f32.gmra.mrb[0].mxu0 %v315
      %v481 = vpop.f32.mrb[0].mxu0
      %v482 = vadd.f32 0.0, %v481
      %v483 = vpop.f32.mrb[0].mxu0
      %484 = vmatprep.mubr.f32.mxu0 0.0
      %485 = vmatmul.mubr.f32.gmra.mrb[0].mxu0 %v317
      %v486 = vpop.f32.mrb[0].mxu0
      %v487 = vadd.f32 0.0, %v486
      %v488 = vpop.f32.mrb[0].mxu0
      %489 = vmatprep.mubr.f32.mxu0 0.0
      %490 = vmatmul.mubr.f32.gmra.mrb[0].mxu0 %v319
      %v491 = vpop.f32.mrb[0].mxu0
      %v492 = vadd.f32 0.0, %v491
      %v493 = vpop.f32.mrb[0].mxu0
      %494 = vmatprep.mubr.f32.mxu0 0.0
      %495 = vmatmul.mubr.f32.gmra.mrb[0].mxu0 %v321
      %v496 = vpop.f32.mrb[0].mxu0
      %v497 = vadd.f32 0.0, %v496
      %v498 = vpop.f32.mrb[0].mxu0
      %499 = vmatprep.mubr.f32.mxu0 0.0
      %500 = vmatmul.mubr.f32.gmra.mrb[0].mxu0 %v323
      %v501 = vpop.f32.mrb[0].mxu0
      %v502 = vadd.f32 0.0, %v501
      %v503 = vpop.f32.mrb[0].mxu0
      %504 = vmatprep.mubr.f32.mxu0 0.0
      %505 = vmatmul.mubr.f32.gmra.mrb[0].mxu0 %v325
      %v506 = vpop.f32.mrb[0].mxu0
      %v507 = vadd.f32 0.0, %v506
      %v508 = vpop.f32.mrb[0].mxu0
      %509 = vmatprep.mubr.f32.mxu0 0.0
      %510 = vmatmul.mubr.f32.gmra.mrb[0].mxu0 %v327
      %v511 = vpop.f32.mrb[0].mxu0
      %v512 = vadd.f32 0.0, %v511
      %v513 = vpop.f32.mrb[0].mxu0
      %514 = vmatprep.mubr.f32.mxu0 0.0
      %515 = vmatmul.mubr.f32.gmra.mrb[0].mxu0 %v329
      %v516 = vpop.f32.mrb[0].mxu0
      %v517 = vadd.f32 0.0, %v516
      %v518 = vpop.f32.mrb[0].mxu0
      %519 = vmatprep.mubr.f32.mxu0 0.0
      %520 = vmatmul.mubr.f32.gmra.mrb[0].mxu0 %v331
      %v521 = vpop.f32.mrb[0].mxu0
      %v522 = vadd.f32 0.0, %v521
      %v523 = vpop.f32.mrb[0].mxu0
      %524 = vmatprep.mubr.f32.mxu0 0.0
      %525 = vmatmul.mubr.f32.gmra.mrb[0].mxu0 %v333
      %v526 = vpop.f32.mrb[0].mxu0
      %v527 = vadd.f32 0.0, %v526
      %v528 = vpop.f32.mrb[0].mxu0
      %529 = vmatprep.mubr.f32.mxu0 0.0
      %530 = vmatmul.mubr.f32.gmra.mrb[0].mxu0 %v335
      %v531 = vpop.f32.mrb[0].mxu0
      %v532 = vadd.f32 0.0, %v531
      %v533 = vpop.f32.mrb[0].mxu0
      %534 = vmatprep.mubr.f32.mxu0 0.0
      %535 = vmatmul.mubr.f32.gmra.mrb[0].mxu0 %v337
      %v536 = vpop.f32.mrb[0].mxu0
      %v537 = vadd.f32 0.0, %v536
      %v538 = vpop.f32.mrb[0].mxu0
      %539 = vmatprep.mubr.f32.mxu0 0.0
      %540 = vmatmul.mubr.f32.gmra.mrb[0].mxu0 %v339
      %v541 = vpop.f32.mrb[0].mxu0
      %v542 = vadd.f32 0.0, %v541
      %v543 = vpop.f32.mrb[0].mxu0
      %544 = vmatprep.mubr.f32.mxu0 0.0
      %545 = vmatmul.mubr.f32.gmra.mrb[0].mxu0 %v341
      %v546 = vpop.f32.mrb[0].mxu0
      %v547 = vadd.f32 0.0, %v546
      %v548 = vpop.f32.mrb[0].mxu0
      %549 = vmatprep.mubr.f32.mxu0 0.0
      %550 = vmatmul.mubr.f32.gmra.mrb[0].mxu0 %v343
      %v551 = vpop.f32.mrb[0].mxu0
      %v552 = vadd.f32 0.0, %v551
      %v553 = vpop.f32.mrb[0].mxu0
      %554 = vmatprep.mubr.f32.mxu0 0.0
      %555 = vmatmul.mubr.f32.gmra.mrb[0].mxu0 %v345
      %v556 = vpop.f32.mrb[0].mxu0
      %v557 = vadd.f32 0.0, %v556
      %v558 = vpop.f32.mrb[0].mxu0
      %559 = vmatprep.mubr.f32.mxu0 0.0
      %560 = vmatmul.mubr.f32.gmra.mrb[0].mxu0 %v347
      %v561 = vpop.f32.mrb[0].mxu0
      %v562 = vadd.f32 0.0, %v561
      %v563 = vpop.f32.mrb[0].mxu0
      %564 = vmatprep.mubr.f32.mxu0 0.0
      %565 = vmatmul.mubr.f32.gmra.mrb[0].mxu0 %v349
      %v566 = vpop.f32.mrb[0].mxu0
      %v567 = vadd.f32 0.0, %v566
      %v568 = vpop.f32.mrb[0].mxu0
      %569 = vmatprep.mubr.f32.mxu0 0.0
      %570 = vmatmul.mubr.f32.gmra.mrb[0].mxu0 %v351
      %v571 = vpop.f32.mrb[0].mxu0
      %v572 = vadd.f32 0.0, %v571
      %v573 = vpop.f32.mrb[0].mxu0
      %574 = vmatprep.mubr.f32.mxu0 0.0
      %575 = vmatmul.mubr.f32.gmra.mrb[0].mxu0 %v353
      %v576 = vpop.f32.mrb[0].mxu0
      %v577 = vadd.f32 0.0, %v576
      %v578 = vpop.f32.mrb[0].mxu0
      %579 = vmatprep.mubr.f32.mxu0 0.0
      %580 = vmatmul.mubr.f32.gmra.mrb[0].mxu0 %v355
      %v581 = vpop.f32.mrb[0].mxu0
      %v582 = vadd.f32 0.0, %v581
      %v583 = vpop.f32.mrb[0].mxu0
      %584 = vmatprep.mubr.f32.mxu0 0.0
      %585 = vmatmul.mubr.f32.gmra.mrb[0].mxu0 %v357
      %v586 = vpop.f32.mrb[0].mxu0
      %v587 = vadd.f32 0.0, %v586
      %v588 = vpop.f32.mrb[0].mxu0
      %589 = vmatprep.mubr.f32.mxu0 0.0
      %590 = vmatmul.mubr.f32.gmra.mrb[0].mxu0 %v359
      %v591 = vpop.f32.mrb[0].mxu0
      %v592 = vadd.f32 0.0, %v591
      %v593 = vpop.f32.mrb[0].mxu0
      %594 = vmatprep.mubr.f32.mxu0 0.0
      %595 = vmatmul.mubr.f32.gmra.mrb[0].mxu0 %v361
      %v596 = vpop.f32.mrb[0].mxu0
      %v597 = vadd.f32 0.0, %v596
      %v598 = vpop.f32.mrb[0].mxu0
      %599 = vmatprep.mubr.f32.mxu0 0.0
      %600 = vmatmul.mubr.f32.gmra.mrb[0].mxu0 %v363
      %v601 = vpop.f32.mrb[0].mxu0
      %v602 = vadd.f32 0.0, %v601
      %v603 = vpop.f32.mrb[0].mxu0
      %604 = vmatprep.mubr.f32.mxu0 0.0
      %605 = vmatmul.mubr.f32.gmra.mrb[0].mxu0 %v365
      %v606 = vpop.f32.mrb[0].mxu0
      %v607 = vadd.f32 0.0, %v606
      %v608 = vpop.f32.mrb[0].mxu0
      %609 = vmatprep.mubr.f32.mxu0 0.0
      %610 = vmatmul.mubr.f32.gmra.mrb[0].mxu0 %v367
      %v611 = vpop.f32.mrb[0].mxu0
      %v612 = vadd.f32 0.0, %v611
      %v613 = vpop.f32.mrb[0].mxu0
      %614 = vmatprep.mubr.f32.mxu0 0.0
      %615 = vmatmul.mubr.f32.gmra.mrb[0].mxu0 %v369
      %v616 = vpop.f32.mrb[0].mxu0
      %v617 = vadd.f32 0.0, %v616
      %v618 = vpop.f32.mrb[0].mxu0
      %619 = vdwg.mxu0
      %v620 = vsel %vm298, %v144, 0
      %v622 = vsel %vm298, %v145, 0
      %v624 = vsel %vm298, %v146, 0
      %v626 = vsel %vm298, %v147, 0
      %v628 = vsel %vm298, %v148, 0
      %v630 = vsel %vm298, %v149, 0
      %v632 = vsel %vm298, %v150, 0
      %v634 = vsel %vm298, %v151, 0
      %v636 = vsel %vm298, %v152, 0
      %v638 = vsel %vm298, %v153, 0
      %v640 = vsel %vm298, %v154, 0
      %v642 = vsel %vm298, %v155, 0
      %v644 = vsel %vm298, %v156, 0
      %v646 = vsel %vm298, %v157, 0
      %v648 = vsel %vm298, %v158, 0
      %v650 = vsel %vm298, %v159, 0
      %v652 = vsel %vm298, %v160, 0
      %v654 = vsel %vm298, %v161, 0
      %v656 = vsel %vm298, %v162, 0
      %v658 = vsel %vm298, %v163, 0
      %v660 = vsel %vm298, %v164, 0
      %v662 = vsel %vm298, %v165, 0
      %v664 = vsel %vm298, %v166, 0
      %v666 = vsel %vm298, %v167, 0
      %v668 = vsel %vm298, %v168, 0
      %v670 = vsel %vm298, %v169, 0
      %v672 = vsel %vm298, %v170, 0
      %v674 = vsel %vm298, %v171, 0
      %v676 = vsel %vm298, %v172, 0
      %v678 = vsel %vm298, %v173, 0
      %v680 = vsel %vm298, %v174, 0
      %v682 = vsel %vm298, %v175, 0
      %v684 = vsel %vm298, %v176, 0
      %v686 = vsel %vm298, %v177, 0
      %v688 = vsel %vm298, %v178, 0
      %v690 = vsel %vm298, %v179, 0
      %v693 = vsel %vm371, %v185, 0
      %695 = vmatprep.subr.mxu0 0.0
      %696 = vmatpush1.msra.mxu0 %v693
      %697 = vmatprep.subr.mxu0 0.0
      %698 = vmatpush1.msra.mxu0 0.0
      %699 = vmatprep.subr.mxu0 0.0
      %700 = vmatpush1.msra.mxu0 0.0
      %701 = vmatprep.subr.mxu0 0.0
      %702 = vmatpush1.msra.mxu0 0.0
      %703 = vmatprep.subr.mxu0 0.0
      %704 = vmatpush1.msra.mxu0 0.0
      %705 = vmatprep.subr.mxu0 0.0
      %706 = vmatpush1.msra.mxu0 0.0
      %707 = vmatprep.subr.mxu0 0.0
      %708 = vmatpush1.msra.mxu0 0.0
      %709 = vmatprep.subr.mxu0 0.0
      %710 = vmatpush1.msra.mxu0 0.0
      %711 = vmatprep.subr.mxu0 0.0
      %712 = vmatpush1.msra.mxu0 0.0
      %713 = vmatprep.subr.mxu0 0.0
      %714 = vmatpush1.msra.mxu0 0.0
      %715 = vmatprep.subr.mxu0 0.0
      %716 = vmatpush1.msra.mxu0 0.0
      %717 = vmatprep.subr.mxu0 0.0
      %718 = vmatpush1.msra.mxu0 0.0
      %719 = vmatprep.subr.mxu0 0.0
      %720 = vmatpush1.msra.mxu0 0.0
      %721 = vmatprep.subr.mxu0 0.0
      %722 = vmatpush1.msra.mxu0 0.0
      %723 = vmatprep.subr.mxu0 0.0
      %724 = vmatpush1.msra.mxu0 0.0
      %725 = vmatprep.subr.mxu0 0.0
      %726 = vmatpush1.msra.mxu0 0.0
      %727 = vmatprep.subr.mxu0 0.0
      %728 = vmatpush1.msra.mxu0 0.0
      %729 = vmatprep.subr.mxu0 0.0
      %730 = vmatpush1.msra.mxu0 0.0
      %731 = vmatprep.subr.mxu0 0.0
      %732 = vmatpush1.msra.mxu0 0.0
      %733 = vmatprep.subr.mxu0 0.0
      %734 = vmatpush1.msra.mxu0 0.0
      %735 = vmatprep.subr.mxu0 0.0
      %736 = vmatpush1.msra.mxu0 0.0
      %737 = vmatprep.subr.mxu0 0.0
      %738 = vmatpush1.msra.mxu0 0.0
      %739 = vmatprep.subr.mxu0 0.0
      %740 = vmatpush1.msra.mxu0 0.0
      %741 = vmatprep.subr.mxu0 0.0
      %742 = vmatpush1.msra.mxu0 0.0
      %743 = vmatprep.subr.mxu0 0.0
      %744 = vmatpush1.msra.mxu0 0.0
      %745 = vmatprep.subr.mxu0 0.0
      %746 = vmatpush1.msra.mxu0 0.0
      %747 = vmatprep.subr.mxu0 0.0
      %748 = vmatpush1.msra.mxu0 0.0
      %749 = vmatprep.subr.mxu0 0.0
      %750 = vmatpush1.msra.mxu0 0.0
      %751 = vmatprep.subr.mxu0 0.0
      %752 = vmatpush1.msra.mxu0 0.0
      %753 = vmatprep.subr.mxu0 0.0
      %754 = vmatpush1.msra.mxu0 0.0
      %755 = vmatprep.subr.mxu0 0.0
      %756 = vmatpush1.msra.mxu0 0.0
      %757 = vmatprep.subr.mxu0 0.0
      %758 = vmatpush1.msra.mxu0 0.0
      %759 = vmatprep.mubr.f32.mxu0 0.0
      %760 = vmatmul.mubr.f32.gmra.mrb[0].mxu0 %v620
      %v761 = vpop.f32.mrb[0].mxu0
      %v762 = vadd.f32 %v442, %v761
      %v763 = vpop.f32.mrb[0].mxu0
      %764 = vmatprep.mubr.f32.mxu0 0.0
      %765 = vmatmul.mubr.f32.gmra.mrb[0].mxu0 %v622
      %v766 = vpop.f32.mrb[0].mxu0
      %v767 = vadd.f32 %v447, %v766
      %v768 = vpop.f32.mrb[0].mxu0
      %769 = vmatprep.mubr.f32.mxu0 0.0
      %770 = vmatmul.mubr.f32.gmra.mrb[0].mxu0 %v624
      %v771 = vpop.f32.mrb[0].mxu0
      %v772 = vadd.f32 %v452, %v771
      %v773 = vpop.f32.mrb[0].mxu0
      %774 = vmatprep.mubr.f32.mxu0 0.0
      %775 = vmatmul.mubr.f32.gmra.mrb[0].mxu0 %v626
      %v776 = vpop.f32.mrb[0].mxu0
      %v777 = vadd.f32 %v457, %v776
      %v778 = vpop.f32.mrb[0].mxu0
      %779 = vmatprep.mubr.f32.mxu0 0.0
      %780 = vmatmul.mubr.f32.gmra.mrb[0].mxu0 %v628
      %v781 = vpop.f32.mrb[0].mxu0
      %v782 = vadd.f32 %v462, %v781
      %v783 = vpop.f32.mrb[0].mxu0
      %784 = vmatprep.mubr.f32.mxu0 0.0
      %785 = vmatmul.mubr.f32.gmra.mrb[0].mxu0 %v630
      %v786 = vpop.f32.mrb[0].mxu0
      %v787 = vadd.f32 %v467, %v786
      %v788 = vpop.f32.mrb[0].mxu0
      %789 = vmatprep.mubr.f32.mxu0 0.0
      %790 = vmatmul.mubr.f32.gmra.mrb[0].mxu0 %v632
      %v791 = vpop.f32.mrb[0].mxu0
      %v792 = vadd.f32 %v472, %v791
      %v793 = vpop.f32.mrb[0].mxu0
      %794 = vmatprep.mubr.f32.mxu0 0.0
      %795 = vmatmul.mubr.f32.gmra.mrb[0].mxu0 %v634
      %v796 = vpop.f32.mrb[0].mxu0
      %v797 = vadd.f32 %v477, %v796
      %v798 = vpop.f32.mrb[0].mxu0
      %799 = vmatprep.mubr.f32.mxu0 0.0
      %800 = vmatmul.mubr.f32.gmra.mrb[0].mxu0 %v636
      %v801 = vpop.f32.mrb[0].mxu0
      %v802 = vadd.f32 %v482, %v801
      %v803 = vpop.f32.mrb[0].mxu0
      %804 = vmatprep.mubr.f32.mxu0 0.0
      %805 = vmatmul.mubr.f32.gmra.mrb[0].mxu0 %v638
      %v806 = vpop.f32.mrb[0].mxu0
      %v807 = vadd.f32 %v487, %v806
      %v808 = vpop.f32.mrb[0].mxu0
      %809 = vmatprep.mubr.f32.mxu0 0.0
      %810 = vmatmul.mubr.f32.gmra.mrb[0].mxu0 %v640
      %v811 = vpop.f32.mrb[0].mxu0
      %v812 = vadd.f32 %v492, %v811
      %v813 = vpop.f32.mrb[0].mxu0
      %814 = vmatprep.mubr.f32.mxu0 0.0
      %815 = vmatmul.mubr.f32.gmra.mrb[0].mxu0 %v642
      %v816 = vpop.f32.mrb[0].mxu0
      %v817 = vadd.f32 %v497, %v816
      %v818 = vpop.f32.mrb[0].mxu0
      %819 = vmatprep.mubr.f32.mxu0 0.0
      %820 = vmatmul.mubr.f32.gmra.mrb[0].mxu0 %v644
      %v821 = vpop.f32.mrb[0].mxu0
      %v822 = vadd.f32 %v502, %v821
      %v823 = vpop.f32.mrb[0].mxu0
      %824 = vmatprep.mubr.f32.mxu0 0.0
      %825 = vmatmul.mubr.f32.gmra.mrb[0].mxu0 %v646
      %v826 = vpop.f32.mrb[0].mxu0
      %v827 = vadd.f32 %v507, %v826
      %v828 = vpop.f32.mrb[0].mxu0
      %829 = vmatprep.mubr.f32.mxu0 0.0
      %830 = vmatmul.mubr.f32.gmra.mrb[0].mxu0 %v648
      %v831 = vpop.f32.mrb[0].mxu0
      %v832 = vadd.f32 %v512, %v831
      %v833 = vpop.f32.mrb[0].mxu0
      %834 = vmatprep.mubr.f32.mxu0 0.0
      %835 = vmatmul.mubr.f32.gmra.mrb[0].mxu0 %v650
      %v836 = vpop.f32.mrb[0].mxu0
      %v837 = vadd.f32 %v517, %v836
      %v838 = vpop.f32.mrb[0].mxu0
      %839 = vmatprep.mubr.f32.mxu0 0.0
      %840 = vmatmul.mubr.f32.gmra.mrb[0].mxu0 %v652
      %v841 = vpop.f32.mrb[0].mxu0
      %v842 = vadd.f32 %v522, %v841
      %v843 = vpop.f32.mrb[0].mxu0
      %844 = vmatprep.mubr.f32.mxu0 0.0
      %845 = vmatmul.mubr.f32.gmra.mrb[0].mxu0 %v654
      %v846 = vpop.f32.mrb[0].mxu0
      %v847 = vadd.f32 %v527, %v846
      %v848 = vpop.f32.mrb[0].mxu0
      %849 = vmatprep.mubr.f32.mxu0 0.0
      %850 = vmatmul.mubr.f32.gmra.mrb[0].mxu0 %v656
      %v851 = vpop.f32.mrb[0].mxu0
      %v852 = vadd.f32 %v532, %v851
      %v853 = vpop.f32.mrb[0].mxu0
      %854 = vmatprep.mubr.f32.mxu0 0.0
      %855 = vmatmul.mubr.f32.gmra.mrb[0].mxu0 %v658
      %v856 = vpop.f32.mrb[0].mxu0
      %v857 = vadd.f32 %v537, %v856
      %v858 = vpop.f32.mrb[0].mxu0
      %859 = vmatprep.mubr.f32.mxu0 0.0
      %860 = vmatmul.mubr.f32.gmra.mrb[0].mxu0 %v660
      %v861 = vpop.f32.mrb[0].mxu0
      %v862 = vadd.f32 %v542, %v861
      %v863 = vpop.f32.mrb[0].mxu0
      %864 = vmatprep.mubr.f32.mxu0 0.0
      %865 = vmatmul.mubr.f32.gmra.mrb[0].mxu0 %v662
      %v866 = vpop.f32.mrb[0].mxu0
      %v867 = vadd.f32 %v547, %v866
      %v868 = vpop.f32.mrb[0].mxu0
      %869 = vmatprep.mubr.f32.mxu0 0.0
      %870 = vmatmul.mubr.f32.gmra.mrb[0].mxu0 %v664
      %v871 = vpop.f32.mrb[0].mxu0
      %v872 = vadd.f32 %v552, %v871
      %v873 = vpop.f32.mrb[0].mxu0
      %874 = vmatprep.mubr.f32.mxu0 0.0
      %875 = vmatmul.mubr.f32.gmra.mrb[0].mxu0 %v666
      %v876 = vpop.f32.mrb[0].mxu0
      %v877 = vadd.f32 %v557, %v876
      %v878 = vpop.f32.mrb[0].mxu0
      %879 = vmatprep.mubr.f32.mxu0 0.0
      %880 = vmatmul.mubr.f32.gmra.mrb[0].mxu0 %v668
      %v881 = vpop.f32.mrb[0].mxu0
      %v882 = vadd.f32 %v562, %v881
      %v883 = vpop.f32.mrb[0].mxu0
      %884 = vmatprep.mubr.f32.mxu0 0.0
      %885 = vmatmul.mubr.f32.gmra.mrb[0].mxu0 %v670
      %v886 = vpop.f32.mrb[0].mxu0
      %v887 = vadd.f32 %v567, %v886
      %v888 = vpop.f32.mrb[0].mxu0
      %889 = vmatprep.mubr.f32.mxu0 0.0
      %890 = vmatmul.mubr.f32.gmra.mrb[0].mxu0 %v672
      %v891 = vpop.f32.mrb[0].mxu0
      %v892 = vadd.f32 %v572, %v891
      %v893 = vpop.f32.mrb[0].mxu0
      %894 = vmatprep.mubr.f32.mxu0 0.0
      %895 = vmatmul.mubr.f32.gmra.mrb[0].mxu0 %v674
      %v896 = vpop.f32.mrb[0].mxu0
      %v897 = vadd.f32 %v577, %v896
      %v898 = vpop.f32.mrb[0].mxu0
      %899 = vmatprep.mubr.f32.mxu0 0.0
      %900 = vmatmul.mubr.f32.gmra.mrb[0].mxu0 %v676
      %v901 = vpop.f32.mrb[0].mxu0
      %v902 = vadd.f32 %v582, %v901
      %v903 = vpop.f32.mrb[0].mxu0
      %904 = vmatprep.mubr.f32.mxu0 0.0
      %905 = vmatmul.mubr.f32.gmra.mrb[0].mxu0 %v678
      %v906 = vpop.f32.mrb[0].mxu0
      %v907 = vadd.f32 %v587, %v906
      %v908 = vpop.f32.mrb[0].mxu0
      %909 = vmatprep.mubr.f32.mxu0 0.0
      %910 = vmatmul.mubr.f32.gmra.mrb[0].mxu0 %v680
      %v911 = vpop.f32.mrb[0].mxu0
      %v912 = vadd.f32 %v592, %v911
      %v913 = vpop.f32.mrb[0].mxu0
      %914 = vmatprep.mubr.f32.mxu0 0.0
      %915 = vmatmul.mubr.f32.gmra.mrb[0].mxu0 %v682
      %v916 = vpop.f32.mrb[0].mxu0
      %v917 = vadd.f32 %v597, %v916
      %v918 = vpop.f32.mrb[0].mxu0
      %919 = vmatprep.mubr.f32.mxu0 0.0
      %920 = vmatmul.mubr.f32.gmra.mrb[0].mxu0 %v684
      %v921 = vpop.f32.mrb[0].mxu0
      %v922 = vadd.f32 %v602, %v921
      %v923 = vpop.f32.mrb[0].mxu0
      %924 = vmatprep.mubr.f32.mxu0 0.0
      %925 = vmatmul.mubr.f32.gmra.mrb[0].mxu0 %v686
      %v926 = vpop.f32.mrb[0].mxu0
      %v927 = vadd.f32 %v607, %v926
      %v928 = vpop.f32.mrb[0].mxu0
      %929 = vmatprep.mubr.f32.mxu0 0.0
      %930 = vmatmul.mubr.f32.gmra.mrb[0].mxu0 %v688
      %v931 = vpop.f32.mrb[0].mxu0
      %v932 = vadd.f32 %v612, %v931
      %v933 = vpop.f32.mrb[0].mxu0
      %934 = vmatprep.mubr.f32.mxu0 0.0
      %935 = vmatmul.mubr.f32.gmra.mrb[0].mxu0 %v690
      %v936 = vpop.f32.mrb[0].mxu0
      %v937 = vadd.f32 %v617, %v936
      %v938 = vpop.f32.mrb[0].mxu0
      %939 = vdwg.mxu0
      %v940 = vld [vmem:[%s1 + $0x8] sm:$0xf]
      %vm941 = vcmask 1045504
      %v942 = vrot.slane %v144, 2
      %v943 = vrot.slane %v145, 2
      %v944 = vsel %vm941, %v942, %v943
      %v945 = vrot.slane %v146, 2
      %v946 = vsel %vm941, %v943, %v945
      %v947 = vrot.slane %v147, 2
      %v948 = vsel %vm941, %v945, %v947
      %v949 = vrot.slane %v148, 2
      %v950 = vsel %vm941, %v947, %v949
      %v951 = vrot.slane %v149, 2
      %v952 = vsel %vm941, %v949, %v951
      %v953 = vrot.slane %v150, 2
      %v954 = vsel %vm941, %v951, %v953
      %v955 = vrot.slane %v151, 2
      %v956 = vsel %vm941, %v953, %v955
      %v957 = vrot.slane %v152, 2
      %v958 = vsel %vm941, %v955, %v957
      %v959 = vrot.slane %v153, 2
      %v960 = vsel %vm941, %v957, %v959
      %v961 = vrot.slane %v154, 2
      %v962 = vsel %vm941, %v959, %v961
      %v963 = vrot.slane %v155, 2
      %v964 = vsel %vm941, %v961, %v963
      %v965 = vrot.slane %v156, 2
      %v966 = vsel %vm941, %v963, %v965
      %v967 = vrot.slane %v157, 2
      %v968 = vsel %vm941, %v965, %v967
      %v969 = vrot.slane %v158, 2
      %v970 = vsel %vm941, %v967, %v969
      %v971 = vrot.slane %v159, 2
      %v972 = vsel %vm941, %v969, %v971
      %v973 = vrot.slane %v160, 2
      %v974 = vsel %vm941, %v971, %v973
      %v975 = vrot.slane %v161, 2
      %v976 = vsel %vm941, %v973, %v975
      %v977 = vrot.slane %v162, 2
      %v978 = vsel %vm941, %v975, %v977
      %v979 = vrot.slane %v163, 2
      %v980 = vsel %vm941, %v977, %v979
      %v981 = vrot.slane %v164, 2
      %v982 = vsel %vm941, %v979, %v981
      %v983 = vrot.slane %v165, 2
      %v984 = vsel %vm941, %v981, %v983
      %v985 = vrot.slane %v166, 2
      %v986 = vsel %vm941, %v983, %v985
      %v987 = vrot.slane %v167, 2
      %v988 = vsel %vm941, %v985, %v987
      %v989 = vrot.slane %v168, 2
      %v990 = vsel %vm941, %v987, %v989
      %v991 = vrot.slane %v169, 2
      %v992 = vsel %vm941, %v989, %v991
      %v993 = vrot.slane %v170, 2
      %v994 = vsel %vm941, %v991, %v993
      %v995 = vrot.slane %v171, 2
      %v996 = vsel %vm941, %v993, %v995
      %v997 = vrot.slane %v172, 2
      %v998 = vsel %vm941, %v995, %v997
      %v999 = vrot.slane %v173, 2
      %v1000 = vsel %vm941, %v997, %v999
      %v1001 = vrot.slane %v174, 2
      %v1002 = vsel %vm941, %v999, %v1001
      %v1003 = vrot.slane %v175, 2
      %v1004 = vsel %vm941, %v1001, %v1003
      %v1005 = vrot.slane %v176, 2
      %v1006 = vsel %vm941, %v1003, %v1005
      %v1007 = vrot.slane %v177, 2
      %v1008 = vsel %vm941, %v1005, %v1007
      %v1009 = vrot.slane %v178, 2
      %v1010 = vsel %vm941, %v1007, %v1009
      %v1011 = vrot.slane %v179, 2
      %v1012 = vsel %vm941, %v1009, %v1011
      %v1013 = vrot.slane %v180, 2
      %v1014 = vsel %vm941, %v1011, %v1013
      %v1015 = vsel %vm298, %v944, 0
      %v1017 = vsel %vm298, %v946, 0
      %v1019 = vsel %vm298, %v948, 0
      %v1021 = vsel %vm298, %v950, 0
      %v1023 = vsel %vm298, %v952, 0
      %v1025 = vsel %vm298, %v954, 0
      %v1027 = vsel %vm298, %v956, 0
      %v1029 = vsel %vm298, %v958, 0
      %v1031 = vsel %vm298, %v960, 0
      %v1033 = vsel %vm298, %v962, 0
      %v1035 = vsel %vm298, %v964, 0
      %v1037 = vsel %vm298, %v966, 0
      %v1039 = vsel %vm298, %v968, 0
      %v1041 = vsel %vm298, %v970, 0
      %v1043 = vsel %vm298, %v972, 0
      %v1045 = vsel %vm298, %v974, 0
      %v1047 = vsel %vm298, %v976, 0
      %v1049 = vsel %vm298, %v978, 0
      %v1051 = vsel %vm298, %v980, 0
      %v1053 = vsel %vm298, %v982, 0
      %v1055 = vsel %vm298, %v984, 0
      %v1057 = vsel %vm298, %v986, 0
      %v1059 = vsel %vm298, %v988, 0
      %v1061 = vsel %vm298, %v990, 0
      %v1063 = vsel %vm298, %v992, 0
      %v1065 = vsel %vm298, %v994, 0
      %v1067 = vsel %vm298, %v996, 0
      %v1069 = vsel %vm298, %v998, 0
      %v1071 = vsel %vm298, %v1000, 0
      %v1073 = vsel %vm298, %v1002, 0
      %v1075 = vsel %vm298, %v1004, 0
      %v1077 = vsel %vm298, %v1006, 0
      %v1079 = vsel %vm298, %v1008, 0
      %v1081 = vsel %vm298, %v1010, 0
      %v1083 = vsel %vm298, %v1012, 0
      %v1085 = vsel %vm298, %v1014, 0
      %v1088 = vsel %vm371, %v940, 0
      %1090 = vmatprep.subr.mxu0 0.0
      %1091 = vmatpush1.msra.mxu0 %v1088
      %1092 = vmatprep.subr.mxu0 0.0
      %1093 = vmatpush1.msra.mxu0 0.0
      %1094 = vmatprep.subr.mxu0 0.0
      %1095 = vmatpush1.msra.mxu0 0.0
      %1096 = vmatprep.subr.mxu0 0.0
      %1097 = vmatpush1.msra.mxu0 0.0
      %1098 = vmatprep.subr.mxu0 0.0
      %1099 = vmatpush1.msra.mxu0 0.0
      %1100 = vmatprep.subr.mxu0 0.0
      %1101 = vmatpush1.msra.mxu0 0.0
      %1102 = vmatprep.subr.mxu0 0.0
      %1103 = vmatpush1.msra.mxu0 0.0
      %1104 = vmatprep.subr.mxu0 0.0
      %1105 = vmatpush1.msra.mxu0 0.0
      %1106 = vmatprep.subr.mxu0 0.0
      %1107 = vmatpush1.msra.mxu0 0.0
      %1108 = vmatprep.subr.mxu0 0.0
      %1109 = vmatpush1.msra.mxu0 0.0
      %1110 = vmatprep.subr.mxu0 0.0
      %1111 = vmatpush1.msra.mxu0 0.0
      %1112 = vmatprep.subr.mxu0 0.0
      %1113 = vmatpush1.msra.mxu0 0.0
      %1114 = vmatprep.subr.mxu0 0.0
      %1115 = vmatpush1.msra.mxu0 0.0
      %1116 = vmatprep.subr.mxu0 0.0
      %1117 = vmatpush1.msra.mxu0 0.0
      %1118 = vmatprep.subr.mxu0 0.0
      %1119 = vmatpush1.msra.mxu0 0.0
      %1120 = vmatprep.subr.mxu0 0.0
      %1121 = vmatpush1.msra.mxu0 0.0
      %1122 = vmatprep.subr.mxu0 0.0
      %1123 = vmatpush1.msra.mxu0 0.0
      %1124 = vmatprep.subr.mxu0 0.0
      %1125 = vmatpush1.msra.mxu0 0.0
      %1126 = vmatprep.subr.mxu0 0.0
      %1127 = vmatpush1.msra.mxu0 0.0
      %1128 = vmatprep.subr.mxu0 0.0
      %1129 = vmatpush1.msra.mxu0 0.0
      %1130 = vmatprep.subr.mxu0 0.0
      %1131 = vmatpush1.msra.mxu0 0.0
      %1132 = vmatprep.subr.mxu0 0.0
      %1133 = vmatpush1.msra.mxu0 0.0
      %1134 = vmatprep.subr.mxu0 0.0
      %1135 = vmatpush1.msra.mxu0 0.0
      %1136 = vmatprep.subr.mxu0 0.0
      %1137 = vmatpush1.msra.mxu0 0.0
      %1138 = vmatprep.subr.mxu0 0.0
      %1139 = vmatpush1.msra.mxu0 0.0
      %1140 = vmatprep.subr.mxu0 0.0
      %1141 = vmatpush1.msra.mxu0 0.0
      %1142 = vmatprep.subr.mxu0 0.0
      %1143 = vmatpush1.msra.mxu0 0.0
      %1144 = vmatprep.subr.mxu0 0.0
      %1145 = vmatpush1.msra.mxu0 0.0
      %1146 = vmatprep.subr.mxu0 0.0
      %1147 = vmatpush1.msra.mxu0 0.0
      %1148 = vmatprep.subr.mxu0 0.0
      %1149 = vmatpush1.msra.mxu0 0.0
      %1150 = vmatprep.subr.mxu0 0.0
      %1151 = vmatpush1.msra.mxu0 0.0
      %1152 = vmatprep.subr.mxu0 0.0
      %1153 = vmatpush1.msra.mxu0 0.0
      %1154 = vmatprep.mubr.f32.mxu0 0.0
      %1155 = vmatmul.mubr.f32.gmra.mrb[0].mxu0 %v1015
      %v1156 = vpop.f32.mrb[0].mxu0
      %v1157 = vadd.f32 0.0, %v1156
      %v1158 = vpop.f32.mrb[0].mxu0
      %1159 = vmatprep.mubr.f32.mxu0 0.0
      %1160 = vmatmul.mubr.f32.gmra.mrb[0].mxu0 %v1017
      %v1161 = vpop.f32.mrb[0].mxu0
      %v1162 = vadd.f32 0.0, %v1161
      %v1163 = vpop.f32.mrb[0].mxu0
      %1164 = vmatprep.mubr.f32.mxu0 0.0
      %1165 = vmatmul.mubr.f32.gmra.mrb[0].mxu0 %v1019
      %v1166 = vpop.f32.mrb[0].mxu0
      %v1167 = vadd.f32 0.0, %v1166
      %v1168 = vpop.f32.mrb[0].mxu0
      %1169 = vmatprep.mubr.f32.mxu0 0.0
      %1170 = vmatmul.mubr.f32.gmra.mrb[0].mxu0 %v1021
      %v1171 = vpop.f32.mrb[0].mxu0
      %v1172 = vadd.f32 0.0, %v1171
      %v1173 = vpop.f32.mrb[0].mxu0
      %1174 = vmatprep.mubr.f32.mxu0 0.0
      %1175 = vmatmul.mubr.f32.gmra.mrb[0].mxu0 %v1023
      %v1176 = vpop.f32.mrb[0].mxu0
      %v1177 = vadd.f32 0.0, %v1176
      %v1178 = vpop.f32.mrb[0].mxu0
      %1179 = vmatprep.mubr.f32.mxu0 0.0
      %1180 = vmatmul.mubr.f32.gmra.mrb[0].mxu0 %v1025
      %v1181 = vpop.f32.mrb[0].mxu0
      %v1182 = vadd.f32 0.0, %v1181
      %v1183 = vpop.f32.mrb[0].mxu0
      %1184 = vmatprep.mubr.f32.mxu0 0.0
      %1185 = vmatmul.mubr.f32.gmra.mrb[0].mxu0 %v1027
      %v1186 = vpop.f32.mrb[0].mxu0
      %v1187 = vadd.f32 0.0, %v1186
      %v1188 = vpop.f32.mrb[0].mxu0
      %1189 = vmatprep.mubr.f32.mxu0 0.0
      %1190 = vmatmul.mubr.f32.gmra.mrb[0].mxu0 %v1029
      %v1191 = vpop.f32.mrb[0].mxu0
      %v1192 = vadd.f32 0.0, %v1191
      %v1193 = vpop.f32.mrb[0].mxu0
      %1194 = vmatprep.mubr.f32.mxu0 0.0
      %1195 = vmatmul.mubr.f32.gmra.mrb[0].mxu0 %v1031
      %v1196 = vpop.f32.mrb[0].mxu0
      %v1197 = vadd.f32 0.0, %v1196
      %v1198 = vpop.f32.mrb[0].mxu0
      %1199 = vmatprep.mubr.f32.mxu0 0.0
      %1200 = vmatmul.mubr.f32.gmra.mrb[0].mxu0 %v1033
      %v1201 = vpop.f32.mrb[0].mxu0
      %v1202 = vadd.f32 0.0, %v1201
      %v1203 = vpop.f32.mrb[0].mxu0
      %1204 = vmatprep.mubr.f32.mxu0 0.0
      %1205 = vmatmul.mubr.f32.gmra.mrb[0].mxu0 %v1035
      %v1206 = vpop.f32.mrb[0].mxu0
      %v1207 = vadd.f32 0.0, %v1206
      %v1208 = vpop.f32.mrb[0].mxu0
      %1209 = vmatprep.mubr.f32.mxu0 0.0
      %1210 = vmatmul.mubr.f32.gmra.mrb[0].mxu0 %v1037
      %v1211 = vpop.f32.mrb[0].mxu0
      %v1212 = vadd.f32 0.0, %v1211
      %v1213 = vpop.f32.mrb[0].mxu0
      %1214 = vmatprep.mubr.f32.mxu0 0.0
      %1215 = vmatmul.mubr.f32.gmra.mrb[0].mxu0 %v1039
      %v1216 = vpop.f32.mrb[0].mxu0
      %v1217 = vadd.f32 0.0, %v1216
      %v1218 = vpop.f32.mrb[0].mxu0
      %1219 = vmatprep.mubr.f32.mxu0 0.0
      %1220 = vmatmul.mubr.f32.gmra.mrb[0].mxu0 %v1041
      %v1221 = vpop.f32.mrb[0].mxu0
      %v1222 = vadd.f32 0.0, %v1221
      %v1223 = vpop.f32.mrb[0].mxu0
      %1224 = vmatprep.mubr.f32.mxu0 0.0
      %1225 = vmatmul.mubr.f32.gmra.mrb[0].mxu0 %v1043
      %v1226 = vpop.f32.mrb[0].mxu0
      %v1227 = vadd.f32 0.0, %v1226
      %v1228 = vpop.f32.mrb[0].mxu0
      %1229 = vmatprep.mubr.f32.mxu0 0.0
      %1230 = vmatmul.mubr.f32.gmra.mrb[0].mxu0 %v1045
      %v1231 = vpop.f32.mrb[0].mxu0
      %v1232 = vadd.f32 0.0, %v1231
      %v1233 = vpop.f32.mrb[0].mxu0
      %1234 = vmatprep.mubr.f32.mxu0 0.0
      %1235 = vmatmul.mubr.f32.gmra.mrb[0].mxu0 %v1047
      %v1236 = vpop.f32.mrb[0].mxu0
      %v1237 = vadd.f32 0.0, %v1236
      %v1238 = vpop.f32.mrb[0].mxu0
      %1239 = vmatprep.mubr.f32.mxu0 0.0
      %1240 = vmatmul.mubr.f32.gmra.mrb[0].mxu0 %v1049
      %v1241 = vpop.f32.mrb[0].mxu0
      %v1242 = vadd.f32 0.0, %v1241
      %v1243 = vpop.f32.mrb[0].mxu0
      %1244 = vmatprep.mubr.f32.mxu0 0.0
      %1245 = vmatmul.mubr.f32.gmra.mrb[0].mxu0 %v1051
      %v1246 = vpop.f32.mrb[0].mxu0
      %v1247 = vadd.f32 0.0, %v1246
      %v1248 = vpop.f32.mrb[0].mxu0
      %1249 = vmatprep.mubr.f32.mxu0 0.0
      %1250 = vmatmul.mubr.f32.gmra.mrb[0].mxu0 %v1053
      %v1251 = vpop.f32.mrb[0].mxu0
      %v1252 = vadd.f32 0.0, %v1251
      %v1253 = vpop.f32.mrb[0].mxu0
      %1254 = vmatprep.mubr.f32.mxu0 0.0
      %1255 = vmatmul.mubr.f32.gmra.mrb[0].mxu0 %v1055
      %v1256 = vpop.f32.mrb[0].mxu0
      %v1257 = vadd.f32 0.0, %v1256
      %v1258 = vpop.f32.mrb[0].mxu0
      %1259 = vmatprep.mubr.f32.mxu0 0.0
      %1260 = vmatmul.mubr.f32.gmra.mrb[0].mxu0 %v1057
      %v1261 = vpop.f32.mrb[0].mxu0
      %v1262 = vadd.f32 0.0, %v1261
      %v1263 = vpop.f32.mrb[0].mxu0
      %1264 = vmatprep.mubr.f32.mxu0 0.0
      %1265 = vmatmul.mubr.f32.gmra.mrb[0].mxu0 %v1059
      %v1266 = vpop.f32.mrb[0].mxu0
      %v1267 = vadd.f32 0.0, %v1266
      %v1268 = vpop.f32.mrb[0].mxu0
      %1269 = vmatprep.mubr.f32.mxu0 0.0
      %1270 = vmatmul.mubr.f32.gmra.mrb[0].mxu0 %v1061
      %v1271 = vpop.f32.mrb[0].mxu0
      %v1272 = vadd.f32 0.0, %v1271
      %v1273 = vpop.f32.mrb[0].mxu0
      %1274 = vmatprep.mubr.f32.mxu0 0.0
      %1275 = vmatmul.mubr.f32.gmra.mrb[0].mxu0 %v1063
      %v1276 = vpop.f32.mrb[0].mxu0
      %v1277 = vadd.f32 0.0, %v1276
      %v1278 = vpop.f32.mrb[0].mxu0
      %1279 = vmatprep.mubr.f32.mxu0 0.0
      %1280 = vmatmul.mubr.f32.gmra.mrb[0].mxu0 %v1065
      %v1281 = vpop.f32.mrb[0].mxu0
      %v1282 = vadd.f32 0.0, %v1281
      %v1283 = vpop.f32.mrb[0].mxu0
      %1284 = vmatprep.mubr.f32.mxu0 0.0
      %1285 = vmatmul.mubr.f32.gmra.mrb[0].mxu0 %v1067
      %v1286 = vpop.f32.mrb[0].mxu0
      %v1287 = vadd.f32 0.0, %v1286
      %v1288 = vpop.f32.mrb[0].mxu0
      %1289 = vmatprep.mubr.f32.mxu0 0.0
      %1290 = vmatmul.mubr.f32.gmra.mrb[0].mxu0 %v1069
      %v1291 = vpop.f32.mrb[0].mxu0
      %v1292 = vadd.f32 0.0, %v1291
      %v1293 = vpop.f32.mrb[0].mxu0
      %1294 = vmatprep.mubr.f32.mxu0 0.0
      %1295 = vmatmul.mubr.f32.gmra.mrb[0].mxu0 %v1071
      %v1296 = vpop.f32.mrb[0].mxu0
      %v1297 = vadd.f32 0.0, %v1296
      %v1298 = vpop.f32.mrb[0].mxu0
      %1299 = vmatprep.mubr.f32.mxu0 0.0
      %1300 = vmatmul.mubr.f32.gmra.mrb[0].mxu0 %v1073
      %v1301 = vpop.f32.mrb[0].mxu0
      %v1302 = vadd.f32 0.0, %v1301
      %v1303 = vpop.f32.mrb[0].mxu0
      %1304 = vmatprep.mubr.f32.mxu0 0.0
      %1305 = vmatmul.mubr.f32.gmra.mrb[0].mxu0 %v1075
      %v1306 = vpop.f32.mrb[0].mxu0
      %v1307 = vadd.f32 0.0, %v1306
      %v1308 = vpop.f32.mrb[0].mxu0
      %1309 = vmatprep.mubr.f32.mxu0 0.0
      %1310 = vmatmul.mubr.f32.gmra.mrb[0].mxu0 %v1077
      %v1311 = vpop.f32.mrb[0].mxu0
      %v1312 = vadd.f32 0.0, %v1311
      %v1313 = vpop.f32.mrb[0].mxu0
      %1314 = vmatprep.mubr.f32.mxu0 0.0
      %1315 = vmatmul.mubr.f32.gmra.mrb[0].mxu0 %v1079
      %v1316 = vpop.f32.mrb[0].mxu0
      %v1317 = vadd.f32 0.0, %v1316
      %v1318 = vpop.f32.mrb[0].mxu0
      %1319 = vmatprep.mubr.f32.mxu0 0.0
      %1320 = vmatmul.mubr.f32.gmra.mrb[0].mxu0 %v1081
      %v1321 = vpop.f32.mrb[0].mxu0
      %v1322 = vadd.f32 0.0, %v1321
      %v1323 = vpop.f32.mrb[0].mxu0
      %1324 = vmatprep.mubr.f32.mxu0 0.0
      %1325 = vmatmul.mubr.f32.gmra.mrb[0].mxu0 %v1083
      %v1326 = vpop.f32.mrb[0].mxu0
      %v1327 = vadd.f32 0.0, %v1326
      %v1328 = vpop.f32.mrb[0].mxu0
      %1329 = vmatprep.mubr.f32.mxu0 0.0
      %1330 = vmatmul.mubr.f32.gmra.mrb[0].mxu0 %v1085
      %v1331 = vpop.f32.mrb[0].mxu0
      %v1332 = vadd.f32 0.0, %v1331
      %v1333 = vpop.f32.mrb[0].mxu0
      %1334 = vdwg.mxu0
      %v1335 = vadd.f32 %v762, %v1157
      %v1336 = vadd.f32 %v767, %v1162
      %v1337 = vadd.f32 %v772, %v1167
      %v1338 = vadd.f32 %v777, %v1172
      %v1339 = vadd.f32 %v782, %v1177
      %v1340 = vadd.f32 %v787, %v1182
      %v1341 = vadd.f32 %v792, %v1187
      %v1342 = vadd.f32 %v797, %v1192
      %v1343 = vadd.f32 %v802, %v1197
      %v1344 = vadd.f32 %v807, %v1202
      %v1345 = vadd.f32 %v812, %v1207
      %v1346 = vadd.f32 %v817, %v1212
      %v1347 = vadd.f32 %v822, %v1217
      %v1348 = vadd.f32 %v827, %v1222
      %v1349 = vadd.f32 %v832, %v1227
      %v1350 = vadd.f32 %v837, %v1232
      %v1351 = vadd.f32 %v842, %v1237
      %v1352 = vadd.f32 %v847, %v1242
      %v1353 = vadd.f32 %v852, %v1247
      %v1354 = vadd.f32 %v857, %v1252
      %v1355 = vadd.f32 %v862, %v1257
      %v1356 = vadd.f32 %v867, %v1262
      %v1357 = vadd.f32 %v872, %v1267
      %v1358 = vadd.f32 %v877, %v1272
      %v1359 = vadd.f32 %v882, %v1277
      %v1360 = vadd.f32 %v887, %v1282
      %v1361 = vadd.f32 %v892, %v1287
      %v1362 = vadd.f32 %v897, %v1292
      %v1363 = vadd.f32 %v902, %v1297
      %v1364 = vadd.f32 %v907, %v1302
      %v1365 = vadd.f32 %v912, %v1307
      %v1366 = vadd.f32 %v917, %v1312
      %v1367 = vadd.f32 %v922, %v1317
      %v1368 = vadd.f32 %v927, %v1322
      %v1369 = vadd.f32 %v932, %v1327
      %v1370 = vadd.f32 %v937, %v1332
      %v1371 = vld [vmem:[%s1 + $0xc] sm:$0xf]
      %v1374 = vrot.slane %v181, 2
      %v1375 = vsel %vm941, %v1013, %v1374
      %v1376 = vrot.slane %v182, 2
      %v1377 = vsel %vm941, %v1374, %v1376
      %v1378 = vsel %vm298, %v1375, 0
      %v1380 = vsel %vm298, %v1377, 0
      %v1383 = vsel %vm371, %v1371, 0
      %1385 = vmatprep.subr.mxu0 0.0
      %1386 = vmatpush1.msra.mxu0 %v1383
      %1387 = vmatprep.subr.mxu0 0.0
      %1388 = vmatpush1.msra.mxu0 0.0
      %1389 = vmatprep.subr.mxu0 0.0
      %1390 = vmatpush1.msra.mxu0 0.0
      %1391 = vmatprep.subr.mxu0 0.0
      %1392 = vmatpush1.msra.mxu0 0.0
      %1393 = vmatprep.subr.mxu0 0.0
      %1394 = vmatpush1.msra.mxu0 0.0
      %1395 = vmatprep.subr.mxu0 0.0
      %1396 = vmatpush1.msra.mxu0 0.0
      %1397 = vmatprep.subr.mxu0 0.0
      %1398 = vmatpush1.msra.mxu0 0.0
      %1399 = vmatprep.subr.mxu0 0.0
      %1400 = vmatpush1.msra.mxu0 0.0
      %1401 = vmatprep.subr.mxu0 0.0
      %1402 = vmatpush1.msra.mxu0 0.0
      %1403 = vmatprep.subr.mxu0 0.0
      %1404 = vmatpush1.msra.mxu0 0.0
      %1405 = vmatprep.subr.mxu0 0.0
      %1406 = vmatpush1.msra.mxu0 0.0
      %1407 = vmatprep.subr.mxu0 0.0
      %1408 = vmatpush1.msra.mxu0 0.0
      %1409 = vmatprep.subr.mxu0 0.0
      %1410 = vmatpush1.msra.mxu0 0.0
      %1411 = vmatprep.subr.mxu0 0.0
      %1412 = vmatpush1.msra.mxu0 0.0
      %1413 = vmatprep.subr.mxu0 0.0
      %1414 = vmatpush1.msra.mxu0 0.0
      %1415 = vmatprep.subr.mxu0 0.0
      %1416 = vmatpush1.msra.mxu0 0.0
      %1417 = vmatprep.subr.mxu0 0.0
      %1418 = vmatpush1.msra.mxu0 0.0
      %1419 = vmatprep.subr.mxu0 0.0
      %1420 = vmatpush1.msra.mxu0 0.0
      %1421 = vmatprep.subr.mxu0 0.0
      %1422 = vmatpush1.msra.mxu0 0.0
      %1423 = vmatprep.subr.mxu0 0.0
      %1424 = vmatpush1.msra.mxu0 0.0
      %1425 = vmatprep.subr.mxu0 0.0
      %1426 = vmatpush1.msra.mxu0 0.0
      %1427 = vmatprep.subr.mxu0 0.0
      %1428 = vmatpush1.msra.mxu0 0.0
      %1429 = vmatprep.subr.mxu0 0.0
      %1430 = vmatpush1.msra.mxu0 0.0
      %1431 = vmatprep.subr.mxu0 0.0
      %1432 = vmatpush1.msra.mxu0 0.0
      %1433 = vmatprep.subr.mxu0 0.0
      %1434 = vmatpush1.msra.mxu0 0.0
      %1435 = vmatprep.subr.mxu0 0.0
      %1436 = vmatpush1.msra.mxu0 0.0
      %1437 = vmatprep.subr.mxu0 0.0
      %1438 = vmatpush1.msra.mxu0 0.0
      %1439 = vmatprep.subr.mxu0 0.0
      %1440 = vmatpush1.msra.mxu0 0.0
      %1441 = vmatprep.subr.mxu0 0.0
      %1442 = vmatpush1.msra.mxu0 0.0
      %1443 = vmatprep.subr.mxu0 0.0
      %1444 = vmatpush1.msra.mxu0 0.0
      %1445 = vmatprep.subr.mxu0 0.0
      %1446 = vmatpush1.msra.mxu0 0.0
      %1447 = vmatprep.subr.mxu0 0.0
      %1448 = vmatpush1.msra.mxu0 0.0
      %1449 = vmatprep.mubr.f32.mxu0 0.0
      %1450 = vmatmul.mubr.f32.gmra.mrb[0].mxu0 %v1019
      %v1451 = vpop.f32.mrb[0].mxu0
      %v1452 = vadd.f32 0.0, %v1451
      %v1453 = vpop.f32.mrb[0].mxu0
      %1454 = vmatprep.mubr.f32.mxu0 0.0
      %1455 = vmatmul.mubr.f32.gmra.mrb[0].mxu0 %v1021
      %v1456 = vpop.f32.mrb[0].mxu0
      %v1457 = vadd.f32 0.0, %v1456
      %v1458 = vpop.f32.mrb[0].mxu0
      %1459 = vmatprep.mubr.f32.mxu0 0.0
      %1460 = vmatmul.mubr.f32.gmra.mrb[0].mxu0 %v1023
      %v1461 = vpop.f32.mrb[0].mxu0
      %v1462 = vadd.f32 0.0, %v1461
      %v1463 = vpop.f32.mrb[0].mxu0
      %1464 = vmatprep.mubr.f32.mxu0 0.0
      %1465 = vmatmul.mubr.f32.gmra.mrb[0].mxu0 %v1025
      %v1466 = vpop.f32.mrb[0].mxu0
      %v1467 = vadd.f32 0.0, %v1466
      %v1468 = vpop.f32.mrb[0].mxu0
      %1469 = vmatprep.mubr.f32.mxu0 0.0
      %1470 = vmatmul.mubr.f32.gmra.mrb[0].mxu0 %v1027
      %v1471 = vpop.f32.mrb[0].mxu0
      %v1472 = vadd.f32 0.0, %v1471
      %v1473 = vpop.f32.mrb[0].mxu0
      %1474 = vmatprep.mubr.f32.mxu0 0.0
      %1475 = vmatmul.mubr.f32.gmra.mrb[0].mxu0 %v1029
      %v1476 = vpop.f32.mrb[0].mxu0
      %v1477 = vadd.f32 0.0, %v1476
      %v1478 = vpop.f32.mrb[0].mxu0
      %1479 = vmatprep.mubr.f32.mxu0 0.0
      %1480 = vmatmul.mubr.f32.gmra.mrb[0].mxu0 %v1031
      %v1481 = vpop.f32.mrb[0].mxu0
      %v1482 = vadd.f32 0.0, %v1481
      %v1483 = vpop.f32.mrb[0].mxu0
      %1484 = vmatprep.mubr.f32.mxu0 0.0
      %1485 = vmatmul.mubr.f32.gmra.mrb[0].mxu0 %v1033
      %v1486 = vpop.f32.mrb[0].mxu0
      %v1487 = vadd.f32 0.0, %v1486
      %v1488 = vpop.f32.mrb[0].mxu0
      %1489 = vmatprep.mubr.f32.mxu0 0.0
      %1490 = vmatmul.mubr.f32.gmra.mrb[0].mxu0 %v1035
      %v1491 = vpop.f32.mrb[0].mxu0
      %v1492 = vadd.f32 0.0, %v1491
      %v1493 = vpop.f32.mrb[0].mxu0
      %1494 = vmatprep.mubr.f32.mxu0 0.0
      %1495 = vmatmul.mubr.f32.gmra.mrb[0].mxu0 %v1037
      %v1496 = vpop.f32.mrb[0].mxu0
      %v1497 = vadd.f32 0.0, %v1496
      %v1498 = vpop.f32.mrb[0].mxu0
      %1499 = vmatprep.mubr.f32.mxu0 0.0
      %1500 = vmatmul.mubr.f32.gmra.mrb[0].mxu0 %v1039
      %v1501 = vpop.f32.mrb[0].mxu0
      %v1502 = vadd.f32 0.0, %v1501
      %v1503 = vpop.f32.mrb[0].mxu0
      %1504 = vmatprep.mubr.f32.mxu0 0.0
      %1505 = vmatmul.mubr.f32.gmra.mrb[0].mxu0 %v1041
      %v1506 = vpop.f32.mrb[0].mxu0
      %v1507 = vadd.f32 0.0, %v1506
      %v1508 = vpop.f32.mrb[0].mxu0
      %1509 = vmatprep.mubr.f32.mxu0 0.0
      %1510 = vmatmul.mubr.f32.gmra.mrb[0].mxu0 %v1043
      %v1511 = vpop.f32.mrb[0].mxu0
      %v1512 = vadd.f32 0.0, %v1511
      %v1513 = vpop.f32.mrb[0].mxu0
      %1514 = vmatprep.mubr.f32.mxu0 0.0
      %1515 = vmatmul.mubr.f32.gmra.mrb[0].mxu0 %v1045
      %v1516 = vpop.f32.mrb[0].mxu0
      %v1517 = vadd.f32 0.0, %v1516
      %v1518 = vpop.f32.mrb[0].mxu0
      %1519 = vmatprep.mubr.f32.mxu0 0.0
      %1520 = vmatmul.mubr.f32.gmra.mrb[0].mxu0 %v1047
      %v1521 = vpop.f32.mrb[0].mxu0
      %v1522 = vadd.f32 0.0, %v1521
      %v1523 = vpop.f32.mrb[0].mxu0
      %1524 = vmatprep.mubr.f32.mxu0 0.0
      %1525 = vmatmul.mubr.f32.gmra.mrb[0].mxu0 %v1049
      %v1526 = vpop.f32.mrb[0].mxu0
      %v1527 = vadd.f32 0.0, %v1526
      %v1528 = vpop.f32.mrb[0].mxu0
      %1529 = vmatprep.mubr.f32.mxu0 0.0
      %1530 = vmatmul.mubr.f32.gmra.mrb[0].mxu0 %v1051
      %v1531 = vpop.f32.mrb[0].mxu0
      %v1532 = vadd.f32 0.0, %v1531
      %v1533 = vpop.f32.mrb[0].mxu0
      %1534 = vmatprep.mubr.f32.mxu0 0.0
      %1535 = vmatmul.mubr.f32.gmra.mrb[0].mxu0 %v1053
      %v1536 = vpop.f32.mrb[0].mxu0
      %v1537 = vadd.f32 0.0, %v1536
      %v1538 = vpop.f32.mrb[0].mxu0
      %1539 = vmatprep.mubr.f32.mxu0 0.0
      %1540 = vmatmul.mubr.f32.gmra.mrb[0].mxu0 %v1055
      %v1541 = vpop.f32.mrb[0].mxu0
      %v1542 = vadd.f32 0.0, %v1541
      %v1543 = vpop.f32.mrb[0].mxu0
      %1544 = vmatprep.mubr.f32.mxu0 0.0
      %1545 = vmatmul.mubr.f32.gmra.mrb[0].mxu0 %v1057
      %v1546 = vpop.f32.mrb[0].mxu0
      %v1547 = vadd.f32 0.0, %v1546
      %v1548 = vpop.f32.mrb[0].mxu0
      %1549 = vmatprep.mubr.f32.mxu0 0.0
      %1550 = vmatmul.mubr.f32.gmra.mrb[0].mxu0 %v1059
      %v1551 = vpop.f32.mrb[0].mxu0
      %v1552 = vadd.f32 0.0, %v1551
      %v1553 = vpop.f32.mrb[0].mxu0
      %1554 = vmatprep.mubr.f32.mxu0 0.0
      %1555 = vmatmul.mubr.f32.gmra.mrb[0].mxu0 %v1061
      %v1556 = vpop.f32.mrb[0].mxu0
      %v1557 = vadd.f32 0.0, %v1556
      %v1558 = vpop.f32.mrb[0].mxu0
      %1559 = vmatprep.mubr.f32.mxu0 0.0
      %1560 = vmatmul.mubr.f32.gmra.mrb[0].mxu0 %v1063
      %v1561 = vpop.f32.mrb[0].mxu0
      %v1562 = vadd.f32 0.0, %v1561
      %v1563 = vpop.f32.mrb[0].mxu0
      %1564 = vmatprep.mubr.f32.mxu0 0.0
      %1565 = vmatmul.mubr.f32.gmra.mrb[0].mxu0 %v1065
      %v1566 = vpop.f32.mrb[0].mxu0
      %v1567 = vadd.f32 0.0, %v1566
      %v1568 = vpop.f32.mrb[0].mxu0
      %1569 = vmatprep.mubr.f32.mxu0 0.0
      %1570 = vmatmul.mubr.f32.gmra.mrb[0].mxu0 %v1067
      %v1571 = vpop.f32.mrb[0].mxu0
      %v1572 = vadd.f32 0.0, %v1571
      %v1573 = vpop.f32.mrb[0].mxu0
      %1574 = vmatprep.mubr.f32.mxu0 0.0
      %1575 = vmatmul.mubr.f32.gmra.mrb[0].mxu0 %v1069
      %v1576 = vpop.f32.mrb[0].mxu0
      %v1577 = vadd.f32 0.0, %v1576
      %v1578 = vpop.f32.mrb[0].mxu0
      %1579 = vmatprep.mubr.f32.mxu0 0.0
      %1580 = vmatmul.mubr.f32.gmra.mrb[0].mxu0 %v1071
      %v1581 = vpop.f32.mrb[0].mxu0
      %v1582 = vadd.f32 0.0, %v1581
      %v1583 = vpop.f32.mrb[0].mxu0
      %1584 = vmatprep.mubr.f32.mxu0 0.0
      %1585 = vmatmul.mubr.f32.gmra.mrb[0].mxu0 %v1073
      %v1586 = vpop.f32.mrb[0].mxu0
      %v1587 = vadd.f32 0.0, %v1586
      %v1588 = vpop.f32.mrb[0].mxu0
      %1589 = vmatprep.mubr.f32.mxu0 0.0
      %1590 = vmatmul.mubr.f32.gmra.mrb[0].mxu0 %v1075
      %v1591 = vpop.f32.mrb[0].mxu0
      %v1592 = vadd.f32 0.0, %v1591
      %v1593 = vpop.f32.mrb[0].mxu0
      %1594 = vmatprep.mubr.f32.mxu0 0.0
      %1595 = vmatmul.mubr.f32.gmra.mrb[0].mxu0 %v1077
      %v1596 = vpop.f32.mrb[0].mxu0
      %v1597 = vadd.f32 0.0, %v1596
      %v1598 = vpop.f32.mrb[0].mxu0
      %1599 = vmatprep.mubr.f32.mxu0 0.0
      %1600 = vmatmul.mubr.f32.gmra.mrb[0].mxu0 %v1079
      %v1601 = vpop.f32.mrb[0].mxu0
      %v1602 = vadd.f32 0.0, %v1601
      %v1603 = vpop.f32.mrb[0].mxu0
      %1604 = vmatprep.mubr.f32.mxu0 0.0
      %1605 = vmatmul.mubr.f32.gmra.mrb[0].mxu0 %v1081
      %v1606 = vpop.f32.mrb[0].mxu0
      %v1607 = vadd.f32 0.0, %v1606
      %v1608 = vpop.f32.mrb[0].mxu0
      %1609 = vmatprep.mubr.f32.mxu0 0.0
      %1610 = vmatmul.mubr.f32.gmra.mrb[0].mxu0 %v1083
      %v1611 = vpop.f32.mrb[0].mxu0
      %v1612 = vadd.f32 0.0, %v1611
      %v1613 = vpop.f32.mrb[0].mxu0
      %1614 = vmatprep.mubr.f32.mxu0 0.0
      %1615 = vmatmul.mubr.f32.gmra.mrb[0].mxu0 %v1085
      %v1616 = vpop.f32.mrb[0].mxu0
      %v1617 = vadd.f32 0.0, %v1616
      %v1618 = vpop.f32.mrb[0].mxu0
      %1619 = vmatprep.mubr.f32.mxu0 0.0
      %1620 = vmatmul.mubr.f32.gmra.mrb[0].mxu0 %v1378
      %v1621 = vpop.f32.mrb[0].mxu0
      %v1622 = vadd.f32 0.0, %v1621
      %v1623 = vpop.f32.mrb[0].mxu0
      %1624 = vmatprep.mubr.f32.mxu0 0.0
      %1625 = vmatmul.mubr.f32.gmra.mrb[0].mxu0 %v1380
      %v1626 = vpop.f32.mrb[0].mxu0
      %v1627 = vadd.f32 0.0, %v1626
      %v1628 = vpop.f32.mrb[0].mxu0
      %1629 = vdwg.mxu0
      %v1630 = vadd.f32 %v1335, %v1452
      %v1631 = vadd.f32 %v1336, %v1457
      %v1632 = vadd.f32 %v1337, %v1462
      %v1633 = vadd.f32 %v1338, %v1467
      %v1634 = vadd.f32 %v1339, %v1472
      %v1635 = vadd.f32 %v1340, %v1477
      %v1636 = vadd.f32 %v1341, %v1482
      %v1637 = vadd.f32 %v1342, %v1487
      %v1638 = vadd.f32 %v1343, %v1492
      %v1639 = vadd.f32 %v1344, %v1497
      %v1640 = vadd.f32 %v1345, %v1502
      %v1641 = vadd.f32 %v1346, %v1507
      %v1642 = vadd.f32 %v1347, %v1512
      %v1643 = vadd.f32 %v1348, %v1517
      %v1644 = vadd.f32 %v1349, %v1522
      %v1645 = vadd.f32 %v1350, %v1527
      %v1646 = vadd.f32 %v1351, %v1532
      %v1647 = vadd.f32 %v1352, %v1537
      %v1648 = vadd.f32 %v1353, %v1542
      %v1649 = vadd.f32 %v1354, %v1547
      %v1650 = vadd.f32 %v1355, %v1552
      %v1651 = vadd.f32 %v1356, %v1557
      %v1652 = vadd.f32 %v1357, %v1562
      %v1653 = vadd.f32 %v1358, %v1567
      %v1654 = vadd.f32 %v1359, %v1572
      %v1655 = vadd.f32 %v1360, %v1577
      %v1656 = vadd.f32 %v1361, %v1582
      %v1657 = vadd.f32 %v1362, %v1587
      %v1658 = vadd.f32 %v1363, %v1592
      %v1659 = vadd.f32 %v1364, %v1597
      %v1660 = vadd.f32 %v1365, %v1602
      %v1661 = vadd.f32 %v1366, %v1607
      %v1662 = vadd.f32 %v1367, %v1612
      %v1663 = vadd.f32 %v1368, %v1617
      %v1664 = vadd.f32 %v1369, %v1622
      %v1665 = vadd.f32 %v1370, %v1627
      %v1666 = vld [vmem:[%s1 + $0x10] sm:$0xf]
      %vm1667 = vcmask 1044480
      %v1668 = vrot.slane %v146, 3
      %v1669 = vrot.slane %v147, 3
      %v1670 = vsel %vm1667, %v1668, %v1669
      %v1671 = vrot.slane %v148, 3
      %v1672 = vsel %vm1667, %v1669, %v1671
      %v1673 = vrot.slane %v149, 3
      %v1674 = vsel %vm1667, %v1671, %v1673
      %v1675 = vrot.slane %v150, 3
      %v1676 = vsel %vm1667, %v1673, %v1675
      %v1677 = vrot.slane %v151, 3
      %v1678 = vsel %vm1667, %v1675, %v1677
      %v1679 = vrot.slane %v152, 3
      %v1680 = vsel %vm1667, %v1677, %v1679
      %v1681 = vrot.slane %v153, 3
      %v1682 = vsel %vm1667, %v1679, %v1681
      %v1683 = vrot.slane %v154, 3
      %v1684 = vsel %vm1667, %v1681, %v1683
      %v1685 = vrot.slane %v155, 3
      %v1686 = vsel %vm1667, %v1683, %v1685
      %v1687 = vrot.slane %v156, 3
      %v1688 = vsel %vm1667, %v1685, %v1687
      %v1689 = vrot.slane %v157, 3
      %v1690 = vsel %vm1667, %v1687, %v1689
      %v1691 = vrot.slane %v158, 3
      %v1692 = vsel %vm1667, %v1689, %v1691
      %v1693 = vrot.slane %v159, 3
      %v1694 = vsel %vm1667, %v1691, %v1693
      %v1695 = vrot.slane %v160, 3
      %v1696 = vsel %vm1667, %v1693, %v1695
      %v1697 = vrot.slane %v161, 3
      %v1698 = vsel %vm1667, %v1695, %v1697
      %v1699 = vrot.slane %v162, 3
      %v1700 = vsel %vm1667, %v1697, %v1699
      %v1701 = vrot.slane %v163, 3
      %v1702 = vsel %vm1667, %v1699, %v1701
      %v1703 = vrot.slane %v164, 3
      %v1704 = vsel %vm1667, %v1701, %v1703
      %v1705 = vrot.slane %v165, 3
      %v1706 = vsel %vm1667, %v1703, %v1705
      %v1707 = vrot.slane %v166, 3
      %v1708 = vsel %vm1667, %v1705, %v1707
      %v1709 = vrot.slane %v167, 3
      %v1710 = vsel %vm1667, %v1707, %v1709
      %v1711 = vrot.slane %v168, 3
      %v1712 = vsel %vm1667, %v1709, %v1711
      %v1713 = vrot.slane %v169, 3
      %v1714 = vsel %vm1667, %v1711, %v1713
      %v1715 = vrot.slane %v170, 3
      %v1716 = vsel %vm1667, %v1713, %v1715
      %v1717 = vrot.slane %v171, 3
      %v1718 = vsel %vm1667, %v1715, %v1717
      %v1719 = vrot.slane %v172, 3
      %v1720 = vsel %vm1667, %v1717, %v1719
      %v1721 = vrot.slane %v173, 3
      %v1722 = vsel %vm1667, %v1719, %v1721
      %v1723 = vrot.slane %v174, 3
      %v1724 = vsel %vm1667, %v1721, %v1723
      %v1725 = vrot.slane %v175, 3
      %v1726 = vsel %vm1667, %v1723, %v1725
      %v1727 = vrot.slane %v176, 3
      %v1728 = vsel %vm1667, %v1725, %v1727
      %v1729 = vrot.slane %v177, 3
      %v1730 = vsel %vm1667, %v1727, %v1729
      %v1731 = vrot.slane %v178, 3
      %v1732 = vsel %vm1667, %v1729, %v1731
      %v1733 = vrot.slane %v179, 3
      %v1734 = vsel %vm1667, %v1731, %v1733
      %v1735 = vrot.slane %v180, 3
      %v1736 = vsel %vm1667, %v1733, %v1735
      %v1737 = vrot.slane %v181, 3
      %v1738 = vsel %vm1667, %v1735, %v1737
      %v1739 = vrot.slane %v182, 3
      %v1740 = vsel %vm1667, %v1737, %v1739
      %v1741 = vsel %vm298, %v1670, 0
      %v1743 = vsel %vm298, %v1672, 0
      %v1745 = vsel %vm298, %v1674, 0
      %v1747 = vsel %vm298, %v1676, 0
      %v1749 = vsel %vm298, %v1678, 0
      %v1751 = vsel %vm298, %v1680, 0
      %v1753 = vsel %vm298, %v1682, 0
      %v1755 = vsel %vm298, %v1684, 0
      %v1757 = vsel %vm298, %v1686, 0
      %v1759 = vsel %vm298, %v1688, 0
      %v1761 = vsel %vm298, %v1690, 0
      %v1763 = vsel %vm298, %v1692, 0
      %v1765 = vsel %vm298, %v1694, 0
      %v1767 = vsel %vm298, %v1696, 0
      %v1769 = vsel %vm298, %v1698, 0
      %v1771 = vsel %vm298, %v1700, 0
      %v1773 = vsel %vm298, %v1702, 0
      %v1775 = vsel %vm298, %v1704, 0
      %v1777 = vsel %vm298, %v1706, 0
      %v1779 = vsel %vm298, %v1708, 0
      %v1781 = vsel %vm298, %v1710, 0
      %v1783 = vsel %vm298, %v1712, 0
      %v1785 = vsel %vm298, %v1714, 0
      %v1787 = vsel %vm298, %v1716, 0
      %v1789 = vsel %vm298, %v1718, 0
      %v1791 = vsel %vm298, %v1720, 0
      %v1793 = vsel %vm298, %v1722, 0
      %v1795 = vsel %vm298, %v1724, 0
      %v1797 = vsel %vm298, %v1726, 0
      %v1799 = vsel %vm298, %v1728, 0
      %v1801 = vsel %vm298, %v1730, 0
      %v1803 = vsel %vm298, %v1732, 0
      %v1805 = vsel %vm298, %v1734, 0
      %v1807 = vsel %vm298, %v1736, 0
      %v1809 = vsel %vm298, %v1738, 0
      %v1811 = vsel %vm298, %v1740, 0
      %v1814 = vsel %vm371, %v1666, 0
      %1816 = vmatprep.subr.mxu0 0.0
      %1817 = vmatpush1.msra.mxu0 %v1814
      %1818 = vmatprep.subr.mxu0 0.0
      %1819 = vmatpush1.msra.mxu0 0.0
      %1820 = vmatprep.subr.mxu0 0.0
      %1821 = vmatpush1.msra.mxu0 0.0
      %1822 = vmatprep.subr.mxu0 0.0
      %1823 = vmatpush1.msra.mxu0 0.0
      %1824 = vmatprep.subr.mxu0 0.0
      %1825 = vmatpush1.msra.mxu0 0.0
      %1826 = vmatprep.subr.mxu0 0.0
      %1827 = vmatpush1.msra.mxu0 0.0
      %1828 = vmatprep.subr.mxu0 0.0
      %1829 = vmatpush1.msra.mxu0 0.0
      %1830 = vmatprep.subr.mxu0 0.0
      %1831 = vmatpush1.msra.mxu0 0.0
      %1832 = vmatprep.subr.mxu0 0.0
      %1833 = vmatpush1.msra.mxu0 0.0
      %1834 = vmatprep.subr.mxu0 0.0
      %1835 = vmatpush1.msra.mxu0 0.0
      %1836 = vmatprep.subr.mxu0 0.0
      %1837 = vmatpush1.msra.mxu0 0.0
      %1838 = vmatprep.subr.mxu0 0.0
      %1839 = vmatpush1.msra.mxu0 0.0
      %1840 = vmatprep.subr.mxu0 0.0
      %1841 = vmatpush1.msra.mxu0 0.0
      %1842 = vmatprep.subr.mxu0 0.0
      %1843 = vmatpush1.msra.mxu0 0.0
      %1844 = vmatprep.subr.mxu0 0.0
      %1845 = vmatpush1.msra.mxu0 0.0
      %1846 = vmatprep.subr.mxu0 0.0
      %1847 = vmatpush1.msra.mxu0 0.0
      %1848 = vmatprep.subr.mxu0 0.0
      %1849 = vmatpush1.msra.mxu0 0.0
      %1850 = vmatprep.subr.mxu0 0.0
      %1851 = vmatpush1.msra.mxu0 0.0
      %1852 = vmatprep.subr.mxu0 0.0
      %1853 = vmatpush1.msra.mxu0 0.0
      %1854 = vmatprep.subr.mxu0 0.0
      %1855 = vmatpush1.msra.mxu0 0.0
      %1856 = vmatprep.subr.mxu0 0.0
      %1857 = vmatpush1.msra.mxu0 0.0
      %1858 = vmatprep.subr.mxu0 0.0
      %1859 = vmatpush1.msra.mxu0 0.0
      %1860 = vmatprep.subr.mxu0 0.0
      %1861 = vmatpush1.msra.mxu0 0.0
      %1862 = vmatprep.subr.mxu0 0.0
      %1863 = vmatpush1.msra.mxu0 0.0
      %1864 = vmatprep.subr.mxu0 0.0
      %1865 = vmatpush1.msra.mxu0 0.0
      %1866 = vmatprep.subr.mxu0 0.0
      %1867 = vmatpush1.msra.mxu0 0.0
      %1868 = vmatprep.subr.mxu0 0.0
      %1869 = vmatpush1.msra.mxu0 0.0
      %1870 = vmatprep.subr.mxu0 0.0
      %1871 = vmatpush1.msra.mxu0 0.0
      %1872 = vmatprep.subr.mxu0 0.0
      %1873 = vmatpush1.msra.mxu0 0.0
      %1874 = vmatprep.subr.mxu0 0.0
      %1875 = vmatpush1.msra.mxu0 0.0
      %1876 = vmatprep.subr.mxu0 0.0
      %1877 = vmatpush1.msra.mxu0 0.0
      %1878 = vmatprep.subr.mxu0 0.0
      %1879 = vmatpush1.msra.mxu0 0.0
      %1880 = vmatprep.mubr.f32.mxu0 0.0
      %1881 = vmatmul.mubr.f32.gmra.mrb[0].mxu0 %v1741
      %v1882 = vpop.f32.mrb[0].mxu0
      %v1883 = vadd.f32 0.0, %v1882
      %v1884 = vpop.f32.mrb[0].mxu0
      %1885 = vmatprep.mubr.f32.mxu0 0.0
      %1886 = vmatmul.mubr.f32.gmra.mrb[0].mxu0 %v1743
      %v1887 = vpop.f32.mrb[0].mxu0
      %v1888 = vadd.f32 0.0, %v1887
      %v1889 = vpop.f32.mrb[0].mxu0
      %1890 = vmatprep.mubr.f32.mxu0 0.0
      %1891 = vmatmul.mubr.f32.gmra.mrb[0].mxu0 %v1745
      %v1892 = vpop.f32.mrb[0].mxu0
      %v1893 = vadd.f32 0.0, %v1892
      %v1894 = vpop.f32.mrb[0].mxu0
      %1895 = vmatprep.mubr.f32.mxu0 0.0
      %1896 = vmatmul.mubr.f32.gmra.mrb[0].mxu0 %v1747
      %v1897 = vpop.f32.mrb[0].mxu0
      %v1898 = vadd.f32 0.0, %v1897
      %v1899 = vpop.f32.mrb[0].mxu0
      %1900 = vmatprep.mubr.f32.mxu0 0.0
      %1901 = vmatmul.mubr.f32.gmra.mrb[0].mxu0 %v1749
      %v1902 = vpop.f32.mrb[0].mxu0
      %v1903 = vadd.f32 0.0, %v1902
      %v1904 = vpop.f32.mrb[0].mxu0
      %1905 = vmatprep.mubr.f32.mxu0 0.0
      %1906 = vmatmul.mubr.f32.gmra.mrb[0].mxu0 %v1751
      %v1907 = vpop.f32.mrb[0].mxu0
      %v1908 = vadd.f32 0.0, %v1907
      %v1909 = vpop.f32.mrb[0].mxu0
      %1910 = vmatprep.mubr.f32.mxu0 0.0
      %1911 = vmatmul.mubr.f32.gmra.mrb[0].mxu0 %v1753
      %v1912 = vpop.f32.mrb[0].mxu0
      %v1913 = vadd.f32 0.0, %v1912
      %v1914 = vpop.f32.mrb[0].mxu0
      %1915 = vmatprep.mubr.f32.mxu0 0.0
      %1916 = vmatmul.mubr.f32.gmra.mrb[0].mxu0 %v1755
      %v1917 = vpop.f32.mrb[0].mxu0
      %v1918 = vadd.f32 0.0, %v1917
      %v1919 = vpop.f32.mrb[0].mxu0
      %1920 = vmatprep.mubr.f32.mxu0 0.0
      %1921 = vmatmul.mubr.f32.gmra.mrb[0].mxu0 %v1757
      %v1922 = vpop.f32.mrb[0].mxu0
      %v1923 = vadd.f32 0.0, %v1922
      %v1924 = vpop.f32.mrb[0].mxu0
      %1925 = vmatprep.mubr.f32.mxu0 0.0
      %1926 = vmatmul.mubr.f32.gmra.mrb[0].mxu0 %v1759
      %v1927 = vpop.f32.mrb[0].mxu0
      %v1928 = vadd.f32 0.0, %v1927
      %v1929 = vpop.f32.mrb[0].mxu0
      %1930 = vmatprep.mubr.f32.mxu0 0.0
      %1931 = vmatmul.mubr.f32.gmra.mrb[0].mxu0 %v1761
      %v1932 = vpop.f32.mrb[0].mxu0
      %v1933 = vadd.f32 0.0, %v1932
      %v1934 = vpop.f32.mrb[0].mxu0
      %1935 = vmatprep.mubr.f32.mxu0 0.0
      %1936 = vmatmul.mubr.f32.gmra.mrb[0].mxu0 %v1763
      %v1937 = vpop.f32.mrb[0].mxu0
      %v1938 = vadd.f32 0.0, %v1937
      %v1939 = vpop.f32.mrb[0].mxu0
      %1940 = vmatprep.mubr.f32.mxu0 0.0
      %1941 = vmatmul.mubr.f32.gmra.mrb[0].mxu0 %v1765
      %v1942 = vpop.f32.mrb[0].mxu0
      %v1943 = vadd.f32 0.0, %v1942
      %v1944 = vpop.f32.mrb[0].mxu0
      %1945 = vmatprep.mubr.f32.mxu0 0.0
      %1946 = vmatmul.mubr.f32.gmra.mrb[0].mxu0 %v1767
      %v1947 = vpop.f32.mrb[0].mxu0
      %v1948 = vadd.f32 0.0, %v1947
      %v1949 = vpop.f32.mrb[0].mxu0
      %1950 = vmatprep.mubr.f32.mxu0 0.0
      %1951 = vmatmul.mubr.f32.gmra.mrb[0].mxu0 %v1769
      %v1952 = vpop.f32.mrb[0].mxu0
      %v1953 = vadd.f32 0.0, %v1952
      %v1954 = vpop.f32.mrb[0].mxu0
      %1955 = vmatprep.mubr.f32.mxu0 0.0
      %1956 = vmatmul.mubr.f32.gmra.mrb[0].mxu0 %v1771
      %v1957 = vpop.f32.mrb[0].mxu0
      %v1958 = vadd.f32 0.0, %v1957
      %v1959 = vpop.f32.mrb[0].mxu0
      %1960 = vmatprep.mubr.f32.mxu0 0.0
      %1961 = vmatmul.mubr.f32.gmra.mrb[0].mxu0 %v1773
      %v1962 = vpop.f32.mrb[0].mxu0
      %v1963 = vadd.f32 0.0, %v1962
      %v1964 = vpop.f32.mrb[0].mxu0
      %1965 = vmatprep.mubr.f32.mxu0 0.0
      %1966 = vmatmul.mubr.f32.gmra.mrb[0].mxu0 %v1775
      %v1967 = vpop.f32.mrb[0].mxu0
      %v1968 = vadd.f32 0.0, %v1967
      %v1969 = vpop.f32.mrb[0].mxu0
      %1970 = vmatprep.mubr.f32.mxu0 0.0
      %1971 = vmatmul.mubr.f32.gmra.mrb[0].mxu0 %v1777
      %v1972 = vpop.f32.mrb[0].mxu0
      %v1973 = vadd.f32 0.0, %v1972
      %v1974 = vpop.f32.mrb[0].mxu0
      %1975 = vmatprep.mubr.f32.mxu0 0.0
      %1976 = vmatmul.mubr.f32.gmra.mrb[0].mxu0 %v1779
      %v1977 = vpop.f32.mrb[0].mxu0
      %v1978 = vadd.f32 0.0, %v1977
      %v1979 = vpop.f32.mrb[0].mxu0
      %1980 = vmatprep.mubr.f32.mxu0 0.0
      %1981 = vmatmul.mubr.f32.gmra.mrb[0].mxu0 %v1781
      %v1982 = vpop.f32.mrb[0].mxu0
      %v1983 = vadd.f32 0.0, %v1982
      %v1984 = vpop.f32.mrb[0].mxu0
      %1985 = vmatprep.mubr.f32.mxu0 0.0
      %1986 = vmatmul.mubr.f32.gmra.mrb[0].mxu0 %v1783
      %v1987 = vpop.f32.mrb[0].mxu0
      %v1988 = vadd.f32 0.0, %v1987
      %v1989 = vpop.f32.mrb[0].mxu0
      %1990 = vmatprep.mubr.f32.mxu0 0.0
      %1991 = vmatmul.mubr.f32.gmra.mrb[0].mxu0 %v1785
      %v1992 = vpop.f32.mrb[0].mxu0
      %v1993 = vadd.f32 0.0, %v1992
      %v1994 = vpop.f32.mrb[0].mxu0
      %1995 = vmatprep.mubr.f32.mxu0 0.0
      %1996 = vmatmul.mubr.f32.gmra.mrb[0].mxu0 %v1787
      %v1997 = vpop.f32.mrb[0].mxu0
      %v1998 = vadd.f32 0.0, %v1997
      %v1999 = vpop.f32.mrb[0].mxu0
      %2000 = vmatprep.mubr.f32.mxu0 0.0
      %2001 = vmatmul.mubr.f32.gmra.mrb[0].mxu0 %v1789
      %v2002 = vpop.f32.mrb[0].mxu0
      %v2003 = vadd.f32 0.0, %v2002
      %v2004 = vpop.f32.mrb[0].mxu0
      %2005 = vmatprep.mubr.f32.mxu0 0.0
      %2006 = vmatmul.mubr.f32.gmra.mrb[0].mxu0 %v1791
      %v2007 = vpop.f32.mrb[0].mxu0
      %v2008 = vadd.f32 0.0, %v2007
      %v2009 = vpop.f32.mrb[0].mxu0
      %2010 = vmatprep.mubr.f32.mxu0 0.0
      %2011 = vmatmul.mubr.f32.gmra.mrb[0].mxu0 %v1793
      %v2012 = vpop.f32.mrb[0].mxu0
      %v2013 = vadd.f32 0.0, %v2012
      %v2014 = vpop.f32.mrb[0].mxu0
      %2015 = vmatprep.mubr.f32.mxu0 0.0
      %2016 = vmatmul.mubr.f32.gmra.mrb[0].mxu0 %v1795
      %v2017 = vpop.f32.mrb[0].mxu0
      %v2018 = vadd.f32 0.0, %v2017
      %v2019 = vpop.f32.mrb[0].mxu0
      %2020 = vmatprep.mubr.f32.mxu0 0.0
      %2021 = vmatmul.mubr.f32.gmra.mrb[0].mxu0 %v1797
      %v2022 = vpop.f32.mrb[0].mxu0
      %v2023 = vadd.f32 0.0, %v2022
      %v2024 = vpop.f32.mrb[0].mxu0
      %2025 = vmatprep.mubr.f32.mxu0 0.0
      %2026 = vmatmul.mubr.f32.gmra.mrb[0].mxu0 %v1799
      %v2027 = vpop.f32.mrb[0].mxu0
      %v2028 = vadd.f32 0.0, %v2027
      %v2029 = vpop.f32.mrb[0].mxu0
      %2030 = vmatprep.mubr.f32.mxu0 0.0
      %2031 = vmatmul.mubr.f32.gmra.mrb[0].mxu0 %v1801
      %v2032 = vpop.f32.mrb[0].mxu0
      %v2033 = vadd.f32 0.0, %v2032
      %v2034 = vpop.f32.mrb[0].mxu0
      %2035 = vmatprep.mubr.f32.mxu0 0.0
      %2036 = vmatmul.mubr.f32.gmra.mrb[0].mxu0 %v1803
      %v2037 = vpop.f32.mrb[0].mxu0
      %v2038 = vadd.f32 0.0, %v2037
      %v2039 = vpop.f32.mrb[0].mxu0
      %2040 = vmatprep.mubr.f32.mxu0 0.0
      %2041 = vmatmul.mubr.f32.gmra.mrb[0].mxu0 %v1805
      %v2042 = vpop.f32.mrb[0].mxu0
      %v2043 = vadd.f32 0.0, %v2042
      %v2044 = vpop.f32.mrb[0].mxu0
      %2045 = vmatprep.mubr.f32.mxu0 0.0
      %2046 = vmatmul.mubr.f32.gmra.mrb[0].mxu0 %v1807
      %v2047 = vpop.f32.mrb[0].mxu0
      %v2048 = vadd.f32 0.0, %v2047
      %v2049 = vpop.f32.mrb[0].mxu0
      %2050 = vmatprep.mubr.f32.mxu0 0.0
      %2051 = vmatmul.mubr.f32.gmra.mrb[0].mxu0 %v1809
      %v2052 = vpop.f32.mrb[0].mxu0
      %v2053 = vadd.f32 0.0, %v2052
      %v2054 = vpop.f32.mrb[0].mxu0
      %2055 = vmatprep.mubr.f32.mxu0 0.0
      %2056 = vmatmul.mubr.f32.gmra.mrb[0].mxu0 %v1811
      %v2057 = vpop.f32.mrb[0].mxu0
      %v2058 = vadd.f32 0.0, %v2057
      %v2059 = vpop.f32.mrb[0].mxu0
      %2060 = vdwg.mxu0
      %v2061 = vadd.f32 %v1630, %v1883
      %v2062 = vadd.f32 %v1631, %v1888
      %v2063 = vadd.f32 %v1632, %v1893
      %v2064 = vadd.f32 %v1633, %v1898
      %v2065 = vadd.f32 %v1634, %v1903
      %v2066 = vadd.f32 %v1635, %v1908
      %v2067 = vadd.f32 %v1636, %v1913
      %v2068 = vadd.f32 %v1637, %v1918
      %v2069 = vadd.f32 %v1638, %v1923
      %v2070 = vadd.f32 %v1639, %v1928
      %v2071 = vadd.f32 %v1640, %v1933
      %v2072 = vadd.f32 %v1641, %v1938
      %v2073 = vadd.f32 %v1642, %v1943
      %v2074 = vadd.f32 %v1643, %v1948
      %v2075 = vadd.f32 %v1644, %v1953
      %v2076 = vadd.f32 %v1645, %v1958
      %v2077 = vadd.f32 %v1646, %v1963
      %v2078 = vadd.f32 %v1647, %v1968
      %v2079 = vadd.f32 %v1648, %v1973
      %v2080 = vadd.f32 %v1649, %v1978
      %v2081 = vadd.f32 %v1650, %v1983
      %v2082 = vadd.f32 %v1651, %v1988
      %v2083 = vadd.f32 %v1652, %v1993
      %v2084 = vadd.f32 %v1653, %v1998
      %v2085 = vadd.f32 %v1654, %v2003
      %v2086 = vadd.f32 %v1655, %v2008
      %v2087 = vadd.f32 %v1656, %v2013
      %v2088 = vadd.f32 %v1657, %v2018
      %v2089 = vadd.f32 %v1658, %v2023
      %v2090 = vadd.f32 %v1659, %v2028
      %v2091 = vadd.f32 %v1660, %v2033
      %v2092 = vadd.f32 %v1661, %v2038
      %v2093 = vadd.f32 %v1662, %v2043
      %v2094 = vadd.f32 %v1663, %v2048
      %v2095 = vadd.f32 %v1664, %v2053
      %v2096 = vadd.f32 %v1665, %v2058
      %v2097 = vld [vmem:[%s1 + $0x14] sm:$0xf]
      %v2098 = vrot.slane %v146, 4
      %v2099 = vrot.slane %v147, 4
      %v2100 = vsel %vm371, %v2098, %v2099
      %v2101 = vrot.slane %v148, 4
      %v2102 = vsel %vm371, %v2099, %v2101
      %v2103 = vrot.slane %v149, 4
      %v2104 = vsel %vm371, %v2101, %v2103
      %v2105 = vrot.slane %v150, 4
      %v2106 = vsel %vm371, %v2103, %v2105
      %v2107 = vrot.slane %v151, 4
      %v2108 = vsel %vm371, %v2105, %v2107
      %v2109 = vrot.slane %v152, 4
      %v2110 = vsel %vm371, %v2107, %v2109
      %v2111 = vrot.slane %v153, 4
      %v2112 = vsel %vm371, %v2109, %v2111
      %v2113 = vrot.slane %v154, 4
      %v2114 = vsel %vm371, %v2111, %v2113
      %v2115 = vrot.slane %v155, 4
      %v2116 = vsel %vm371, %v2113, %v2115
      %v2117 = vrot.slane %v156, 4
      %v2118 = vsel %vm371, %v2115, %v2117
      %v2119 = vrot.slane %v157, 4
      %v2120 = vsel %vm371, %v2117, %v2119
      %v2121 = vrot.slane %v158, 4
      %v2122 = vsel %vm371, %v2119, %v2121
      %v2123 = vrot.slane %v159, 4
      %v2124 = vsel %vm371, %v2121, %v2123
      %v2125 = vrot.slane %v160, 4
      %v2126 = vsel %vm371, %v2123, %v2125
      %v2127 = vrot.slane %v161, 4
      %v2128 = vsel %vm371, %v2125, %v2127
      %v2129 = vrot.slane %v162, 4
      %v2130 = vsel %vm371, %v2127, %v2129
      %v2131 = vrot.slane %v163, 4
      %v2132 = vsel %vm371, %v2129, %v2131
      %v2133 = vrot.slane %v164, 4
      %v2134 = vsel %vm371, %v2131, %v2133
      %v2135 = vrot.slane %v165, 4
      %v2136 = vsel %vm371, %v2133, %v2135
      %v2137 = vrot.slane %v166, 4
      %v2138 = vsel %vm371, %v2135, %v2137
      %v2139 = vrot.slane %v167, 4
      %v2140 = vsel %vm371, %v2137, %v2139
      %v2141 = vrot.slane %v168, 4
      %v2142 = vsel %vm371, %v2139, %v2141
      %v2143 = vrot.slane %v169, 4
      %v2144 = vsel %vm371, %v2141, %v2143
      %v2145 = vrot.slane %v170, 4
      %v2146 = vsel %vm371, %v2143, %v2145
      %v2147 = vrot.slane %v171, 4
      %v2148 = vsel %vm371, %v2145, %v2147
      %v2149 = vrot.slane %v172, 4
      %v2150 = vsel %vm371, %v2147, %v2149
      %v2151 = vrot.slane %v173, 4
      %v2152 = vsel %vm371, %v2149, %v2151
      %v2153 = vrot.slane %v174, 4
      %v2154 = vsel %vm371, %v2151, %v2153
      %v2155 = vrot.slane %v175, 4
      %v2156 = vsel %vm371, %v2153, %v2155
      %v2157 = vrot.slane %v176, 4
      %v2158 = vsel %vm371, %v2155, %v2157
      %v2159 = vrot.slane %v177, 4
      %v2160 = vsel %vm371, %v2157, %v2159
      %v2161 = vrot.slane %v178, 4
      %v2162 = vsel %vm371, %v2159, %v2161
      %v2163 = vrot.slane %v179, 4
      %v2164 = vsel %vm371, %v2161, %v2163
      %v2165 = vrot.slane %v180, 4
      %v2166 = vsel %vm371, %v2163, %v2165
      %v2167 = vrot.slane %v181, 4
      %v2168 = vsel %vm371, %v2165, %v2167
      %v2169 = vrot.slane %v182, 4
      %v2170 = vsel %vm371, %v2167, %v2169
      %v2171 = vsel %vm298, %v2100, 0
      %v2173 = vsel %vm298, %v2102, 0
      %v2175 = vsel %vm298, %v2104, 0
      %v2177 = vsel %vm298, %v2106, 0
      %v2179 = vsel %vm298, %v2108, 0
      %v2181 = vsel %vm298, %v2110, 0
      %v2183 = vsel %vm298, %v2112, 0
      %v2185 = vsel %vm298, %v2114, 0
      %v2187 = vsel %vm298, %v2116, 0
      %v2189 = vsel %vm298, %v2118, 0
      %v2191 = vsel %vm298, %v2120, 0
      %v2193 = vsel %vm298, %v2122, 0
      %v2195 = vsel %vm298, %v2124, 0
      %v2197 = vsel %vm298, %v2126, 0
      %v2199 = vsel %vm298, %v2128, 0
      %v2201 = vsel %vm298, %v2130, 0
      %v2203 = vsel %vm298, %v2132, 0
      %v2205 = vsel %vm298, %v2134, 0
      %v2207 = vsel %vm298, %v2136, 0
      %v2209 = vsel %vm298, %v2138, 0
      %v2211 = vsel %vm298, %v2140, 0
      %v2213 = vsel %vm298, %v2142, 0
      %v2215 = vsel %vm298, %v2144, 0
      %v2217 = vsel %vm298, %v2146, 0
      %v2219 = vsel %vm298, %v2148, 0
      %v2221 = vsel %vm298, %v2150, 0
      %v2223 = vsel %vm298, %v2152, 0
      %v2225 = vsel %vm298, %v2154, 0
      %v2227 = vsel %vm298, %v2156, 0
      %v2229 = vsel %vm298, %v2158, 0
      %v2231 = vsel %vm298, %v2160, 0
      %v2233 = vsel %vm298, %v2162, 0
      %v2235 = vsel %vm298, %v2164, 0
      %v2237 = vsel %vm298, %v2166, 0
      %v2239 = vsel %vm298, %v2168, 0
      %v2241 = vsel %vm298, %v2170, 0
      %v2244 = vsel %vm371, %v2097, 0
      %2246 = vmatprep.subr.mxu0 0.0
      %2247 = vmatpush1.msra.mxu0 %v2244
      %2248 = vmatprep.subr.mxu0 0.0
      %2249 = vmatpush1.msra.mxu0 0.0
      %2250 = vmatprep.subr.mxu0 0.0
      %2251 = vmatpush1.msra.mxu0 0.0
      %2252 = vmatprep.subr.mxu0 0.0
      %2253 = vmatpush1.msra.mxu0 0.0
      %2254 = vmatprep.subr.mxu0 0.0
      %2255 = vmatpush1.msra.mxu0 0.0
      %2256 = vmatprep.subr.mxu0 0.0
      %2257 = vmatpush1.msra.mxu0 0.0
      %2258 = vmatprep.subr.mxu0 0.0
      %2259 = vmatpush1.msra.mxu0 0.0
      %2260 = vmatprep.subr.mxu0 0.0
      %2261 = vmatpush1.msra.mxu0 0.0
      %2262 = vmatprep.subr.mxu0 0.0
      %2263 = vmatpush1.msra.mxu0 0.0
      %2264 = vmatprep.subr.mxu0 0.0
      %2265 = vmatpush1.msra.mxu0 0.0
      %2266 = vmatprep.subr.mxu0 0.0
      %2267 = vmatpush1.msra.mxu0 0.0
      %2268 = vmatprep.subr.mxu0 0.0
      %2269 = vmatpush1.msra.mxu0 0.0
      %2270 = vmatprep.subr.mxu0 0.0
      %2271 = vmatpush1.msra.mxu0 0.0
      %2272 = vmatprep.subr.mxu0 0.0
      %2273 = vmatpush1.msra.mxu0 0.0
      %2274 = vmatprep.subr.mxu0 0.0
      %2275 = vmatpush1.msra.mxu0 0.0
      %2276 = vmatprep.subr.mxu0 0.0
      %2277 = vmatpush1.msra.mxu0 0.0
      %2278 = vmatprep.subr.mxu0 0.0
      %2279 = vmatpush1.msra.mxu0 0.0
      %2280 = vmatprep.subr.mxu0 0.0
      %2281 = vmatpush1.msra.mxu0 0.0
      %2282 = vmatprep.subr.mxu0 0.0
      %2283 = vmatpush1.msra.mxu0 0.0
      %2284 = vmatprep.subr.mxu0 0.0
      %2285 = vmatpush1.msra.mxu0 0.0
      %2286 = vmatprep.subr.mxu0 0.0
      %2287 = vmatpush1.msra.mxu0 0.0
      %2288 = vmatprep.subr.mxu0 0.0
      %2289 = vmatpush1.msra.mxu0 0.0
      %2290 = vmatprep.subr.mxu0 0.0
      %2291 = vmatpush1.msra.mxu0 0.0
      %2292 = vmatprep.subr.mxu0 0.0
      %2293 = vmatpush1.msra.mxu0 0.0
      %2294 = vmatprep.subr.mxu0 0.0
      %2295 = vmatpush1.msra.mxu0 0.0
      %2296 = vmatprep.subr.mxu0 0.0
      %2297 = vmatpush1.msra.mxu0 0.0
      %2298 = vmatprep.subr.mxu0 0.0
      %2299 = vmatpush1.msra.mxu0 0.0
      %2300 = vmatprep.subr.mxu0 0.0
      %2301 = vmatpush1.msra.mxu0 0.0
      %2302 = vmatprep.subr.mxu0 0.0
      %2303 = vmatpush1.msra.mxu0 0.0
      %2304 = vmatprep.subr.mxu0 0.0
      %2305 = vmatpush1.msra.mxu0 0.0
      %2306 = vmatprep.subr.mxu0 0.0
      %2307 = vmatpush1.msra.mxu0 0.0
      %2308 = vmatprep.subr.mxu0 0.0
      %2309 = vmatpush1.msra.mxu0 0.0
      %2310 = vmatprep.mubr.f32.mxu0 0.0
      %2311 = vmatmul.mubr.f32.gmra.mrb[0].mxu0 %v2171
      %v2312 = vpop.f32.mrb[0].mxu0
      %v2313 = vadd.f32 0.0, %v2312
      %v2314 = vpop.f32.mrb[0].mxu0
      %2315 = vmatprep.mubr.f32.mxu0 0.0
      %2316 = vmatmul.mubr.f32.gmra.mrb[0].mxu0 %v2173
      %v2317 = vpop.f32.mrb[0].mxu0
      %v2318 = vadd.f32 0.0, %v2317
      %v2319 = vpop.f32.mrb[0].mxu0
      %2320 = vmatprep.mubr.f32.mxu0 0.0
      %2321 = vmatmul.mubr.f32.gmra.mrb[0].mxu0 %v2175
      %v2322 = vpop.f32.mrb[0].mxu0
      %v2323 = vadd.f32 0.0, %v2322
      %v2324 = vpop.f32.mrb[0].mxu0
      %2325 = vmatprep.mubr.f32.mxu0 0.0
      %2326 = vmatmul.mubr.f32.gmra.mrb[0].mxu0 %v2177
      %v2327 = vpop.f32.mrb[0].mxu0
      %v2328 = vadd.f32 0.0, %v2327
      %v2329 = vpop.f32.mrb[0].mxu0
      %2330 = vmatprep.mubr.f32.mxu0 0.0
      %2331 = vmatmul.mubr.f32.gmra.mrb[0].mxu0 %v2179
      %v2332 = vpop.f32.mrb[0].mxu0
      %v2333 = vadd.f32 0.0, %v2332
      %v2334 = vpop.f32.mrb[0].mxu0
      %2335 = vmatprep.mubr.f32.mxu0 0.0
      %2336 = vmatmul.mubr.f32.gmra.mrb[0].mxu0 %v2181
      %v2337 = vpop.f32.mrb[0].mxu0
      %v2338 = vadd.f32 0.0, %v2337
      %v2339 = vpop.f32.mrb[0].mxu0
      %2340 = vmatprep.mubr.f32.mxu0 0.0
      %2341 = vmatmul.mubr.f32.gmra.mrb[0].mxu0 %v2183
      %v2342 = vpop.f32.mrb[0].mxu0
      %v2343 = vadd.f32 0.0, %v2342
      %v2344 = vpop.f32.mrb[0].mxu0
      %2345 = vmatprep.mubr.f32.mxu0 0.0
      %2346 = vmatmul.mubr.f32.gmra.mrb[0].mxu0 %v2185
      %v2347 = vpop.f32.mrb[0].mxu0
      %v2348 = vadd.f32 0.0, %v2347
      %v2349 = vpop.f32.mrb[0].mxu0
      %2350 = vmatprep.mubr.f32.mxu0 0.0
      %2351 = vmatmul.mubr.f32.gmra.mrb[0].mxu0 %v2187
      %v2352 = vpop.f32.mrb[0].mxu0
      %v2353 = vadd.f32 0.0, %v2352
      %v2354 = vpop.f32.mrb[0].mxu0
      %2355 = vmatprep.mubr.f32.mxu0 0.0
      %2356 = vmatmul.mubr.f32.gmra.mrb[0].mxu0 %v2189
      %v2357 = vpop.f32.mrb[0].mxu0
      %v2358 = vadd.f32 0.0, %v2357
      %v2359 = vpop.f32.mrb[0].mxu0
      %2360 = vmatprep.mubr.f32.mxu0 0.0
      %2361 = vmatmul.mubr.f32.gmra.mrb[0].mxu0 %v2191
      %v2362 = vpop.f32.mrb[0].mxu0
      %v2363 = vadd.f32 0.0, %v2362
      %v2364 = vpop.f32.mrb[0].mxu0
      %2365 = vmatprep.mubr.f32.mxu0 0.0
      %2366 = vmatmul.mubr.f32.gmra.mrb[0].mxu0 %v2193
      %v2367 = vpop.f32.mrb[0].mxu0
      %v2368 = vadd.f32 0.0, %v2367
      %v2369 = vpop.f32.mrb[0].mxu0
      %2370 = vmatprep.mubr.f32.mxu0 0.0
      %2371 = vmatmul.mubr.f32.gmra.mrb[0].mxu0 %v2195
      %v2372 = vpop.f32.mrb[0].mxu0
      %v2373 = vadd.f32 0.0, %v2372
      %v2374 = vpop.f32.mrb[0].mxu0
      %2375 = vmatprep.mubr.f32.mxu0 0.0
      %2376 = vmatmul.mubr.f32.gmra.mrb[0].mxu0 %v2197
      %v2377 = vpop.f32.mrb[0].mxu0
      %v2378 = vadd.f32 0.0, %v2377
      %v2379 = vpop.f32.mrb[0].mxu0
      %2380 = vmatprep.mubr.f32.mxu0 0.0
      %2381 = vmatmul.mubr.f32.gmra.mrb[0].mxu0 %v2199
      %v2382 = vpop.f32.mrb[0].mxu0
      %v2383 = vadd.f32 0.0, %v2382
      %v2384 = vpop.f32.mrb[0].mxu0
      %2385 = vmatprep.mubr.f32.mxu0 0.0
      %2386 = vmatmul.mubr.f32.gmra.mrb[0].mxu0 %v2201
      %v2387 = vpop.f32.mrb[0].mxu0
      %v2388 = vadd.f32 0.0, %v2387
      %v2389 = vpop.f32.mrb[0].mxu0
      %2390 = vmatprep.mubr.f32.mxu0 0.0
      %2391 = vmatmul.mubr.f32.gmra.mrb[0].mxu0 %v2203
      %v2392 = vpop.f32.mrb[0].mxu0
      %v2393 = vadd.f32 0.0, %v2392
      %v2394 = vpop.f32.mrb[0].mxu0
      %2395 = vmatprep.mubr.f32.mxu0 0.0
      %2396 = vmatmul.mubr.f32.gmra.mrb[0].mxu0 %v2205
      %v2397 = vpop.f32.mrb[0].mxu0
      %v2398 = vadd.f32 0.0, %v2397
      %v2399 = vpop.f32.mrb[0].mxu0
      %2400 = vmatprep.mubr.f32.mxu0 0.0
      %2401 = vmatmul.mubr.f32.gmra.mrb[0].mxu0 %v2207
      %v2402 = vpop.f32.mrb[0].mxu0
      %v2403 = vadd.f32 0.0, %v2402
      %v2404 = vpop.f32.mrb[0].mxu0
      %2405 = vmatprep.mubr.f32.mxu0 0.0
      %2406 = vmatmul.mubr.f32.gmra.mrb[0].mxu0 %v2209
      %v2407 = vpop.f32.mrb[0].mxu0
      %v2408 = vadd.f32 0.0, %v2407
      %v2409 = vpop.f32.mrb[0].mxu0
      %2410 = vmatprep.mubr.f32.mxu0 0.0
      %2411 = vmatmul.mubr.f32.gmra.mrb[0].mxu0 %v2211
      %v2412 = vpop.f32.mrb[0].mxu0
      %v2413 = vadd.f32 0.0, %v2412
      %v2414 = vpop.f32.mrb[0].mxu0
      %2415 = vmatprep.mubr.f32.mxu0 0.0
      %2416 = vmatmul.mubr.f32.gmra.mrb[0].mxu0 %v2213
      %v2417 = vpop.f32.mrb[0].mxu0
      %v2418 = vadd.f32 0.0, %v2417
      %v2419 = vpop.f32.mrb[0].mxu0
      %2420 = vmatprep.mubr.f32.mxu0 0.0
      %2421 = vmatmul.mubr.f32.gmra.mrb[0].mxu0 %v2215
      %v2422 = vpop.f32.mrb[0].mxu0
      %v2423 = vadd.f32 0.0, %v2422
      %v2424 = vpop.f32.mrb[0].mxu0
      %2425 = vmatprep.mubr.f32.mxu0 0.0
      %2426 = vmatmul.mubr.f32.gmra.mrb[0].mxu0 %v2217
      %v2427 = vpop.f32.mrb[0].mxu0
      %v2428 = vadd.f32 0.0, %v2427
      %v2429 = vpop.f32.mrb[0].mxu0
      %2430 = vmatprep.mubr.f32.mxu0 0.0
      %2431 = vmatmul.mubr.f32.gmra.mrb[0].mxu0 %v2219
      %v2432 = vpop.f32.mrb[0].mxu0
      %v2433 = vadd.f32 0.0, %v2432
      %v2434 = vpop.f32.mrb[0].mxu0
      %2435 = vmatprep.mubr.f32.mxu0 0.0
      %2436 = vmatmul.mubr.f32.gmra.mrb[0].mxu0 %v2221
      %v2437 = vpop.f32.mrb[0].mxu0
      %v2438 = vadd.f32 0.0, %v2437
      %v2439 = vpop.f32.mrb[0].mxu0
      %2440 = vmatprep.mubr.f32.mxu0 0.0
      %2441 = vmatmul.mubr.f32.gmra.mrb[0].mxu0 %v2223
      %v2442 = vpop.f32.mrb[0].mxu0
      %v2443 = vadd.f32 0.0, %v2442
      %v2444 = vpop.f32.mrb[0].mxu0
      %2445 = vmatprep.mubr.f32.mxu0 0.0
      %2446 = vmatmul.mubr.f32.gmra.mrb[0].mxu0 %v2225
      %v2447 = vpop.f32.mrb[0].mxu0
      %v2448 = vadd.f32 0.0, %v2447
      %v2449 = vpop.f32.mrb[0].mxu0
      %2450 = vmatprep.mubr.f32.mxu0 0.0
      %2451 = vmatmul.mubr.f32.gmra.mrb[0].mxu0 %v2227
      %v2452 = vpop.f32.mrb[0].mxu0
      %v2453 = vadd.f32 0.0, %v2452
      %v2454 = vpop.f32.mrb[0].mxu0
      %2455 = vmatprep.mubr.f32.mxu0 0.0
      %2456 = vmatmul.mubr.f32.gmra.mrb[0].mxu0 %v2229
      %v2457 = vpop.f32.mrb[0].mxu0
      %v2458 = vadd.f32 0.0, %v2457
      %v2459 = vpop.f32.mrb[0].mxu0
      %2460 = vmatprep.mubr.f32.mxu0 0.0
      %2461 = vmatmul.mubr.f32.gmra.mrb[0].mxu0 %v2231
      %v2462 = vpop.f32.mrb[0].mxu0
      %v2463 = vadd.f32 0.0, %v2462
      %v2464 = vpop.f32.mrb[0].mxu0
      %2465 = vmatprep.mubr.f32.mxu0 0.0
      %2466 = vmatmul.mubr.f32.gmra.mrb[0].mxu0 %v2233
      %v2467 = vpop.f32.mrb[0].mxu0
      %v2468 = vadd.f32 0.0, %v2467
      %v2469 = vpop.f32.mrb[0].mxu0
      %2470 = vmatprep.mubr.f32.mxu0 0.0
      %2471 = vmatmul.mubr.f32.gmra.mrb[0].mxu0 %v2235
      %v2472 = vpop.f32.mrb[0].mxu0
      %v2473 = vadd.f32 0.0, %v2472
      %v2474 = vpop.f32.mrb[0].mxu0
      %2475 = vmatprep.mubr.f32.mxu0 0.0
      %2476 = vmatmul.mubr.f32.gmra.mrb[0].mxu0 %v2237
      %v2477 = vpop.f32.mrb[0].mxu0
      %v2478 = vadd.f32 0.0, %v2477
      %v2479 = vpop.f32.mrb[0].mxu0
      %2480 = vmatprep.mubr.f32.mxu0 0.0
      %2481 = vmatmul.mubr.f32.gmra.mrb[0].mxu0 %v2239
      %v2482 = vpop.f32.mrb[0].mxu0
      %v2483 = vadd.f32 0.0, %v2482
      %v2484 = vpop.f32.mrb[0].mxu0
      %2485 = vmatprep.mubr.f32.mxu0 0.0
      %2486 = vmatmul.mubr.f32.gmra.mrb[0].mxu0 %v2241
      %v2487 = vpop.f32.mrb[0].mxu0
      %v2488 = vadd.f32 0.0, %v2487
      %v2489 = vpop.f32.mrb[0].mxu0
      %2490 = vdwg.mxu0
      %v2491 = vadd.f32 %v2061, %v2313
      %v2492 = vadd.f32 %v2062, %v2318
      %v2493 = vadd.f32 %v2063, %v2323
      %v2494 = vadd.f32 %v2064, %v2328
      %v2495 = vadd.f32 %v2065, %v2333
      %v2496 = vadd.f32 %v2066, %v2338
      %v2497 = vadd.f32 %v2067, %v2343
      %v2498 = vadd.f32 %v2068, %v2348
      %v2499 = vadd.f32 %v2069, %v2353
      %v2500 = vadd.f32 %v2070, %v2358
      %v2501 = vadd.f32 %v2071, %v2363
      %v2502 = vadd.f32 %v2072, %v2368
      %v2503 = vadd.f32 %v2073, %v2373
      %v2504 = vadd.f32 %v2074, %v2378
      %v2505 = vadd.f32 %v2075, %v2383
      %v2506 = vadd.f32 %v2076, %v2388
      %v2507 = vadd.f32 %v2077, %v2393
      %v2508 = vadd.f32 %v2078, %v2398
      %v2509 = vadd.f32 %v2079, %v2403
      %v2510 = vadd.f32 %v2080, %v2408
      %v2511 = vadd.f32 %v2081, %v2413
      %v2512 = vadd.f32 %v2082, %v2418
      %v2513 = vadd.f32 %v2083, %v2423
      %v2514 = vadd.f32 %v2084, %v2428
      %v2515 = vadd.f32 %v2085, %v2433
      %v2516 = vadd.f32 %v2086, %v2438
      %v2517 = vadd.f32 %v2087, %v2443
      %v2518 = vadd.f32 %v2088, %v2448
      %v2519 = vadd.f32 %v2089, %v2453
      %v2520 = vadd.f32 %v2090, %v2458
      %v2521 = vadd.f32 %v2091, %v2463
      %v2522 = vadd.f32 %v2092, %v2468
      %v2523 = vadd.f32 %v2093, %v2473
      %v2524 = vadd.f32 %v2094, %v2478
      %v2525 = vadd.f32 %v2095, %v2483
      %v2526 = vadd.f32 %v2096, %v2488
      %v2527 = vld [vmem:[%s1 + $0x18] sm:$0xf]
      %v2530 = vrot.slane %v183, 4
      %v2531 = vsel %vm371, %v2169, %v2530
      %v2532 = vrot.slane %v184, 4
      %v2533 = vsel %vm371, %v2530, %v2532
      %v2534 = vsel %vm298, %v2531, 0
      %v2536 = vsel %vm298, %v2533, 0
      %v2539 = vsel %vm371, %v2527, 0
      %2541 = vmatprep.subr.mxu0 0.0
      %2542 = vmatpush1.msra.mxu0 %v2539
      %2543 = vmatprep.subr.mxu0 0.0
      %2544 = vmatpush1.msra.mxu0 0.0
      %2545 = vmatprep.subr.mxu0 0.0
      %2546 = vmatpush1.msra.mxu0 0.0
      %2547 = vmatprep.subr.mxu0 0.0
      %2548 = vmatpush1.msra.mxu0 0.0
      %2549 = vmatprep.subr.mxu0 0.0
      %2550 = vmatpush1.msra.mxu0 0.0
      %2551 = vmatprep.subr.mxu0 0.0
      %2552 = vmatpush1.msra.mxu0 0.0
      %2553 = vmatprep.subr.mxu0 0.0
      %2554 = vmatpush1.msra.mxu0 0.0
      %2555 = vmatprep.subr.mxu0 0.0
      %2556 = vmatpush1.msra.mxu0 0.0
      %2557 = vmatprep.subr.mxu0 0.0
      %2558 = vmatpush1.msra.mxu0 0.0
      %2559 = vmatprep.subr.mxu0 0.0
      %2560 = vmatpush1.msra.mxu0 0.0
      %2561 = vmatprep.subr.mxu0 0.0
      %2562 = vmatpush1.msra.mxu0 0.0
      %2563 = vmatprep.subr.mxu0 0.0
      %2564 = vmatpush1.msra.mxu0 0.0
      %2565 = vmatprep.subr.mxu0 0.0
      %2566 = vmatpush1.msra.mxu0 0.0
      %2567 = vmatprep.subr.mxu0 0.0
      %2568 = vmatpush1.msra.mxu0 0.0
      %2569 = vmatprep.subr.mxu0 0.0
      %2570 = vmatpush1.msra.mxu0 0.0
      %2571 = vmatprep.subr.mxu0 0.0
      %2572 = vmatpush1.msra.mxu0 0.0
      %2573 = vmatprep.subr.mxu0 0.0
      %2574 = vmatpush1.msra.mxu0 0.0
      %2575 = vmatprep.subr.mxu0 0.0
      %2576 = vmatpush1.msra.mxu0 0.0
      %2577 = vmatprep.subr.mxu0 0.0
      %2578 = vmatpush1.msra.mxu0 0.0
      %2579 = vmatprep.subr.mxu0 0.0
      %2580 = vmatpush1.msra.mxu0 0.0
      %2581 = vmatprep.subr.mxu0 0.0
      %2582 = vmatpush1.msra.mxu0 0.0
      %2583 = vmatprep.subr.mxu0 0.0
      %2584 = vmatpush1.msra.mxu0 0.0
      %2585 = vmatprep.subr.mxu0 0.0
      %2586 = vmatpush1.msra.mxu0 0.0
      %2587 = vmatprep.subr.mxu0 0.0
      %2588 = vmatpush1.msra.mxu0 0.0
      %2589 = vmatprep.subr.mxu0 0.0
      %2590 = vmatpush1.msra.mxu0 0.0
      %2591 = vmatprep.subr.mxu0 0.0
      %2592 = vmatpush1.msra.mxu0 0.0
      %2593 = vmatprep.subr.mxu0 0.0
      %2594 = vmatpush1.msra.mxu0 0.0
      %2595 = vmatprep.subr.mxu0 0.0
      %2596 = vmatpush1.msra.mxu0 0.0
      %2597 = vmatprep.subr.mxu0 0.0
      %2598 = vmatpush1.msra.mxu0 0.0
      %2599 = vmatprep.subr.mxu0 0.0
      %2600 = vmatpush1.msra.mxu0 0.0
      %2601 = vmatprep.subr.mxu0 0.0
      %2602 = vmatpush1.msra.mxu0 0.0
      %2603 = vmatprep.subr.mxu0 0.0
      %2604 = vmatpush1.msra.mxu0 0.0
      %2605 = vmatprep.mubr.f32.mxu0 0.0
      %2606 = vmatmul.mubr.f32.gmra.mrb[0].mxu0 %v2175
      %v2607 = vpop.f32.mrb[0].mxu0
      %v2608 = vadd.f32 0.0, %v2607
      %v2609 = vpop.f32.mrb[0].mxu0
      %2610 = vmatprep.mubr.f32.mxu0 0.0
      %2611 = vmatmul.mubr.f32.gmra.mrb[0].mxu0 %v2177
      %v2612 = vpop.f32.mrb[0].mxu0
      %v2613 = vadd.f32 0.0, %v2612
      %v2614 = vpop.f32.mrb[0].mxu0
      %2615 = vmatprep.mubr.f32.mxu0 0.0
      %2616 = vmatmul.mubr.f32.gmra.mrb[0].mxu0 %v2179
      %v2617 = vpop.f32.mrb[0].mxu0
      %v2618 = vadd.f32 0.0, %v2617
      %v2619 = vpop.f32.mrb[0].mxu0
      %2620 = vmatprep.mubr.f32.mxu0 0.0
      %2621 = vmatmul.mubr.f32.gmra.mrb[0].mxu0 %v2181
      %v2622 = vpop.f32.mrb[0].mxu0
      %v2623 = vadd.f32 0.0, %v2622
      %v2624 = vpop.f32.mrb[0].mxu0
      %2625 = vmatprep.mubr.f32.mxu0 0.0
      %2626 = vmatmul.mubr.f32.gmra.mrb[0].mxu0 %v2183
      %v2627 = vpop.f32.mrb[0].mxu0
      %v2628 = vadd.f32 0.0, %v2627
      %v2629 = vpop.f32.mrb[0].mxu0
      %2630 = vmatprep.mubr.f32.mxu0 0.0
      %2631 = vmatmul.mubr.f32.gmra.mrb[0].mxu0 %v2185
      %v2632 = vpop.f32.mrb[0].mxu0
      %v2633 = vadd.f32 0.0, %v2632
      %v2634 = vpop.f32.mrb[0].mxu0
      %2635 = vmatprep.mubr.f32.mxu0 0.0
      %2636 = vmatmul.mubr.f32.gmra.mrb[0].mxu0 %v2187
      %v2637 = vpop.f32.mrb[0].mxu0
      %v2638 = vadd.f32 0.0, %v2637
      %v2639 = vpop.f32.mrb[0].mxu0
      %2640 = vmatprep.mubr.f32.mxu0 0.0
      %2641 = vmatmul.mubr.f32.gmra.mrb[0].mxu0 %v2189
      %v2642 = vpop.f32.mrb[0].mxu0
      %v2643 = vadd.f32 0.0, %v2642
      %v2644 = vpop.f32.mrb[0].mxu0
      %2645 = vmatprep.mubr.f32.mxu0 0.0
      %2646 = vmatmul.mubr.f32.gmra.mrb[0].mxu0 %v2191
      %v2647 = vpop.f32.mrb[0].mxu0
      %v2648 = vadd.f32 0.0, %v2647
      %v2649 = vpop.f32.mrb[0].mxu0
      %2650 = vmatprep.mubr.f32.mxu0 0.0
      %2651 = vmatmul.mubr.f32.gmra.mrb[0].mxu0 %v2193
      %v2652 = vpop.f32.mrb[0].mxu0
      %v2653 = vadd.f32 0.0, %v2652
      %v2654 = vpop.f32.mrb[0].mxu0
      %2655 = vmatprep.mubr.f32.mxu0 0.0
      %2656 = vmatmul.mubr.f32.gmra.mrb[0].mxu0 %v2195
      %v2657 = vpop.f32.mrb[0].mxu0
      %v2658 = vadd.f32 0.0, %v2657
      %v2659 = vpop.f32.mrb[0].mxu0
      %2660 = vmatprep.mubr.f32.mxu0 0.0
      %2661 = vmatmul.mubr.f32.gmra.mrb[0].mxu0 %v2197
      %v2662 = vpop.f32.mrb[0].mxu0
      %v2663 = vadd.f32 0.0, %v2662
      %v2664 = vpop.f32.mrb[0].mxu0
      %2665 = vmatprep.mubr.f32.mxu0 0.0
      %2666 = vmatmul.mubr.f32.gmra.mrb[0].mxu0 %v2199
      %v2667 = vpop.f32.mrb[0].mxu0
      %v2668 = vadd.f32 0.0, %v2667
      %v2669 = vpop.f32.mrb[0].mxu0
      %2670 = vmatprep.mubr.f32.mxu0 0.0
      %2671 = vmatmul.mubr.f32.gmra.mrb[0].mxu0 %v2201
      %v2672 = vpop.f32.mrb[0].mxu0
      %v2673 = vadd.f32 0.0, %v2672
      %v2674 = vpop.f32.mrb[0].mxu0
      %2675 = vmatprep.mubr.f32.mxu0 0.0
      %2676 = vmatmul.mubr.f32.gmra.mrb[0].mxu0 %v2203
      %v2677 = vpop.f32.mrb[0].mxu0
      %v2678 = vadd.f32 0.0, %v2677
      %v2679 = vpop.f32.mrb[0].mxu0
      %2680 = vmatprep.mubr.f32.mxu0 0.0
      %2681 = vmatmul.mubr.f32.gmra.mrb[0].mxu0 %v2205
      %v2682 = vpop.f32.mrb[0].mxu0
      %v2683 = vadd.f32 0.0, %v2682
      %v2684 = vpop.f32.mrb[0].mxu0
      %2685 = vmatprep.mubr.f32.mxu0 0.0
      %2686 = vmatmul.mubr.f32.gmra.mrb[0].mxu0 %v2207
      %v2687 = vpop.f32.mrb[0].mxu0
      %v2688 = vadd.f32 0.0, %v2687
      %v2689 = vpop.f32.mrb[0].mxu0
      %2690 = vmatprep.mubr.f32.mxu0 0.0
      %2691 = vmatmul.mubr.f32.gmra.mrb[0].mxu0 %v2209
      %v2692 = vpop.f32.mrb[0].mxu0
      %v2693 = vadd.f32 0.0, %v2692
      %v2694 = vpop.f32.mrb[0].mxu0
      %2695 = vmatprep.mubr.f32.mxu0 0.0
      %2696 = vmatmul.mubr.f32.gmra.mrb[0].mxu0 %v2211
      %v2697 = vpop.f32.mrb[0].mxu0
      %v2698 = vadd.f32 0.0, %v2697
      %v2699 = vpop.f32.mrb[0].mxu0
      %2700 = vmatprep.mubr.f32.mxu0 0.0
      %2701 = vmatmul.mubr.f32.gmra.mrb[0].mxu0 %v2213
      %v2702 = vpop.f32.mrb[0].mxu0
      %v2703 = vadd.f32 0.0, %v2702
      %v2704 = vpop.f32.mrb[0].mxu0
      %2705 = vmatprep.mubr.f32.mxu0 0.0
      %2706 = vmatmul.mubr.f32.gmra.mrb[0].mxu0 %v2215
      %v2707 = vpop.f32.mrb[0].mxu0
      %v2708 = vadd.f32 0.0, %v2707
      %v2709 = vpop.f32.mrb[0].mxu0
      %2710 = vmatprep.mubr.f32.mxu0 0.0
      %2711 = vmatmul.mubr.f32.gmra.mrb[0].mxu0 %v2217
      %v2712 = vpop.f32.mrb[0].mxu0
      %v2713 = vadd.f32 0.0, %v2712
      %v2714 = vpop.f32.mrb[0].mxu0
      %2715 = vmatprep.mubr.f32.mxu0 0.0
      %2716 = vmatmul.mubr.f32.gmra.mrb[0].mxu0 %v2219
      %v2717 = vpop.f32.mrb[0].mxu0
      %v2718 = vadd.f32 0.0, %v2717
      %v2719 = vpop.f32.mrb[0].mxu0
      %2720 = vmatprep.mubr.f32.mxu0 0.0
      %2721 = vmatmul.mubr.f32.gmra.mrb[0].mxu0 %v2221
      %v2722 = vpop.f32.mrb[0].mxu0
      %v2723 = vadd.f32 0.0, %v2722
      %v2724 = vpop.f32.mrb[0].mxu0
      %2725 = vmatprep.mubr.f32.mxu0 0.0
      %2726 = vmatmul.mubr.f32.gmra.mrb[0].mxu0 %v2223
      %v2727 = vpop.f32.mrb[0].mxu0
      %v2728 = vadd.f32 0.0, %v2727
      %v2729 = vpop.f32.mrb[0].mxu0
      %2730 = vmatprep.mubr.f32.mxu0 0.0
      %2731 = vmatmul.mubr.f32.gmra.mrb[0].mxu0 %v2225
      %v2732 = vpop.f32.mrb[0].mxu0
      %v2733 = vadd.f32 0.0, %v2732
      %v2734 = vpop.f32.mrb[0].mxu0
      %2735 = vmatprep.mubr.f32.mxu0 0.0
      %2736 = vmatmul.mubr.f32.gmra.mrb[0].mxu0 %v2227
      %v2737 = vpop.f32.mrb[0].mxu0
      %v2738 = vadd.f32 0.0, %v2737
      %v2739 = vpop.f32.mrb[0].mxu0
      %2740 = vmatprep.mubr.f32.mxu0 0.0
      %2741 = vmatmul.mubr.f32.gmra.mrb[0].mxu0 %v2229
      %v2742 = vpop.f32.mrb[0].mxu0
      %v2743 = vadd.f32 0.0, %v2742
      %v2744 = vpop.f32.mrb[0].mxu0
      %2745 = vmatprep.mubr.f32.mxu0 0.0
      %2746 = vmatmul.mubr.f32.gmra.mrb[0].mxu0 %v2231
      %v2747 = vpop.f32.mrb[0].mxu0
      %v2748 = vadd.f32 0.0, %v2747
      %v2749 = vpop.f32.mrb[0].mxu0
      %2750 = vmatprep.mubr.f32.mxu0 0.0
      %2751 = vmatmul.mubr.f32.gmra.mrb[0].mxu0 %v2233
      %v2752 = vpop.f32.mrb[0].mxu0
      %v2753 = vadd.f32 0.0, %v2752
      %v2754 = vpop.f32.mrb[0].mxu0
      %2755 = vmatprep.mubr.f32.mxu0 0.0
      %2756 = vmatmul.mubr.f32.gmra.mrb[0].mxu0 %v2235
      %v2757 = vpop.f32.mrb[0].mxu0
      %v2758 = vadd.f32 0.0, %v2757
      %v2759 = vpop.f32.mrb[0].mxu0
      %2760 = vmatprep.mubr.f32.mxu0 0.0
      %2761 = vmatmul.mubr.f32.gmra.mrb[0].mxu0 %v2237
      %v2762 = vpop.f32.mrb[0].mxu0
      %v2763 = vadd.f32 0.0, %v2762
      %v2764 = vpop.f32.mrb[0].mxu0
      %2765 = vmatprep.mubr.f32.mxu0 0.0
      %2766 = vmatmul.mubr.f32.gmra.mrb[0].mxu0 %v2239
      %v2767 = vpop.f32.mrb[0].mxu0
      %v2768 = vadd.f32 0.0, %v2767
      %v2769 = vpop.f32.mrb[0].mxu0
      %2770 = vmatprep.mubr.f32.mxu0 0.0
      %2771 = vmatmul.mubr.f32.gmra.mrb[0].mxu0 %v2241
      %v2772 = vpop.f32.mrb[0].mxu0
      %v2773 = vadd.f32 0.0, %v2772
      %v2774 = vpop.f32.mrb[0].mxu0
      %2775 = vmatprep.mubr.f32.mxu0 0.0
      %2776 = vmatmul.mubr.f32.gmra.mrb[0].mxu0 %v2534
      %v2777 = vpop.f32.mrb[0].mxu0
      %v2778 = vadd.f32 0.0, %v2777
      %v2779 = vpop.f32.mrb[0].mxu0
      %2780 = vmatprep.mubr.f32.mxu0 0.0
      %2781 = vmatmul.mubr.f32.gmra.mrb[0].mxu0 %v2536
      %v2782 = vpop.f32.mrb[0].mxu0
      %v2783 = vadd.f32 0.0, %v2782
      %v2784 = vpop.f32.mrb[0].mxu0
      %2785 = vdwg.mxu0
      %v2786 = vadd.f32 %v2491, %v2608
      %v2787 = vadd.f32 %v2492, %v2613
      %v2788 = vadd.f32 %v2493, %v2618
      %v2789 = vadd.f32 %v2494, %v2623
      %v2790 = vadd.f32 %v2495, %v2628
      %v2791 = vadd.f32 %v2496, %v2633
      %v2792 = vadd.f32 %v2497, %v2638
      %v2793 = vadd.f32 %v2498, %v2643
      %v2794 = vadd.f32 %v2499, %v2648
      %v2795 = vadd.f32 %v2500, %v2653
      %v2796 = vadd.f32 %v2501, %v2658
      %v2797 = vadd.f32 %v2502, %v2663
      %v2798 = vadd.f32 %v2503, %v2668
      %v2799 = vadd.f32 %v2504, %v2673
      %v2800 = vadd.f32 %v2505, %v2678
      %v2801 = vadd.f32 %v2506, %v2683
      %v2802 = vadd.f32 %v2507, %v2688
      %v2803 = vadd.f32 %v2508, %v2693
      %v2804 = vadd.f32 %v2509, %v2698
      %v2805 = vadd.f32 %v2510, %v2703
      %v2806 = vadd.f32 %v2511, %v2708
      %v2807 = vadd.f32 %v2512, %v2713
      %v2808 = vadd.f32 %v2513, %v2718
      %v2809 = vadd.f32 %v2514, %v2723
      %v2810 = vadd.f32 %v2515, %v2728
      %v2811 = vadd.f32 %v2516, %v2733
      %v2812 = vadd.f32 %v2517, %v2738
      %v2813 = vadd.f32 %v2518, %v2743
      %v2814 = vadd.f32 %v2519, %v2748
      %v2815 = vadd.f32 %v2520, %v2753
      %v2816 = vadd.f32 %v2521, %v2758
      %v2817 = vadd.f32 %v2522, %v2763
      %v2818 = vadd.f32 %v2523, %v2768
      %v2819 = vadd.f32 %v2524, %v2773
      %v2820 = vadd.f32 %v2525, %v2778
      %v2821 = vadd.f32 %v2526, %v2783
      %v2822 = vld [vmem:[%s1 + $0x1c] sm:$0xf]
      %vm2823 = vcmask 1042432
      %v2824 = vrot.slane %v148, 5
      %v2825 = vrot.slane %v149, 5
      %v2826 = vsel %vm2823, %v2824, %v2825
      %v2827 = vrot.slane %v150, 5
      %v2828 = vsel %vm2823, %v2825, %v2827
      %v2829 = vrot.slane %v151, 5
      %v2830 = vsel %vm2823, %v2827, %v2829
      %v2831 = vrot.slane %v152, 5
      %v2832 = vsel %vm2823, %v2829, %v2831
      %v2833 = vrot.slane %v153, 5
      %v2834 = vsel %vm2823, %v2831, %v2833
      %v2835 = vrot.slane %v154, 5
      %v2836 = vsel %vm2823, %v2833, %v2835
      %v2837 = vrot.slane %v155, 5
      %v2838 = vsel %vm2823, %v2835, %v2837
      %v2839 = vrot.slane %v156, 5
      %v2840 = vsel %vm2823, %v2837, %v2839
      %v2841 = vrot.slane %v157, 5
      %v2842 = vsel %vm2823, %v2839, %v2841
      %v2843 = vrot.slane %v158, 5
      %v2844 = vsel %vm2823, %v2841, %v2843
      %v2845 = vrot.slane %v159, 5
      %v2846 = vsel %vm2823, %v2843, %v2845
      %v2847 = vrot.slane %v160, 5
      %v2848 = vsel %vm2823, %v2845, %v2847
      %v2849 = vrot.slane %v161, 5
      %v2850 = vsel %vm2823, %v2847, %v2849
      %v2851 = vrot.slane %v162, 5
      %v2852 = vsel %vm2823, %v2849, %v2851
      %v2853 = vrot.slane %v163, 5
      %v2854 = vsel %vm2823, %v2851, %v2853
      %v2855 = vrot.slane %v164, 5
      %v2856 = vsel %vm2823, %v2853, %v2855
      %v2857 = vrot.slane %v165, 5
      %v2858 = vsel %vm2823, %v2855, %v2857
      %v2859 = vrot.slane %v166, 5
      %v2860 = vsel %vm2823, %v2857, %v2859
      %v2861 = vrot.slane %v167, 5
      %v2862 = vsel %vm2823, %v2859, %v2861
      %v2863 = vrot.slane %v168, 5
      %v2864 = vsel %vm2823, %v2861, %v2863
      %v2865 = vrot.slane %v169, 5
      %v2866 = vsel %vm2823, %v2863, %v2865
      %v2867 = vrot.slane %v170, 5
      %v2868 = vsel %vm2823, %v2865, %v2867
      %v2869 = vrot.slane %v171, 5
      %v2870 = vsel %vm2823, %v2867, %v2869
      %v2871 = vrot.slane %v172, 5
      %v2872 = vsel %vm2823, %v2869, %v2871
      %v2873 = vrot.slane %v173, 5
      %v2874 = vsel %vm2823, %v2871, %v2873
      %v2875 = vrot.slane %v174, 5
      %v2876 = vsel %vm2823, %v2873, %v2875
      %v2877 = vrot.slane %v175, 5
      %v2878 = vsel %vm2823, %v2875, %v2877
      %v2879 = vrot.slane %v176, 5
      %v2880 = vsel %vm2823, %v2877, %v2879
      %v2881 = vrot.slane %v177, 5
      %v2882 = vsel %vm2823, %v2879, %v2881
      %v2883 = vrot.slane %v178, 5
      %v2884 = vsel %vm2823, %v2881, %v2883
      %v2885 = vrot.slane %v179, 5
      %v2886 = vsel %vm2823, %v2883, %v2885
      %v2887 = vrot.slane %v180, 5
      %v2888 = vsel %vm2823, %v2885, %v2887
      %v2889 = vrot.slane %v181, 5
      %v2890 = vsel %vm2823, %v2887, %v2889
      %v2891 = vrot.slane %v182, 5
      %v2892 = vsel %vm2823, %v2889, %v2891
      %v2893 = vrot.slane %v183, 5
      %v2894 = vsel %vm2823, %v2891, %v2893
      %v2895 = vrot.slane %v184, 5
      %v2896 = vsel %vm2823, %v2893, %v2895
      %v2897 = vsel %vm298, %v2826, 0
      %v2899 = vsel %vm298, %v2828, 0
      %v2901 = vsel %vm298, %v2830, 0
      %v2903 = vsel %vm298, %v2832, 0
      %v2905 = vsel %vm298, %v2834, 0
      %v2907 = vsel %vm298, %v2836, 0
      %v2909 = vsel %vm298, %v2838, 0
      %v2911 = vsel %vm298, %v2840, 0
      %v2913 = vsel %vm298, %v2842, 0
      %v2915 = vsel %vm298, %v2844, 0
      %v2917 = vsel %vm298, %v2846, 0
      %v2919 = vsel %vm298, %v2848, 0
      %v2921 = vsel %vm298, %v2850, 0
      %v2923 = vsel %vm298, %v2852, 0
      %v2925 = vsel %vm298, %v2854, 0
      %v2927 = vsel %vm298, %v2856, 0
      %v2929 = vsel %vm298, %v2858, 0
      %v2931 = vsel %vm298, %v2860, 0
      %v2933 = vsel %vm298, %v2862, 0
      %v2935 = vsel %vm298, %v2864, 0
      %v2937 = vsel %vm298, %v2866, 0
      %v2939 = vsel %vm298, %v2868, 0
      %v2941 = vsel %vm298, %v2870, 0
      %v2943 = vsel %vm298, %v2872, 0
      %v2945 = vsel %vm298, %v2874, 0
      %v2947 = vsel %vm298, %v2876, 0
      %v2949 = vsel %vm298, %v2878, 0
      %v2951 = vsel %vm298, %v2880, 0
      %v2953 = vsel %vm298, %v2882, 0
      %v2955 = vsel %vm298, %v2884, 0
      %v2957 = vsel %vm298, %v2886, 0
      %v2959 = vsel %vm298, %v2888, 0
      %v2961 = vsel %vm298, %v2890, 0
      %v2963 = vsel %vm298, %v2892, 0
      %v2965 = vsel %vm298, %v2894, 0
      %v2967 = vsel %vm298, %v2896, 0
      %v2970 = vsel %vm371, %v2822, 0
      %2972 = vmatprep.subr.mxu0 0.0
      %2973 = vmatpush1.msra.mxu0 %v2970
      %2974 = vmatprep.subr.mxu0 0.0
      %2975 = vmatpush1.msra.mxu0 0.0
      %2976 = vmatprep.subr.mxu0 0.0
      %2977 = vmatpush1.msra.mxu0 0.0
      %2978 = vmatprep.subr.mxu0 0.0
      %2979 = vmatpush1.msra.mxu0 0.0
      %2980 = vmatprep.subr.mxu0 0.0
      %2981 = vmatpush1.msra.mxu0 0.0
      %2982 = vmatprep.subr.mxu0 0.0
      %2983 = vmatpush1.msra.mxu0 0.0
      %2984 = vmatprep.subr.mxu0 0.0
      %2985 = vmatpush1.msra.mxu0 0.0
      %2986 = vmatprep.subr.mxu0 0.0
      %2987 = vmatpush1.msra.mxu0 0.0
      %2988 = vmatprep.subr.mxu0 0.0
      %2989 = vmatpush1.msra.mxu0 0.0
      %2990 = vmatprep.subr.mxu0 0.0
      %2991 = vmatpush1.msra.mxu0 0.0
      %2992 = vmatprep.subr.mxu0 0.0
      %2993 = vmatpush1.msra.mxu0 0.0
      %2994 = vmatprep.subr.mxu0 0.0
      %2995 = vmatpush1.msra.mxu0 0.0
      %2996 = vmatprep.subr.mxu0 0.0
      %2997 = vmatpush1.msra.mxu0 0.0
      %2998 = vmatprep.subr.mxu0 0.0
      %2999 = vmatpush1.msra.mxu0 0.0
      %3000 = vmatprep.subr.mxu0 0.0
      %3001 = vmatpush1.msra.mxu0 0.0
      %3002 = vmatprep.subr.mxu0 0.0
      %3003 = vmatpush1.msra.mxu0 0.0
      %3004 = vmatprep.subr.mxu0 0.0
      %3005 = vmatpush1.msra.mxu0 0.0
      %3006 = vmatprep.subr.mxu0 0.0
      %3007 = vmatpush1.msra.mxu0 0.0
      %3008 = vmatprep.subr.mxu0 0.0
      %3009 = vmatpush1.msra.mxu0 0.0
      %3010 = vmatprep.subr.mxu0 0.0
      %3011 = vmatpush1.msra.mxu0 0.0
      %3012 = vmatprep.subr.mxu0 0.0
      %3013 = vmatpush1.msra.mxu0 0.0
      %3014 = vmatprep.subr.mxu0 0.0
      %3015 = vmatpush1.msra.mxu0 0.0
      %3016 = vmatprep.subr.mxu0 0.0
      %3017 = vmatpush1.msra.mxu0 0.0
      %3018 = vmatprep.subr.mxu0 0.0
      %3019 = vmatpush1.msra.mxu0 0.0
      %3020 = vmatprep.subr.mxu0 0.0
      %3021 = vmatpush1.msra.mxu0 0.0
      %3022 = vmatprep.subr.mxu0 0.0
      %3023 = vmatpush1.msra.mxu0 0.0
      %3024 = vmatprep.subr.mxu0 0.0
      %3025 = vmatpush1.msra.mxu0 0.0
      %3026 = vmatprep.subr.mxu0 0.0
      %3027 = vmatpush1.msra.mxu0 0.0
      %3028 = vmatprep.subr.mxu0 0.0
      %3029 = vmatpush1.msra.mxu0 0.0
      %3030 = vmatprep.subr.mxu0 0.0
      %3031 = vmatpush1.msra.mxu0 0.0
      %3032 = vmatprep.subr.mxu0 0.0
      %3033 = vmatpush1.msra.mxu0 0.0
      %3034 = vmatprep.subr.mxu0 0.0
      %3035 = vmatpush1.msra.mxu0 0.0
      %3036 = vmatprep.mubr.f32.mxu0 0.0
      %3037 = vmatmul.mubr.f32.gmra.mrb[0].mxu0 %v2897
      %v3038 = vpop.f32.mrb[0].mxu0
      %v3039 = vadd.f32 0.0, %v3038
      %v3040 = vpop.f32.mrb[0].mxu0
      %3041 = vmatprep.mubr.f32.mxu0 0.0
      %3042 = vmatmul.mubr.f32.gmra.mrb[0].mxu0 %v2899
      %v3043 = vpop.f32.mrb[0].mxu0
      %v3044 = vadd.f32 0.0, %v3043
      %v3045 = vpop.f32.mrb[0].mxu0
      %3046 = vmatprep.mubr.f32.mxu0 0.0
      %3047 = vmatmul.mubr.f32.gmra.mrb[0].mxu0 %v2901
      %v3048 = vpop.f32.mrb[0].mxu0
      %v3049 = vadd.f32 0.0, %v3048
      %v3050 = vpop.f32.mrb[0].mxu0
      %3051 = vmatprep.mubr.f32.mxu0 0.0
      %3052 = vmatmul.mubr.f32.gmra.mrb[0].mxu0 %v2903
      %v3053 = vpop.f32.mrb[0].mxu0
      %v3054 = vadd.f32 0.0, %v3053
      %v3055 = vpop.f32.mrb[0].mxu0
      %3056 = vmatprep.mubr.f32.mxu0 0.0
      %3057 = vmatmul.mubr.f32.gmra.mrb[0].mxu0 %v2905
      %v3058 = vpop.f32.mrb[0].mxu0
      %v3059 = vadd.f32 0.0, %v3058
      %v3060 = vpop.f32.mrb[0].mxu0
      %3061 = vmatprep.mubr.f32.mxu0 0.0
      %3062 = vmatmul.mubr.f32.gmra.mrb[0].mxu0 %v2907
      %v3063 = vpop.f32.mrb[0].mxu0
      %v3064 = vadd.f32 0.0, %v3063
      %v3065 = vpop.f32.mrb[0].mxu0
      %3066 = vmatprep.mubr.f32.mxu0 0.0
      %3067 = vmatmul.mubr.f32.gmra.mrb[0].mxu0 %v2909
      %v3068 = vpop.f32.mrb[0].mxu0
      %v3069 = vadd.f32 0.0, %v3068
      %v3070 = vpop.f32.mrb[0].mxu0
      %3071 = vmatprep.mubr.f32.mxu0 0.0
      %3072 = vmatmul.mubr.f32.gmra.mrb[0].mxu0 %v2911
      %v3073 = vpop.f32.mrb[0].mxu0
      %v3074 = vadd.f32 0.0, %v3073
      %v3075 = vpop.f32.mrb[0].mxu0
      %3076 = vmatprep.mubr.f32.mxu0 0.0
      %3077 = vmatmul.mubr.f32.gmra.mrb[0].mxu0 %v2913
      %v3078 = vpop.f32.mrb[0].mxu0
      %v3079 = vadd.f32 0.0, %v3078
      %v3080 = vpop.f32.mrb[0].mxu0
      %3081 = vmatprep.mubr.f32.mxu0 0.0
      %3082 = vmatmul.mubr.f32.gmra.mrb[0].mxu0 %v2915
      %v3083 = vpop.f32.mrb[0].mxu0
      %v3084 = vadd.f32 0.0, %v3083
      %v3085 = vpop.f32.mrb[0].mxu0
      %3086 = vmatprep.mubr.f32.mxu0 0.0
      %3087 = vmatmul.mubr.f32.gmra.mrb[0].mxu0 %v2917
      %v3088 = vpop.f32.mrb[0].mxu0
      %v3089 = vadd.f32 0.0, %v3088
      %v3090 = vpop.f32.mrb[0].mxu0
      %3091 = vmatprep.mubr.f32.mxu0 0.0
      %3092 = vmatmul.mubr.f32.gmra.mrb[0].mxu0 %v2919
      %v3093 = vpop.f32.mrb[0].mxu0
      %v3094 = vadd.f32 0.0, %v3093
      %v3095 = vpop.f32.mrb[0].mxu0
      %3096 = vmatprep.mubr.f32.mxu0 0.0
      %3097 = vmatmul.mubr.f32.gmra.mrb[0].mxu0 %v2921
      %v3098 = vpop.f32.mrb[0].mxu0
      %v3099 = vadd.f32 0.0, %v3098
      %v3100 = vpop.f32.mrb[0].mxu0
      %3101 = vmatprep.mubr.f32.mxu0 0.0
      %3102 = vmatmul.mubr.f32.gmra.mrb[0].mxu0 %v2923
      %v3103 = vpop.f32.mrb[0].mxu0
      %v3104 = vadd.f32 0.0, %v3103
      %v3105 = vpop.f32.mrb[0].mxu0
      %3106 = vmatprep.mubr.f32.mxu0 0.0
      %3107 = vmatmul.mubr.f32.gmra.mrb[0].mxu0 %v2925
      %v3108 = vpop.f32.mrb[0].mxu0
      %v3109 = vadd.f32 0.0, %v3108
      %v3110 = vpop.f32.mrb[0].mxu0
      %3111 = vmatprep.mubr.f32.mxu0 0.0
      %3112 = vmatmul.mubr.f32.gmra.mrb[0].mxu0 %v2927
      %v3113 = vpop.f32.mrb[0].mxu0
      %v3114 = vadd.f32 0.0, %v3113
      %v3115 = vpop.f32.mrb[0].mxu0
      %3116 = vmatprep.mubr.f32.mxu0 0.0
      %3117 = vmatmul.mubr.f32.gmra.mrb[0].mxu0 %v2929
      %v3118 = vpop.f32.mrb[0].mxu0
      %v3119 = vadd.f32 0.0, %v3118
      %v3120 = vpop.f32.mrb[0].mxu0
      %3121 = vmatprep.mubr.f32.mxu0 0.0
      %3122 = vmatmul.mubr.f32.gmra.mrb[0].mxu0 %v2931
      %v3123 = vpop.f32.mrb[0].mxu0
      %v3124 = vadd.f32 0.0, %v3123
      %v3125 = vpop.f32.mrb[0].mxu0
      %3126 = vmatprep.mubr.f32.mxu0 0.0
      %3127 = vmatmul.mubr.f32.gmra.mrb[0].mxu0 %v2933
      %v3128 = vpop.f32.mrb[0].mxu0
      %v3129 = vadd.f32 0.0, %v3128
      %v3130 = vpop.f32.mrb[0].mxu0
      %3131 = vmatprep.mubr.f32.mxu0 0.0
      %3132 = vmatmul.mubr.f32.gmra.mrb[0].mxu0 %v2935
      %v3133 = vpop.f32.mrb[0].mxu0
      %v3134 = vadd.f32 0.0, %v3133
      %v3135 = vpop.f32.mrb[0].mxu0
      %3136 = vmatprep.mubr.f32.mxu0 0.0
      %3137 = vmatmul.mubr.f32.gmra.mrb[0].mxu0 %v2937
      %v3138 = vpop.f32.mrb[0].mxu0
      %v3139 = vadd.f32 0.0, %v3138
      %v3140 = vpop.f32.mrb[0].mxu0
      %3141 = vmatprep.mubr.f32.mxu0 0.0
      %3142 = vmatmul.mubr.f32.gmra.mrb[0].mxu0 %v2939
      %v3143 = vpop.f32.mrb[0].mxu0
      %v3144 = vadd.f32 0.0, %v3143
      %v3145 = vpop.f32.mrb[0].mxu0
      %3146 = vmatprep.mubr.f32.mxu0 0.0
      %3147 = vmatmul.mubr.f32.gmra.mrb[0].mxu0 %v2941
      %v3148 = vpop.f32.mrb[0].mxu0
      %v3149 = vadd.f32 0.0, %v3148
      %v3150 = vpop.f32.mrb[0].mxu0
      %3151 = vmatprep.mubr.f32.mxu0 0.0
      %3152 = vmatmul.mubr.f32.gmra.mrb[0].mxu0 %v2943
      %v3153 = vpop.f32.mrb[0].mxu0
      %v3154 = vadd.f32 0.0, %v3153
      %v3155 = vpop.f32.mrb[0].mxu0
      %3156 = vmatprep.mubr.f32.mxu0 0.0
      %3157 = vmatmul.mubr.f32.gmra.mrb[0].mxu0 %v2945
      %v3158 = vpop.f32.mrb[0].mxu0
      %v3159 = vadd.f32 0.0, %v3158
      %v3160 = vpop.f32.mrb[0].mxu0
      %3161 = vmatprep.mubr.f32.mxu0 0.0
      %3162 = vmatmul.mubr.f32.gmra.mrb[0].mxu0 %v2947
      %v3163 = vpop.f32.mrb[0].mxu0
      %v3164 = vadd.f32 0.0, %v3163
      %v3165 = vpop.f32.mrb[0].mxu0
      %3166 = vmatprep.mubr.f32.mxu0 0.0
      %3167 = vmatmul.mubr.f32.gmra.mrb[0].mxu0 %v2949
      %v3168 = vpop.f32.mrb[0].mxu0
      %v3169 = vadd.f32 0.0, %v3168
      %v3170 = vpop.f32.mrb[0].mxu0
      %3171 = vmatprep.mubr.f32.mxu0 0.0
      %3172 = vmatmul.mubr.f32.gmra.mrb[0].mxu0 %v2951
      %v3173 = vpop.f32.mrb[0].mxu0
      %v3174 = vadd.f32 0.0, %v3173
      %v3175 = vpop.f32.mrb[0].mxu0
      %3176 = vmatprep.mubr.f32.mxu0 0.0
      %3177 = vmatmul.mubr.f32.gmra.mrb[0].mxu0 %v2953
      %v3178 = vpop.f32.mrb[0].mxu0
      %v3179 = vadd.f32 0.0, %v3178
      %v3180 = vpop.f32.mrb[0].mxu0
      %3181 = vmatprep.mubr.f32.mxu0 0.0
      %3182 = vmatmul.mubr.f32.gmra.mrb[0].mxu0 %v2955
      %v3183 = vpop.f32.mrb[0].mxu0
      %v3184 = vadd.f32 0.0, %v3183
      %v3185 = vpop.f32.mrb[0].mxu0
      %3186 = vmatprep.mubr.f32.mxu0 0.0
      %3187 = vmatmul.mubr.f32.gmra.mrb[0].mxu0 %v2957
      %v3188 = vpop.f32.mrb[0].mxu0
      %v3189 = vadd.f32 0.0, %v3188
      %v3190 = vpop.f32.mrb[0].mxu0
      %3191 = vmatprep.mubr.f32.mxu0 0.0
      %3192 = vmatmul.mubr.f32.gmra.mrb[0].mxu0 %v2959
      %v3193 = vpop.f32.mrb[0].mxu0
      %v3194 = vadd.f32 0.0, %v3193
      %v3195 = vpop.f32.mrb[0].mxu0
      %3196 = vmatprep.mubr.f32.mxu0 0.0
      %3197 = vmatmul.mubr.f32.gmra.mrb[0].mxu0 %v2961
      %v3198 = vpop.f32.mrb[0].mxu0
      %v3199 = vadd.f32 0.0, %v3198
      %v3200 = vpop.f32.mrb[0].mxu0
      %3201 = vmatprep.mubr.f32.mxu0 0.0
      %3202 = vmatmul.mubr.f32.gmra.mrb[0].mxu0 %v2963
      %v3203 = vpop.f32.mrb[0].mxu0
      %v3204 = vadd.f32 0.0, %v3203
      %v3205 = vpop.f32.mrb[0].mxu0
      %3206 = vmatprep.mubr.f32.mxu0 0.0
      %3207 = vmatmul.mubr.f32.gmra.mrb[0].mxu0 %v2965
      %v3208 = vpop.f32.mrb[0].mxu0
      %v3209 = vadd.f32 0.0, %v3208
      %v3210 = vpop.f32.mrb[0].mxu0
      %3211 = vmatprep.mubr.f32.mxu0 0.0
      %3212 = vmatmul.mubr.f32.gmra.mrb[0].mxu0 %v2967
      %v3213 = vpop.f32.mrb[0].mxu0
      %v3214 = vadd.f32 0.0, %v3213
      %v3215 = vpop.f32.mrb[0].mxu0
      %3216 = vdwg.mxu0
      %v3217 = vadd.f32 %v2786, %v3039
      %v3218 = vadd.f32 %v2787, %v3044
      %v3219 = vadd.f32 %v2788, %v3049
      %v3220 = vadd.f32 %v2789, %v3054
      %v3221 = vadd.f32 %v2790, %v3059
      %v3222 = vadd.f32 %v2791, %v3064
      %v3223 = vadd.f32 %v2792, %v3069
      %v3224 = vadd.f32 %v2793, %v3074
      %v3225 = vadd.f32 %v2794, %v3079
      %v3226 = vadd.f32 %v2795, %v3084
      %v3227 = vadd.f32 %v2796, %v3089
      %v3228 = vadd.f32 %v2797, %v3094
      %v3229 = vadd.f32 %v2798, %v3099
      %v3230 = vadd.f32 %v2799, %v3104
      %v3231 = vadd.f32 %v2800, %v3109
      %v3232 = vadd.f32 %v2801, %v3114
      %v3233 = vadd.f32 %v2802, %v3119
      %v3234 = vadd.f32 %v2803, %v3124
      %v3235 = vadd.f32 %v2804, %v3129
      %v3236 = vadd.f32 %v2805, %v3134
      %v3237 = vadd.f32 %v2806, %v3139
      %v3238 = vadd.f32 %v2807, %v3144
      %v3239 = vadd.f32 %v2808, %v3149
      %v3240 = vadd.f32 %v2809, %v3154
      %v3241 = vadd.f32 %v2810, %v3159
      %v3242 = vadd.f32 %v2811, %v3164
      %v3243 = vadd.f32 %v2812, %v3169
      %v3244 = vadd.f32 %v2813, %v3174
      %v3245 = vadd.f32 %v2814, %v3179
      %v3246 = vadd.f32 %v2815, %v3184
      %v3247 = vadd.f32 %v2816, %v3189
      %v3248 = vadd.f32 %v2817, %v3194
      %v3249 = vadd.f32 %v2818, %v3199
      %v3250 = vadd.f32 %v2819, %v3204
      %v3251 = vadd.f32 %v2820, %v3209
      %v3252 = vadd.f32 %v2821, %v3214
      %v3253 = vld [vmem:[%s1 + $0x20] sm:$0xf]
      %vm3254 = vcmask 1041408
      %v3255 = vrot.slane %v148, 6
      %v3256 = vrot.slane %v149, 6
      %v3257 = vsel %vm3254, %v3255, %v3256
      %v3258 = vrot.slane %v150, 6
      %v3259 = vsel %vm3254, %v3256, %v3258
      %v3260 = vrot.slane %v151, 6
      %v3261 = vsel %vm3254, %v3258, %v3260
      %v3262 = vrot.slane %v152, 6
      %v3263 = vsel %vm3254, %v3260, %v3262
      %v3264 = vrot.slane %v153, 6
      %v3265 = vsel %vm3254, %v3262, %v3264
      %v3266 = vrot.slane %v154, 6
      %v3267 = vsel %vm3254, %v3264, %v3266
      %v3268 = vrot.slane %v155, 6
      %v3269 = vsel %vm3254, %v3266, %v3268
      %v3270 = vrot.slane %v156, 6
      %v3271 = vsel %vm3254, %v3268, %v3270
      %v3272 = vrot.slane %v157, 6
      %v3273 = vsel %vm3254, %v3270, %v3272
      %v3274 = vrot.slane %v158, 6
      %v3275 = vsel %vm3254, %v3272, %v3274
      %v3276 = vrot.slane %v159, 6
      %v3277 = vsel %vm3254, %v3274, %v3276
      %v3278 = vrot.slane %v160, 6
      %v3279 = vsel %vm3254, %v3276, %v3278
      %v3280 = vrot.slane %v161, 6
      %v3281 = vsel %vm3254, %v3278, %v3280
      %v3282 = vrot.slane %v162, 6
      %v3283 = vsel %vm3254, %v3280, %v3282
      %v3284 = vrot.slane %v163, 6
      %v3285 = vsel %vm3254, %v3282, %v3284
      %v3286 = vrot.slane %v164, 6
      %v3287 = vsel %vm3254, %v3284, %v3286
      %v3288 = vrot.slane %v165, 6
      %v3289 = vsel %vm3254, %v3286, %v3288
      %v3290 = vrot.slane %v166, 6
      %v3291 = vsel %vm3254, %v3288, %v3290
      %v3292 = vrot.slane %v167, 6
      %v3293 = vsel %vm3254, %v3290, %v3292
      %v3294 = vrot.slane %v168, 6
      %v3295 = vsel %vm3254, %v3292, %v3294
      %v3296 = vrot.slane %v169, 6
      %v3297 = vsel %vm3254, %v3294, %v3296
      %v3298 = vrot.slane %v170, 6
      %v3299 = vsel %vm3254, %v3296, %v3298
      %v3300 = vrot.slane %v171, 6
      %v3301 = vsel %vm3254, %v3298, %v3300
      %v3302 = vrot.slane %v172, 6
      %v3303 = vsel %vm3254, %v3300, %v3302
      %v3304 = vrot.slane %v173, 6
      %v3305 = vsel %vm3254, %v3302, %v3304
      %v3306 = vrot.slane %v174, 6
      %v3307 = vsel %vm3254, %v3304, %v3306
      %v3308 = vrot.slane %v175, 6
      %v3309 = vsel %vm3254, %v3306, %v3308
      %v3310 = vrot.slane %v176, 6
      %v3311 = vsel %vm3254, %v3308, %v3310
      %v3312 = vrot.slane %v177, 6
      %v3313 = vsel %vm3254, %v3310, %v3312
      %v3314 = vrot.slane %v178, 6
      %v3315 = vsel %vm3254, %v3312, %v3314
      %v3316 = vrot.slane %v179, 6
      %v3317 = vsel %vm3254, %v3314, %v3316
      %v3318 = vrot.slane %v180, 6
      %v3319 = vsel %vm3254, %v3316, %v3318
      %v3320 = vrot.slane %v181, 6
      %v3321 = vsel %vm3254, %v3318, %v3320
      %v3322 = vrot.slane %v182, 6
      %v3323 = vsel %vm3254, %v3320, %v3322
      %v3324 = vrot.slane %v183, 6
      %v3325 = vsel %vm3254, %v3322, %v3324
      %v3326 = vrot.slane %v184, 6
      %v3327 = vsel %vm3254, %v3324, %v3326
      %v3328 = vsel %vm298, %v3257, 0
      %v3330 = vsel %vm298, %v3259, 0
      %v3332 = vsel %vm298, %v3261, 0
      %v3334 = vsel %vm298, %v3263, 0
      %v3336 = vsel %vm298, %v3265, 0
      %v3338 = vsel %vm298, %v3267, 0
      %v3340 = vsel %vm298, %v3269, 0
      %v3342 = vsel %vm298, %v3271, 0
      %v3344 = vsel %vm298, %v3273, 0
      %v3346 = vsel %vm298, %v3275, 0
      %v3348 = vsel %vm298, %v3277, 0
      %v3350 = vsel %vm298, %v3279, 0
      %v3352 = vsel %vm298, %v3281, 0
      %v3354 = vsel %vm298, %v3283, 0
      %v3356 = vsel %vm298, %v3285, 0
      %v3358 = vsel %vm298, %v3287, 0
      %v3360 = vsel %vm298, %v3289, 0
      %v3362 = vsel %vm298, %v3291, 0
      %v3364 = vsel %vm298, %v3293, 0
      %v3366 = vsel %vm298, %v3295, 0
      %v3368 = vsel %vm298, %v3297, 0
      %v3370 = vsel %vm298, %v3299, 0
      %v3372 = vsel %vm298, %v3301, 0
      %v3374 = vsel %vm298, %v3303, 0
      %v3376 = vsel %vm298, %v3305, 0
      %v3378 = vsel %vm298, %v3307, 0
      %v3380 = vsel %vm298, %v3309, 0
      %v3382 = vsel %vm298, %v3311, 0
      %v3384 = vsel %vm298, %v3313, 0
      %v3386 = vsel %vm298, %v3315, 0
      %v3388 = vsel %vm298, %v3317, 0
      %v3390 = vsel %vm298, %v3319, 0
      %v3392 = vsel %vm298, %v3321, 0
      %v3394 = vsel %vm298, %v3323, 0
      %v3396 = vsel %vm298, %v3325, 0
      %v3398 = vsel %vm298, %v3327, 0
      %v3401 = vsel %vm371, %v3253, 0
      %3403 = vmatprep.subr.mxu0 0.0
      %3404 = vmatpush1.msra.mxu0 %v3401
      %3405 = vmatprep.subr.mxu0 0.0
      %3406 = vmatpush1.msra.mxu0 0.0
      %3407 = vmatprep.subr.mxu0 0.0
      %3408 = vmatpush1.msra.mxu0 0.0
      %3409 = vmatprep.subr.mxu0 0.0
      %3410 = vmatpush1.msra.mxu0 0.0
      %3411 = vmatprep.subr.mxu0 0.0
      %3412 = vmatpush1.msra.mxu0 0.0
      %3413 = vmatprep.subr.mxu0 0.0
      %3414 = vmatpush1.msra.mxu0 0.0
      %3415 = vmatprep.subr.mxu0 0.0
      %3416 = vmatpush1.msra.mxu0 0.0
      %3417 = vmatprep.subr.mxu0 0.0
      %3418 = vmatpush1.msra.mxu0 0.0
      %3419 = vmatprep.subr.mxu0 0.0
      %3420 = vmatpush1.msra.mxu0 0.0
      %3421 = vmatprep.subr.mxu0 0.0
      %3422 = vmatpush1.msra.mxu0 0.0
      %3423 = vmatprep.subr.mxu0 0.0
      %3424 = vmatpush1.msra.mxu0 0.0
      %3425 = vmatprep.subr.mxu0 0.0
      %3426 = vmatpush1.msra.mxu0 0.0
      %3427 = vmatprep.subr.mxu0 0.0
      %3428 = vmatpush1.msra.mxu0 0.0
      %3429 = vmatprep.subr.mxu0 0.0
      %3430 = vmatpush1.msra.mxu0 0.0
      %3431 = vmatprep.subr.mxu0 0.0
      %3432 = vmatpush1.msra.mxu0 0.0
      %3433 = vmatprep.subr.mxu0 0.0
      %3434 = vmatpush1.msra.mxu0 0.0
      %3435 = vmatprep.subr.mxu0 0.0
      %3436 = vmatpush1.msra.mxu0 0.0
      %3437 = vmatprep.subr.mxu0 0.0
      %3438 = vmatpush1.msra.mxu0 0.0
      %3439 = vmatprep.subr.mxu0 0.0
      %3440 = vmatpush1.msra.mxu0 0.0
      %3441 = vmatprep.subr.mxu0 0.0
      %3442 = vmatpush1.msra.mxu0 0.0
      %3443 = vmatprep.subr.mxu0 0.0
      %3444 = vmatpush1.msra.mxu0 0.0
      %3445 = vmatprep.subr.mxu0 0.0
      %3446 = vmatpush1.msra.mxu0 0.0
      %3447 = vmatprep.subr.mxu0 0.0
      %3448 = vmatpush1.msra.mxu0 0.0
      %3449 = vmatprep.subr.mxu0 0.0
      %3450 = vmatpush1.msra.mxu0 0.0
      %3451 = vmatprep.subr.mxu0 0.0
      %3452 = vmatpush1.msra.mxu0 0.0
      %3453 = vmatprep.subr.mxu0 0.0
      %3454 = vmatpush1.msra.mxu0 0.0
      %3455 = vmatprep.subr.mxu0 0.0
      %3456 = vmatpush1.msra.mxu0 0.0
      %3457 = vmatprep.subr.mxu0 0.0
      %3458 = vmatpush1.msra.mxu0 0.0
      %3459 = vmatprep.subr.mxu0 0.0
      %3460 = vmatpush1.msra.mxu0 0.0
      %3461 = vmatprep.subr.mxu0 0.0
      %3462 = vmatpush1.msra.mxu0 0.0
      %3463 = vmatprep.subr.mxu0 0.0
      %3464 = vmatpush1.msra.mxu0 0.0
      %3465 = vmatprep.subr.mxu0 0.0
      %3466 = vmatpush1.msra.mxu0 0.0
      %3467 = vmatprep.mubr.f32.mxu0 0.0
      %3468 = vmatmul.mubr.f32.gmra.mrb[0].mxu0 %v3328
      %v3469 = vpop.f32.mrb[0].mxu0
      %v3470 = vadd.f32 0.0, %v3469
      %v3471 = vpop.f32.mrb[0].mxu0
      %3472 = vmatprep.mubr.f32.mxu0 0.0
      %3473 = vmatmul.mubr.f32.gmra.mrb[0].mxu0 %v3330
      %v3474 = vpop.f32.mrb[0].mxu0
      %v3475 = vadd.f32 0.0, %v3474
      %v3476 = vpop.f32.mrb[0].mxu0
      %3477 = vmatprep.mubr.f32.mxu0 0.0
      %3478 = vmatmul.mubr.f32.gmra.mrb[0].mxu0 %v3332
      %v3479 = vpop.f32.mrb[0].mxu0
      %v3480 = vadd.f32 0.0, %v3479
      %v3481 = vpop.f32.mrb[0].mxu0
      %3482 = vmatprep.mubr.f32.mxu0 0.0
      %3483 = vmatmul.mubr.f32.gmra.mrb[0].mxu0 %v3334
      %v3484 = vpop.f32.mrb[0].mxu0
      %v3485 = vadd.f32 0.0, %v3484
      %v3486 = vpop.f32.mrb[0].mxu0
      %3487 = vmatprep.mubr.f32.mxu0 0.0
      %3488 = vmatmul.mubr.f32.gmra.mrb[0].mxu0 %v3336
      %v3489 = vpop.f32.mrb[0].mxu0
      %v3490 = vadd.f32 0.0, %v3489
      %v3491 = vpop.f32.mrb[0].mxu0
      %3492 = vmatprep.mubr.f32.mxu0 0.0
      %3493 = vmatmul.mubr.f32.gmra.mrb[0].mxu0 %v3338
      %v3494 = vpop.f32.mrb[0].mxu0
      %v3495 = vadd.f32 0.0, %v3494
      %v3496 = vpop.f32.mrb[0].mxu0
      %3497 = vmatprep.mubr.f32.mxu0 0.0
      %3498 = vmatmul.mubr.f32.gmra.mrb[0].mxu0 %v3340
      %v3499 = vpop.f32.mrb[0].mxu0
      %v3500 = vadd.f32 0.0, %v3499
      %v3501 = vpop.f32.mrb[0].mxu0
      %3502 = vmatprep.mubr.f32.mxu0 0.0
      %3503 = vmatmul.mubr.f32.gmra.mrb[0].mxu0 %v3342
      %v3504 = vpop.f32.mrb[0].mxu0
      %v3505 = vadd.f32 0.0, %v3504
      %v3506 = vpop.f32.mrb[0].mxu0
      %3507 = vmatprep.mubr.f32.mxu0 0.0
      %3508 = vmatmul.mubr.f32.gmra.mrb[0].mxu0 %v3344
      %v3509 = vpop.f32.mrb[0].mxu0
      %v3510 = vadd.f32 0.0, %v3509
      %v3511 = vpop.f32.mrb[0].mxu0
      %3512 = vmatprep.mubr.f32.mxu0 0.0
      %3513 = vmatmul.mubr.f32.gmra.mrb[0].mxu0 %v3346
      %v3514 = vpop.f32.mrb[0].mxu0
      %v3515 = vadd.f32 0.0, %v3514
      %v3516 = vpop.f32.mrb[0].mxu0
      %3517 = vmatprep.mubr.f32.mxu0 0.0
      %3518 = vmatmul.mubr.f32.gmra.mrb[0].mxu0 %v3348
      %v3519 = vpop.f32.mrb[0].mxu0
      %v3520 = vadd.f32 0.0, %v3519
      %v3521 = vpop.f32.mrb[0].mxu0
      %3522 = vmatprep.mubr.f32.mxu0 0.0
      %3523 = vmatmul.mubr.f32.gmra.mrb[0].mxu0 %v3350
      %v3524 = vpop.f32.mrb[0].mxu0
      %v3525 = vadd.f32 0.0, %v3524
      %v3526 = vpop.f32.mrb[0].mxu0
      %3527 = vmatprep.mubr.f32.mxu0 0.0
      %3528 = vmatmul.mubr.f32.gmra.mrb[0].mxu0 %v3352
      %v3529 = vpop.f32.mrb[0].mxu0
      %v3530 = vadd.f32 0.0, %v3529
      %v3531 = vpop.f32.mrb[0].mxu0
      %3532 = vmatprep.mubr.f32.mxu0 0.0
      %3533 = vmatmul.mubr.f32.gmra.mrb[0].mxu0 %v3354
      %v3534 = vpop.f32.mrb[0].mxu0
      %v3535 = vadd.f32 0.0, %v3534
      %v3536 = vpop.f32.mrb[0].mxu0
      %3537 = vmatprep.mubr.f32.mxu0 0.0
      %3538 = vmatmul.mubr.f32.gmra.mrb[0].mxu0 %v3356
      %v3539 = vpop.f32.mrb[0].mxu0
      %v3540 = vadd.f32 0.0, %v3539
      %v3541 = vpop.f32.mrb[0].mxu0
      %3542 = vmatprep.mubr.f32.mxu0 0.0
      %3543 = vmatmul.mubr.f32.gmra.mrb[0].mxu0 %v3358
      %v3544 = vpop.f32.mrb[0].mxu0
      %v3545 = vadd.f32 0.0, %v3544
      %v3546 = vpop.f32.mrb[0].mxu0
      %3547 = vmatprep.mubr.f32.mxu0 0.0
      %3548 = vmatmul.mubr.f32.gmra.mrb[0].mxu0 %v3360
      %v3549 = vpop.f32.mrb[0].mxu0
      %v3550 = vadd.f32 0.0, %v3549
      %v3551 = vpop.f32.mrb[0].mxu0
      %3552 = vmatprep.mubr.f32.mxu0 0.0
      %3553 = vmatmul.mubr.f32.gmra.mrb[0].mxu0 %v3362
      %v3554 = vpop.f32.mrb[0].mxu0
      %v3555 = vadd.f32 0.0, %v3554
      %v3556 = vpop.f32.mrb[0].mxu0
      %3557 = vmatprep.mubr.f32.mxu0 0.0
      %3558 = vmatmul.mubr.f32.gmra.mrb[0].mxu0 %v3364
      %v3559 = vpop.f32.mrb[0].mxu0
      %v3560 = vadd.f32 0.0, %v3559
      %v3561 = vpop.f32.mrb[0].mxu0
      %3562 = vmatprep.mubr.f32.mxu0 0.0
      %3563 = vmatmul.mubr.f32.gmra.mrb[0].mxu0 %v3366
      %v3564 = vpop.f32.mrb[0].mxu0
      %v3565 = vadd.f32 0.0, %v3564
      %v3566 = vpop.f32.mrb[0].mxu0
      %3567 = vmatprep.mubr.f32.mxu0 0.0
      %3568 = vmatmul.mubr.f32.gmra.mrb[0].mxu0 %v3368
      %v3569 = vpop.f32.mrb[0].mxu0
      %v3570 = vadd.f32 0.0, %v3569
      %v3571 = vpop.f32.mrb[0].mxu0
      %3572 = vmatprep.mubr.f32.mxu0 0.0
      %3573 = vmatmul.mubr.f32.gmra.mrb[0].mxu0 %v3370
      %v3574 = vpop.f32.mrb[0].mxu0
      %v3575 = vadd.f32 0.0, %v3574
      %v3576 = vpop.f32.mrb[0].mxu0
      %3577 = vmatprep.mubr.f32.mxu0 0.0
      %3578 = vmatmul.mubr.f32.gmra.mrb[0].mxu0 %v3372
      %v3579 = vpop.f32.mrb[0].mxu0
      %v3580 = vadd.f32 0.0, %v3579
      %v3581 = vpop.f32.mrb[0].mxu0
      %3582 = vmatprep.mubr.f32.mxu0 0.0
      %3583 = vmatmul.mubr.f32.gmra.mrb[0].mxu0 %v3374
      %v3584 = vpop.f32.mrb[0].mxu0
      %v3585 = vadd.f32 0.0, %v3584
      %v3586 = vpop.f32.mrb[0].mxu0
      %3587 = vmatprep.mubr.f32.mxu0 0.0
      %3588 = vmatmul.mubr.f32.gmra.mrb[0].mxu0 %v3376
      %v3589 = vpop.f32.mrb[0].mxu0
      %v3590 = vadd.f32 0.0, %v3589
      %v3591 = vpop.f32.mrb[0].mxu0
      %3592 = vmatprep.mubr.f32.mxu0 0.0
      %3593 = vmatmul.mubr.f32.gmra.mrb[0].mxu0 %v3378
      %v3594 = vpop.f32.mrb[0].mxu0
      %v3595 = vadd.f32 0.0, %v3594
      %v3596 = vpop.f32.mrb[0].mxu0
      %3597 = vmatprep.mubr.f32.mxu0 0.0
      %3598 = vmatmul.mubr.f32.gmra.mrb[0].mxu0 %v3380
      %v3599 = vpop.f32.mrb[0].mxu0
      %v3600 = vadd.f32 0.0, %v3599
      %v3601 = vpop.f32.mrb[0].mxu0
      %3602 = vmatprep.mubr.f32.mxu0 0.0
      %3603 = vmatmul.mubr.f32.gmra.mrb[0].mxu0 %v3382
      %v3604 = vpop.f32.mrb[0].mxu0
      %v3605 = vadd.f32 0.0, %v3604
      %v3606 = vpop.f32.mrb[0].mxu0
      %3607 = vmatprep.mubr.f32.mxu0 0.0
      %3608 = vmatmul.mubr.f32.gmra.mrb[0].mxu0 %v3384
      %v3609 = vpop.f32.mrb[0].mxu0
      %v3610 = vadd.f32 0.0, %v3609
      %v3611 = vpop.f32.mrb[0].mxu0
      %3612 = vmatprep.mubr.f32.mxu0 0.0
      %3613 = vmatmul.mubr.f32.gmra.mrb[0].mxu0 %v3386
      %v3614 = vpop.f32.mrb[0].mxu0
      %v3615 = vadd.f32 0.0, %v3614
      %v3616 = vpop.f32.mrb[0].mxu0
      %3617 = vmatprep.mubr.f32.mxu0 0.0
      %3618 = vmatmul.mubr.f32.gmra.mrb[0].mxu0 %v3388
      %v3619 = vpop.f32.mrb[0].mxu0
      %v3620 = vadd.f32 0.0, %v3619
      %v3621 = vpop.f32.mrb[0].mxu0
      %3622 = vmatprep.mubr.f32.mxu0 0.0
      %3623 = vmatmul.mubr.f32.gmra.mrb[0].mxu0 %v3390
      %v3624 = vpop.f32.mrb[0].mxu0
      %v3625 = vadd.f32 0.0, %v3624
      %v3626 = vpop.f32.mrb[0].mxu0
      %3627 = vmatprep.mubr.f32.mxu0 0.0
      %3628 = vmatmul.mubr.f32.gmra.mrb[0].mxu0 %v3392
      %v3629 = vpop.f32.mrb[0].mxu0
      %v3630 = vadd.f32 0.0, %v3629
      %v3631 = vpop.f32.mrb[0].mxu0
      %3632 = vmatprep.mubr.f32.mxu0 0.0
      %3633 = vmatmul.mubr.f32.gmra.mrb[0].mxu0 %v3394
      %v3634 = vpop.f32.mrb[0].mxu0
      %v3635 = vadd.f32 0.0, %v3634
      %v3636 = vpop.f32.mrb[0].mxu0
      %3637 = vmatprep.mubr.f32.mxu0 0.0
      %3638 = vmatmul.mubr.f32.gmra.mrb[0].mxu0 %v3396
      %v3639 = vpop.f32.mrb[0].mxu0
      %v3640 = vadd.f32 0.0, %v3639
      %v3641 = vpop.f32.mrb[0].mxu0
      %3642 = vmatprep.mubr.f32.mxu0 0.0
      %3643 = vmatmul.mubr.f32.gmra.mrb[0].mxu0 %v3398
      %v3644 = vpop.f32.mrb[0].mxu0
      %v3645 = vadd.f32 0.0, %v3644
      %v3646 = vpop.f32.mrb[0].mxu0
      %3647 = vdwg.mxu0
      %v3648 = vadd.f32 %v3217, %v3470
      %v3649 = vadd.f32 %v3218, %v3475
      %v3650 = vadd.f32 %v3219, %v3480
      %v3651 = vadd.f32 %v3220, %v3485
      %v3652 = vadd.f32 %v3221, %v3490
      %v3653 = vadd.f32 %v3222, %v3495
      %v3654 = vadd.f32 %v3223, %v3500
      %v3655 = vadd.f32 %v3224, %v3505
      %v3656 = vadd.f32 %v3225, %v3510
      %v3657 = vadd.f32 %v3226, %v3515
      %v3658 = vadd.f32 %v3227, %v3520
      %v3659 = vadd.f32 %v3228, %v3525
      %v3660 = vadd.f32 %v3229, %v3530
      %v3661 = vadd.f32 %v3230, %v3535
      %v3662 = vadd.f32 %v3231, %v3540
      %v3663 = vadd.f32 %v3232, %v3545
      %v3664 = vadd.f32 %v3233, %v3550
      %v3665 = vadd.f32 %v3234, %v3555
      %v3666 = vadd.f32 %v3235, %v3560
      %v3667 = vadd.f32 %v3236, %v3565
      %v3668 = vadd.f32 %v3237, %v3570
      %v3669 = vadd.f32 %v3238, %v3575
      %v3670 = vadd.f32 %v3239, %v3580
      %v3671 = vadd.f32 %v3240, %v3585
      %v3672 = vadd.f32 %v3241, %v3590
      %v3673 = vadd.f32 %v3242, %v3595
      %v3674 = vadd.f32 %v3243, %v3600
      %v3675 = vadd.f32 %v3244, %v3605
      %v3676 = vadd.f32 %v3245, %v3610
      %v3677 = vadd.f32 %v3246, %v3615
      %v3678 = vadd.f32 %v3247, %v3620
      %v3679 = vadd.f32 %v3248, %v3625
      %v3680 = vadd.f32 %v3249, %v3630
      %v3681 = vadd.f32 %v3250, %v3635
      %v3682 = vadd.f32 %v3251, %v3640
      %v3683 = vadd.f32 %v3252, %v3645
      %vm3684 = vcmask 64512
      %3685 = vst.msk [vmem:[%s143] sm:$0xff] %vm3684, %v3648
      %3686 = vst.msk [vmem:[%s143 + $0x8] sm:$0xff] %vm3684, %v3649
      %3687 = vst.msk [vmem:[%s143 + $0x10] sm:$0xff] %vm3684, %v3650
      %3688 = vst.msk [vmem:[%s143 + $0x18] sm:$0xff] %vm3684, %v3651
      %3689 = vst.msk [vmem:[%s143 + $0x20] sm:$0xff] %vm3684, %v3652
      %3690 = vst.msk [vmem:[%s143 + $0x28] sm:$0xff] %vm3684, %v3653
      %3691 = vst.msk [vmem:[%s143 + $0x30] sm:$0xff] %vm3684, %v3654
      %3692 = vst.msk [vmem:[%s143 + $0x38] sm:$0xff] %vm3684, %v3655
      %3693 = vst.msk [vmem:[%s143 + $0x40] sm:$0xff] %vm3684, %v3656
      %3694 = vst.msk [vmem:[%s143 + $0x48] sm:$0xff] %vm3684, %v3657
      %3695 = vst.msk [vmem:[%s143 + $0x50] sm:$0xff] %vm3684, %v3658
      %3696 = vst.msk [vmem:[%s143 + $0x58] sm:$0xff] %vm3684, %v3659
      %3697 = vst.msk [vmem:[%s143 + $0x60] sm:$0xff] %vm3684, %v3660
      %3698 = vst.msk [vmem:[%s143 + $0x68] sm:$0xff] %vm3684, %v3661
      %3699 = vst.msk [vmem:[%s143 + $0x70] sm:$0xff] %vm3684, %v3662
      %3700 = vst.msk [vmem:[%s143 + $0x78] sm:$0xff] %vm3684, %v3663
      %3701 = vst.msk [vmem:[%s143 + $0x80] sm:$0xff] %vm3684, %v3664
      %3702 = vst.msk [vmem:[%s143 + $0x88] sm:$0xff] %vm3684, %v3665
      %3703 = vst.msk [vmem:[%s143 + $0x90] sm:$0xff] %vm3684, %v3666
      %3704 = vst.msk [vmem:[%s143 + $0x98] sm:$0xff] %vm3684, %v3667
      %3705 = vst.msk [vmem:[%s143 + $0xa0] sm:$0xff] %vm3684, %v3668
      %3706 = vst.msk [vmem:[%s143 + $0xa8] sm:$0xff] %vm3684, %v3669
      %3707 = vst.msk [vmem:[%s143 + $0xb0] sm:$0xff] %vm3684, %v3670
      %3708 = vst.msk [vmem:[%s143 + $0xb8] sm:$0xff] %vm3684, %v3671
      %3709 = vst.msk [vmem:[%s143 + $0xc0] sm:$0xff] %vm3684, %v3672
      %3710 = vst.msk [vmem:[%s143 + $0xc8] sm:$0xff] %vm3684, %v3673
      %3711 = vst.msk [vmem:[%s143 + $0xd0] sm:$0xff] %vm3684, %v3674
      %3712 = vst.msk [vmem:[%s143 + $0xd8] sm:$0xff] %vm3684, %v3675
      %3713 = vst.msk [vmem:[%s143 + $0xe0] sm:$0xff] %vm3684, %v3676
      %3714 = vst.msk [vmem:[%s143 + $0xe8] sm:$0xff] %vm3684, %v3677
      %3715 = vst.msk [vmem:[%s143 + $0xf0] sm:$0xff] %vm3684, %v3678
      %3716 = vst.msk [vmem:[%s143 + $0xf8] sm:$0xff] %vm3684, %v3679
      %3717 = vst.msk [vmem:[%s143 + $0x100] sm:$0xff] %vm3684, %v3680
      %3718 = vst.msk [vmem:[%s143 + $0x108] sm:$0xff] %vm3684, %v3681
      %3719 = vst.msk [vmem:[%s143 + $0x110] sm:$0xff] %vm3684, %v3682
      %3720 = vst.msk [vmem:[%s143 + $0x118] sm:$0xff] %vm3684, %v3683
      %p3721 = scmp.lt.s32.totalorder %s13, 1
      %s3722 = scalar_select %p3721, %s13, 1
      %s3723 = smul.addr %s3722, 36
      %s3724 = smul.addr %s3723, 8
      %s3725 = scalar_lea.vmem %s2, %s3724
      // Predicated region
      $region29: #{tpu_custom_call.1} parent=27 // pred_check
        %p3726 = pneg %p78
      $region30: #{tpu_custom_call.1} parent=27 // pred_check_branch
        %3728 = sbr.rel (%p3726) target = $region32
      $region31: #{tpu_custom_call.1} parent=27 // pred_region
        _
      $region32: #{tpu_custom_call.1} parent=27 // pred_fallthru
        _
    $region28: #{tpu_custom_call.1} parent=5 // pred_fallthru
      _
    %p3729 = scmp.le.s32.totalorder 2, %s8
    // Predicated region
    $region33: #{tpu_custom_call.1} parent=5 // pred_check
      %p3730 = pneg %p3729
    $region34: #{tpu_custom_call.1} parent=5 // pred_check_branch
      %3732 = sbr.rel (%p3730) target = $region36
    $region35: #{tpu_custom_call.1} parent=5 // pred_region
      %s3733 = ssub.s32 %s8, 2
      // Predicated region
      $region37: #{tpu_custom_call.1} parent=35 // pred_check
        %p3734 = pneg %p84
      $region38: #{tpu_custom_call.1} parent=35 // pred_check_branch
        %3736 = sbr.rel (%p3734) target = $region40
      $region39: #{tpu_custom_call.1} parent=35 // pred_region
        %p3737 = scmp.lt.s32.totalorder %s14, 1
        %s3738 = scalar_select %p3737, %s14, 1
        %s3739 = smul.addr %s3738, 36
        %s3740 = smul.addr %s3739, 8
        %s3741 = scalar_lea.vmem %s2, %s3740
      $region40: #{tpu_custom_call.1} parent=35 // pred_fallthru
        _
    $region36: #{tpu_custom_call.1} parent=5 // pred_fallthru
      _
  $region6: #{tpu_custom_call.1} parent=0 // loop_footer
    %s12 = sadd.s32 1, %s8
  $region7: #{tpu_custom_call.1} parent=0 // loop_footer_branch
    %7 = sbr.rel target = $region3
  $region8: #{tpu_custom_call.1} parent=0 // loop_exit
    _

</llo_original>
